<compile_context>
chip_gen: v7x
topology: tpu7x:2x2x1
jax: 0.10.0
libtpu: 0.0.40
codegen_flags: <defaults>
</compile_context>

<pallas_src>
import functools

import jax
import jax.numpy as jnp
import numpy as np
from jax.experimental import pallas as pl
from jax.experimental.pallas import tpu as pltpu


# Whole-array-in-VMEM spec (no grid => single kernel invocation).
_VMEM = pl.BlockSpec(memory_space=pltpu.MemorySpace.VMEM)


# ---------------------------------------------------------------------------
# Fused encoder kernel:
#   word LSTM (pack/pad semantics via length mask)  ->  permutation reorder
#   ->  seq_lstm_h + seq_lstm_c  ->  cosine/softmax weights  ->  weighted sums
# ---------------------------------------------------------------------------
def _encoder_kernel(lens_ref, x_ref, se_ref, perm_ref,
                    w_ih_w_ref, w_hh_w_ref, b_w_ref,
                    w_ih_h_ref, w_hh_h_ref, b_h_ref,
                    w_ih_c_ref, w_hh_c_ref, b_c_ref,
                    y_ref, h_out_ref, c_out_ref,
                    *, T, NP, H, B, n1):
    f32 = jnp.float32
    lens = lens_ref[...]                                     # (NP, 1) int32

    # ----- Stage 1: word-level LSTM over T steps, NP packed sequences -----
    # Hoisted input projection + bias: ONE batched (T*NP, E)@(E, 4H) MXU push.
    xg = jnp.dot(x_ref[...], w_ih_w_ref[...],
                 preferred_element_type=f32) + b_w_ref[...]       # (T*NP, 4H)
    w_hh = w_hh_w_ref[...]                                        # (H, 4H)

    h = jnp.zeros((NP, H), f32)
    c = jnp.zeros((NP, H), f32)
    zero = jnp.zeros((NP, H), f32)
    rows = []
    # Static unroll: T <= 16 here.  For larger T use lax.fori_loop to bound
    # vreg live ranges (see header note).
    for t in range(T):
        # tile-aligned slice (NP is a multiple of 8) + small recurrent dot only
        gates = xg[t * NP:(t + 1) * NP, :] + jnp.dot(
            h, w_hh, preferred_element_type=f32)                  # (NP, 4H)
        i_f = jax.nn.sigmoid(gates[:, 0:2 * H])                   # i, f gates
        g_g = jnp.tanh(gates[:, 2 * H:3 * H])
        o_g = jax.nn.sigmoid(gates[:, 3 * H:4 * H])
        c_new = i_f[:, H:2 * H] * c + i_f[:, 0:H] * g_g
        h_new = o_g * jnp.tanh(c_new)
        valid = lens > t                                          # (NP, 1)
        h = jnp.where(valid, h_new, h)       # freeze state past each length
        c = jnp.where(valid, c_new, c)
        h_m = jnp.where(valid, h_new, zero)  # pad_packed_sequence zero padding
        # lane-dense (1, NP*H) row: [seq0_h | seq1_h | ... | seqNP-1_h]
        rows.append(jnp.concatenate([h_m[i:i + 1, :] for i in range(NP)],
                                    axis=1))
    # single unmasked, fully lane-dense store of the whole output slab
    y_ref[...] = jnp.concatenate(rows, axis=0)                    # (T, NP*H)

    # ----- Stage 2: sentence-level stage -----------------------------------
    # lst_reverse reorder + (B, n-1) time-major reshape as one-hot matmuls.
    perm = perm_ref[...]                                   # (n1*B, NP) one-hot
    h_tm = jnp.dot(perm, h, preferred_element_type=f32)    # row t*B + b
    c_tm = jnp.dot(perm, c, preferred_element_type=f32)

    # hoisted input projections (+ bias) for both sentence LSTMs
    gih = jnp.dot(h_tm, w_ih_h_ref[...],
                  preferred_element_type=f32) + b_h_ref[...]      # (n1*B, 4H)
    gic = jnp.dot(c_tm, w_ih_c_ref[...],
                  preferred_element_type=f32) + b_c_ref[...]
    w_hh_h = w_hh_h_ref[...]
    w_hh_c = w_hh_c_ref[...]

    # cosine similarity of every sentence embedding vs. the group's last one
    # (vectorized, per-norm eps clamp), then softmax over the n-1 sentences.
    se = se_ref[...]                                       # (B, n1, E)
    last = se[:, n1 - 1:n1, :]
    dots = jnp.sum(se * last, axis=-1)                     # (B, n1)
    norms = jnp.sqrt(jnp.sum(se * se, axis=-1))
    n_last = norms[:, n1 - 1:n1]
    eps = 1e-8
    cos = dots / (jnp.maximum(norms, eps) * jnp.maximum(n_last, eps))
    cmax = jnp.max(cos, axis=1, keepdims=True)
    ex = jnp.exp(cos - cmax)
    wgt = ex / jnp.sum(ex, axis=1, keepdims=True)          # (B, n1) softmax

    hh = jnp.zeros((B, H), f32)
    ch = jnp.zeros((B, H), f32)
    hc = jnp.zeros((B, H), f32)
    cc = jnp.zeros((B, H), f32)
    h_acc = jnp.zeros((B, H), f32)
    c_acc = jnp.zeros((B, H), f32)
    # two independent recurrences, interleaved to fill VLIW slots on 1-TC chips
    for t in range(n1):
        w_t = wgt[:, t:t + 1]                              # (B, 1)

        g1 = gih[t * B:(t + 1) * B, :] + jnp.dot(
            hh, w_hh_h, preferred_element_type=f32)
        s1 = jax.nn.sigmoid(g1[:, 0:2 * H])
        c1 = s1[:, H:2 * H] * ch + s1[:, 0:H] * jnp.tanh(g1[:, 2 * H:3 * H])
        h1 = jax.nn.sigmoid(g1[:, 3 * H:4 * H]) * jnp.tanh(c1)
        hh, ch = h1, c1
        h_acc = h_acc + h1 * w_t

        g2 = gic[t * B:(t + 1) * B, :] + jnp.dot(
            hc, w_hh_c, preferred_element_type=f32)
        s2 = jax.nn.sigmoid(g2[:, 0:2 * H])
        c2 = s2[:, H:2 * H] * cc + s2[:, 0:H] * jnp.tanh(g2[:, 2 * H:3 * H])
        h2 = jax.nn.sigmoid(g2[:, 3 * H:4 * H]) * jnp.tanh(c2)
        hc, cc = h2, c2
        c_acc = c_acc + h2 * w_t

    h_out_ref[...] = h_acc
    c_out_ref[...] = c_acc


def _encoder_pallas(lens, x2d, se_g, perm,
                    w_ih_w, w_hh_w, b_w,
                    w_ih_h, w_hh_h, b_h,
                    w_ih_c, w_hh_c, b_c,
                    *, T, NP, H, B, n1):
    kern = functools.partial(_encoder_kernel, T=T, NP=NP, H=H, B=B, n1=n1)
    return pl.pallas_call(
        kern,
        out_shape=(jax.ShapeDtypeStruct((T, NP * H), jnp.float32),
                   jax.ShapeDtypeStruct((B, H), jnp.float32),
                   jax.ShapeDtypeStruct((B, H), jnp.float32)),
        in_specs=[_VMEM] * 13,
        out_specs=(_VMEM, _VMEM, _VMEM),
        compiler_params=pltpu.CompilerParams(
            vmem_limit_bytes=32 * 1024 * 1024),   # explicit, v7x-safe budget
    )(lens, x2d, se_g, perm,
      w_ih_w, w_hh_w, b_w, w_ih_h, w_hh_h, b_h, w_ih_c, w_hh_c, b_c)


# ---------------------------------------------------------------------------
# Full Encoder.forward
# ---------------------------------------------------------------------------
def encoder_forward(params, batch_input, sentences_lens, keys, pad_idx,
                    batch_size, n, lst):
    del pad_idx                    # padding handled via the length mask in-kernel
    n1 = n - 1
    emb = params["embedding"]
    N, _ = batch_input.shape
    E = emb.shape[1]
    H = params["lstm_w_hh_t"].shape[0]

    # lst_reverse exactly as in the PyTorch module (pure-Python permutation)
    lst_reverse = sorted(lst, key=lambda d: lst[d])
    lst_rev = jnp.asarray(lst_reverse, dtype=jnp.int32)

    # key embeddings + sum over the 2 key words: tiny, left to XLA (fuses w/ gather)
    embed_key = jnp.take(emb, keys[:, :, 0], axis=0)              # (kv, 2, E)
    keys_sum = jnp.sum(embed_key, axis=1)                         # (kv, E)

    embed = jnp.take(emb, batch_input, axis=0)                    # (N, L, E)
    sentence_embed = jnp.sum(embed, axis=1)[lst_rev]              # (N, E) reordered
    se_g = sentence_embed.reshape(batch_size, n1, E)              # (B, n-1, E)

    # TODO(synk): nn.Dropout treated as identity (eval-mode forward).
    max_len = int(max(sentences_lens))      # static, as pad_packed_sequence
    NP = ((N + 7) // 8) * 8                 # pad packed batch to a sublane multiple

    x_tm = jnp.transpose(embed[:, :max_len, :], (1, 0, 2))        # (T, N, E)
    x_tm = jnp.pad(x_tm, ((0, 0), (0, NP - N), (0, 0)))           # (T, NP, E)
    x2d = x_tm.reshape(max_len * NP, E)                           # time-major rows

    lens = jnp.zeros((NP, 1), jnp.int32).at[:N, 0].set(
        jnp.asarray(sentences_lens, jnp.int32))

    # one-hot reorder/reshape matrix: row (t*B + b) selects the word-LSTM state
    # lst_reverse[b*n1 + t]   (== h_input[b, t] / c_input[b, t] in the module)
    perm_np = np.zeros((n1 * batch_size, NP), np.float32)
    for t in range(n1):
        for b in range(batch_size):
            perm_np[t * batch_size + b, lst_reverse[b * n1 + t]] = 1.0
    perm = jnp.asarray(perm_np)

    y_flat, h_w, c_w = _encoder_pallas(
        lens, x2d, se_g, perm,
        params["lstm_w_ih_t"], params["lstm_w_hh_t"],
        params["lstm_b"].reshape(1, 4 * H),
        params["seq_h_w_ih_t"], params["seq_h_w_hh_t"],
        params["seq_h_b"].reshape(1, 4 * H),
        params["seq_c_w_ih_t"], params["seq_c_w_hh_t"],
        params["seq_c_b"].reshape(1, 4 * H),
        T=max_len, NP=NP, H=H, B=batch_size, n1=n1)

    # lane-dense (T, NP*H) kernel output -> (N, max_len, H) batch-first
    encoder_outputs = jnp.transpose(
        y_flat.reshape(max_len, NP, H)[:, :N, :], (1, 0, 2))

    h_out = h_w.reshape(1, batch_size, H)
    c_out = c_w.reshape(1, batch_size, H)
    return encoder_outputs, (h_out, c_out), keys_sum


# ---------------------------------------------------------------------------
# Deterministic parameter init (shapes from Encoder.__init__; gate layout i,f,g,o)
# ---------------------------------------------------------------------------
def init_params(key, V, E, H):
    ks = jax.random.split(key, 10)
    s = 0.1
    return {
        "embedding":    jax.random.normal(ks[0], (V, E), jnp.float32) * s,
        "lstm_w_ih_t":  jax.random.normal(ks[1], (E, 4 * H), jnp.float32) * s,
        "lstm_w_hh_t":  jax.random.normal(ks[2], (H, 4 * H), jnp.float32) * s,
        "lstm_b":       jax.random.normal(ks[3], (4 * H,), jnp.float32) * s,
        "seq_h_w_ih_t": jax.random.normal(ks[4], (H, 4 * H), jnp.float32) * s,
        "seq_h_w_hh_t": jax.random.normal(ks[5], (H, 4 * H), jnp.float32) * s,
        "seq_h_b":      jax.random.normal(ks[6], (4 * H,), jnp.float32) * s,
        "seq_c_w_ih_t": jax.random.normal(ks[7], (H, 4 * H), jnp.float32) * s,
        "seq_c_w_hh_t": jax.random.normal(ks[8], (H, 4 * H), jnp.float32) * s,
        "seq_c_b":      jax.random.normal(ks[9], (4 * H,), jnp.float32) * s,
    }


if __name__ == "__main__":
    key = jax.random.PRNGKey(0)
    V, E, H = 50, 32, 32          # vocab, embed_size, hidden_size
    batch_size, n = 2, 3          # n-1 = 2 sentences per example
    n1 = n - 1
    N = n1 * batch_size           # 4 packed sentences
    L = 8                         # max sentence length
    kv = 4                        # number of keys
    pad_idx = 0

    kp, k1, k2 = jax.random.split(key, 3)
    params = init_params(kp, V, E, H)
    batch_input = jax.random.randint(k1, (N, L), 0, V, dtype=jnp.int32)
    keys_idx = jax.random.randint(k2, (kv, 2, 1), 0, V, dtype=jnp.int32)
    sentences_lens = [8, 7, 6, 5]     # sorted desc (pack_padded_sequence requirement)
    lst = [2, 0, 3, 1]                # permutation used by the module's reorder

    enc_out, (h_last, c_last), keys_sum = encoder_forward(
        params, batch_input, sentences_lens, keys_idx, pad_idx,
        batch_size, n, lst)
    jax.block_until_ready((enc_out, h_last, c_last, keys_sum))

    max_len = max(sentences_lens)
    assert enc_out.shape == (N, max_len, H)
    assert h_last.shape == (1, batch_size, H)
    assert c_last.shape == (1, batch_size, H)
    assert keys_sum.shape == (kv, E)
    assert bool(jnp.all(jnp.isfinite(enc_out)))
    assert bool(jnp.all(jnp.isfinite(h_last)))
    assert bool(jnp.all(jnp.isfinite(c_last)))
    # pad_packed_sequence semantics: outputs past each length are exactly zero,
    # valid positions are not.
    for i, ln in enumerate(sentences_lens):
        assert bool(jnp.all(enc_out[i, ln:, :] == 0.0))
    assert bool(jnp.any(enc_out[0, :sentences_lens[0], :] != 0.0))
    print("KERNEL_OK")
</pallas_src>

<mosaic_0001>
module attributes {stable_mosaic.version = 11 : i64} {
  func.func @_encoder_kernel(%arg0: memref<8x1xi32, #tpu.memory_space<vmem>>, %arg1: memref<64x32xf32, #tpu.memory_space<vmem>>, %arg2: memref<2x2x32xf32, #tpu.memory_space<vmem>>, %arg3: memref<4x8xf32, #tpu.memory_space<vmem>>, %arg4: memref<32x128xf32, #tpu.memory_space<vmem>>, %arg5: memref<32x128xf32, #tpu.memory_space<vmem>>, %arg6: memref<1x128xf32, #tpu.memory_space<vmem>>, %arg7: memref<32x128xf32, #tpu.memory_space<vmem>>, %arg8: memref<32x128xf32, #tpu.memory_space<vmem>>, %arg9: memref<1x128xf32, #tpu.memory_space<vmem>>, %arg10: memref<32x128xf32, #tpu.memory_space<vmem>>, %arg11: memref<32x128xf32, #tpu.memory_space<vmem>>, %arg12: memref<1x128xf32, #tpu.memory_space<vmem>>, %arg13: memref<8x256xf32, #tpu.memory_space<vmem>>, %arg14: memref<2x32xf32, #tpu.memory_space<vmem>>, %arg15: memref<2x32xf32, #tpu.memory_space<vmem>>) attributes {dimension_semantics = [], scalar_prefetch = 0 : i64, scratch_operands = 0 : i64, tpu.core_type = #tpu.core_type<tc>} {
    %c0 = arith.constant 0 : index
    %c0_0 = arith.constant 0 : index
    %0 = vector.load %arg0[%c0, %c0_0] : memref<8x1xi32, #tpu.memory_space<vmem>>, vector<8x1xi32>
    %c0_1 = arith.constant 0 : index
    %c0_2 = arith.constant 0 : index
    %1 = vector.load %arg1[%c0_1, %c0_2] : memref<64x32xf32, #tpu.memory_space<vmem>>, vector<64x32xf32>
    %c0_3 = arith.constant 0 : index
    %c0_4 = arith.constant 0 : index
    %2 = vector.load %arg4[%c0_3, %c0_4] : memref<32x128xf32, #tpu.memory_space<vmem>>, vector<32x128xf32>
    %cst = arith.constant dense<0.000000e+00> : vector<64x128xf32>
    %3 = tpu.matmul %1, %2, %cst {dimension_numbers = #tpu.dot_dimension_numbers<[1], [0], [0], [1], [0, 0, 1, 1], [], []>} : vector<64x32xf32>, vector<32x128xf32>, vector<64x128xf32> -> vector<64x128xf32>
    %c0_5 = arith.constant 0 : index
    %c0_6 = arith.constant 0 : index
    %4 = vector.load %arg6[%c0_5, %c0_6] : memref<1x128xf32, #tpu.memory_space<vmem>>, vector<1x128xf32>
    %5 = vector.broadcast %4 : vector<1x128xf32> to vector<64x128xf32>
    %6 = arith.addf %3, %5 : vector<64x128xf32>
    %c0_7 = arith.constant 0 : index
    %c0_8 = arith.constant 0 : index
    %7 = vector.load %arg5[%c0_7, %c0_8] : memref<32x128xf32, #tpu.memory_space<vmem>>, vector<32x128xf32>
    %cst_9 = arith.constant 0.000000e+00 : f32
    %8 = vector.broadcast %cst_9 : f32 to vector<8x32xf32>
    %cst_10 = arith.constant 0.000000e+00 : f32
    %9 = vector.broadcast %cst_10 : f32 to vector<8x32xf32>
    %cst_11 = arith.constant 0.000000e+00 : f32
    %10 = vector.broadcast %cst_11 : f32 to vector<8x32xf32>
    %11 = vector.extract_strided_slice %6 {offsets = [0, 0], sizes = [8, 128], strides = [1, 1]} : vector<64x128xf32> to vector<8x128xf32>
    %cst_12 = arith.constant dense<0.000000e+00> : vector<8x128xf32>
    %12 = tpu.matmul %8, %7, %cst_12 {dimension_numbers = #tpu.dot_dimension_numbers<[1], [0], [0], [1], [0, 0, 1, 1], [], []>} : vector<8x32xf32>, vector<32x128xf32>, vector<8x128xf32> -> vector<8x128xf32>
    %13 = arith.addf %11, %12 : vector<8x128xf32>
    %14 = vector.extract_strided_slice %13 {offsets = [0, 0], sizes = [8, 64], strides = [1, 1]} : vector<8x128xf32> to vector<8x64xf32>
    %15 = arith.negf %14 : vector<8x64xf32>
    %16 = math.exp %15 : vector<8x64xf32>
    %cst_13 = arith.constant 1.000000e+00 : f32
    %17 = vector.broadcast %cst_13 : f32 to vector<8x64xf32>
    %18 = arith.addf %17, %16 : vector<8x64xf32>
    %19 = arith.divf %17, %18 : vector<8x64xf32>
    %20 = vector.extract_strided_slice %13 {offsets = [0, 64], sizes = [8, 32], strides = [1, 1]} : vector<8x128xf32> to vector<8x32xf32>
    %21 = math.tanh %20 : vector<8x32xf32>
    %22 = vector.extract_strided_slice %13 {offsets = [0, 96], sizes = [8, 32], strides = [1, 1]} : vector<8x128xf32> to vector<8x32xf32>
    %23 = arith.negf %22 : vector<8x32xf32>
    %24 = math.exp %23 : vector<8x32xf32>
    %cst_14 = arith.constant 1.000000e+00 : f32
    %25 = vector.broadcast %cst_14 : f32 to vector<8x32xf32>
    %26 = arith.addf %25, %24 : vector<8x32xf32>
    %27 = arith.divf %25, %26 : vector<8x32xf32>
    %28 = vector.extract_strided_slice %19 {offsets = [0, 32], sizes = [8, 32], strides = [1, 1]} : vector<8x64xf32> to vector<8x32xf32>
    %29 = arith.mulf %28, %9 : vector<8x32xf32>
    %30 = vector.extract_strided_slice %19 {offsets = [0, 0], sizes = [8, 32], strides = [1, 1]} : vector<8x64xf32> to vector<8x32xf32>
    %31 = arith.mulf %30, %21 : vector<8x32xf32>
    %32 = arith.addf %29, %31 : vector<8x32xf32>
    %33 = math.tanh %32 : vector<8x32xf32>
    %34 = arith.mulf %27, %33 : vector<8x32xf32>
    %c0_i32 = arith.constant 0 : i32
    %35 = vector.broadcast %c0_i32 : i32 to vector<8x1xi32>
    %36 = arith.cmpi sgt, %0, %35 : vector<8x1xi32>
    %37 = vector.shape_cast %36 : vector<8x1xi1> to vector<8x1xi1>
    %38 = vector.broadcast %37 : vector<8x1xi1> to vector<8x32xi1>
    %39 = arith.select %38, %34, %8 : vector<8x32xi1>, vector<8x32xf32>
    %40 = vector.shape_cast %36 : vector<8x1xi1> to vector<8x1xi1>
    %41 = vector.broadcast %40 : vector<8x1xi1> to vector<8x32xi1>
    %42 = arith.select %41, %32, %9 : vector<8x32xi1>, vector<8x32xf32>
    %43 = vector.shape_cast %36 : vector<8x1xi1> to vector<8x1xi1>
    %44 = vector.broadcast %43 : vector<8x1xi1> to vector<8x32xi1>
    %45 = arith.select %44, %34, %10 : vector<8x32xi1>, vector<8x32xf32>
    %46 = vector.extract_strided_slice %45 {offsets = [0, 0], sizes = [1, 32], strides = [1, 1]} : vector<8x32xf32> to vector<1x32xf32>
    %47 = vector.extract_strided_slice %45 {offsets = [1, 0], sizes = [1, 32], strides = [1, 1]} : vector<8x32xf32> to vector<1x32xf32>
    %48 = vector.extract_strided_slice %45 {offsets = [2, 0], sizes = [1, 32], strides = [1, 1]} : vector<8x32xf32> to vector<1x32xf32>
    %49 = vector.extract_strided_slice %45 {offsets = [3, 0], sizes = [1, 32], strides = [1, 1]} : vector<8x32xf32> to vector<1x32xf32>
    %50 = vector.extract_strided_slice %45 {offsets = [4, 0], sizes = [1, 32], strides = [1, 1]} : vector<8x32xf32> to vector<1x32xf32>
    %51 = vector.extract_strided_slice %45 {offsets = [5, 0], sizes = [1, 32], strides = [1, 1]} : vector<8x32xf32> to vector<1x32xf32>
    %52 = vector.extract_strided_slice %45 {offsets = [6, 0], sizes = [1, 32], strides = [1, 1]} : vector<8x32xf32> to vector<1x32xf32>
    %53 = vector.extract_strided_slice %45 {offsets = [7, 0], sizes = [1, 32], strides = [1, 1]} : vector<8x32xf32> to vector<1x32xf32>
    %54 = tpu.concatenate %46, %47, %48, %49, %50, %51, %52, %53 in 1 : vector<1x32xf32>, vector<1x32xf32>, vector<1x32xf32>, vector<1x32xf32>, vector<1x32xf32>, vector<1x32xf32>, vector<1x32xf32>, vector<1x32xf32> -> vector<1x256xf32>
    %55 = vector.extract_strided_slice %6 {offsets = [8, 0], sizes = [8, 128], strides = [1, 1]} : vector<64x128xf32> to vector<8x128xf32>
    %cst_15 = arith.constant dense<0.000000e+00> : vector<8x128xf32>
    %56 = tpu.matmul %39, %7, %cst_15 {dimension_numbers = #tpu.dot_dimension_numbers<[1], [0], [0], [1], [0, 0, 1, 1], [], []>} : vector<8x32xf32>, vector<32x128xf32>, vector<8x128xf32> -> vector<8x128xf32>
    %57 = arith.addf %55, %56 : vector<8x128xf32>
    %58 = vector.extract_strided_slice %57 {offsets = [0, 0], sizes = [8, 64], strides = [1, 1]} : vector<8x128xf32> to vector<8x64xf32>
    %59 = arith.negf %58 : vector<8x64xf32>
    %60 = math.exp %59 : vector<8x64xf32>
    %cst_16 = arith.constant 1.000000e+00 : f32
    %61 = vector.broadcast %cst_16 : f32 to vector<8x64xf32>
    %62 = arith.addf %61, %60 : vector<8x64xf32>
    %63 = arith.divf %61, %62 : vector<8x64xf32>
    %64 = vector.extract_strided_slice %57 {offsets = [0, 64], sizes = [8, 32], strides = [1, 1]} : vector<8x128xf32> to vector<8x32xf32>
    %65 = math.tanh %64 : vector<8x32xf32>
    %66 = vector.extract_strided_slice %57 {offsets = [0, 96], sizes = [8, 32], strides = [1, 1]} : vector<8x128xf32> to vector<8x32xf32>
    %67 = arith.negf %66 : vector<8x32xf32>
    %68 = math.exp %67 : vector<8x32xf32>
    %cst_17 = arith.constant 1.000000e+00 : f32
    %69 = vector.broadcast %cst_17 : f32 to vector<8x32xf32>
    %70 = arith.addf %69, %68 : vector<8x32xf32>
    %71 = arith.divf %69, %70 : vector<8x32xf32>
    %72 = vector.extract_strided_slice %63 {offsets = [0, 32], sizes = [8, 32], strides = [1, 1]} : vector<8x64xf32> to vector<8x32xf32>
    %73 = arith.mulf %72, %42 : vector<8x32xf32>
    %74 = vector.extract_strided_slice %63 {offsets = [0, 0], sizes = [8, 32], strides = [1, 1]} : vector<8x64xf32> to vector<8x32xf32>
    %75 = arith.mulf %74, %65 : vector<8x32xf32>
    %76 = arith.addf %73, %75 : vector<8x32xf32>
    %77 = math.tanh %76 : vector<8x32xf32>
    %78 = arith.mulf %71, %77 : vector<8x32xf32>
    %c1_i32 = arith.constant 1 : i32
    %79 = vector.broadcast %c1_i32 : i32 to vector<8x1xi32>
    %80 = arith.cmpi sgt, %0, %79 : vector<8x1xi32>
    %81 = vector.shape_cast %80 : vector<8x1xi1> to vector<8x1xi1>
    %82 = vector.broadcast %81 : vector<8x1xi1> to vector<8x32xi1>
    %83 = arith.select %82, %78, %39 : vector<8x32xi1>, vector<8x32xf32>
    %84 = vector.shape_cast %80 : vector<8x1xi1> to vector<8x1xi1>
    %85 = vector.broadcast %84 : vector<8x1xi1> to vector<8x32xi1>
    %86 = arith.select %85, %76, %42 : vector<8x32xi1>, vector<8x32xf32>
    %87 = vector.shape_cast %80 : vector<8x1xi1> to vector<8x1xi1>
    %88 = vector.broadcast %87 : vector<8x1xi1> to vector<8x32xi1>
    %89 = arith.select %88, %78, %10 : vector<8x32xi1>, vector<8x32xf32>
    %90 = vector.extract_strided_slice %89 {offsets = [0, 0], sizes = [1, 32], strides = [1, 1]} : vector<8x32xf32> to vector<1x32xf32>
    %91 = vector.extract_strided_slice %89 {offsets = [1, 0], sizes = [1, 32], strides = [1, 1]} : vector<8x32xf32> to vector<1x32xf32>
    %92 = vector.extract_strided_slice %89 {offsets = [2, 0], sizes = [1, 32], strides = [1, 1]} : vector<8x32xf32> to vector<1x32xf32>
    %93 = vector.extract_strided_slice %89 {offsets = [3, 0], sizes = [1, 32], strides = [1, 1]} : vector<8x32xf32> to vector<1x32xf32>
    %94 = vector.extract_strided_slice %89 {offsets = [4, 0], sizes = [1, 32], strides = [1, 1]} : vector<8x32xf32> to vector<1x32xf32>
    %95 = vector.extract_strided_slice %89 {offsets = [5, 0], sizes = [1, 32], strides = [1, 1]} : vector<8x32xf32> to vector<1x32xf32>
    %96 = vector.extract_strided_slice %89 {offsets = [6, 0], sizes = [1, 32], strides = [1, 1]} : vector<8x32xf32> to vector<1x32xf32>
    %97 = vector.extract_strided_slice %89 {offsets = [7, 0], sizes = [1, 32], strides = [1, 1]} : vector<8x32xf32> to vector<1x32xf32>
    %98 = tpu.concatenate %90, %91, %92, %93, %94, %95, %96, %97 in 1 : vector<1x32xf32>, vector<1x32xf32>, vector<1x32xf32>, vector<1x32xf32>, vector<1x32xf32>, vector<1x32xf32>, vector<1x32xf32>, vector<1x32xf32> -> vector<1x256xf32>
    %99 = vector.extract_strided_slice %6 {offsets = [16, 0], sizes = [8, 128], strides = [1, 1]} : vector<64x128xf32> to vector<8x128xf32>
    %cst_18 = arith.constant dense<0.000000e+00> : vector<8x128xf32>
    %100 = tpu.matmul %83, %7, %cst_18 {dimension_numbers = #tpu.dot_dimension_numbers<[1], [0], [0], [1], [0, 0, 1, 1], [], []>} : vector<8x32xf32>, vector<32x128xf32>, vector<8x128xf32> -> vector<8x128xf32>
    %101 = arith.addf %99, %100 : vector<8x128xf32>
    %102 = vector.extract_strided_slice %101 {offsets = [0, 0], sizes = [8, 64], strides = [1, 1]} : vector<8x128xf32> to vector<8x64xf32>
    %103 = arith.negf %102 : vector<8x64xf32>
    %104 = math.exp %103 : vector<8x64xf32>
    %cst_19 = arith.constant 1.000000e+00 : f32
    %105 = vector.broadcast %cst_19 : f32 to vector<8x64xf32>
    %106 = arith.addf %105, %104 : vector<8x64xf32>
    %107 = arith.divf %105, %106 : vector<8x64xf32>
    %108 = vector.extract_strided_slice %101 {offsets = [0, 64], sizes = [8, 32], strides = [1, 1]} : vector<8x128xf32> to vector<8x32xf32>
    %109 = math.tanh %108 : vector<8x32xf32>
    %110 = vector.extract_strided_slice %101 {offsets = [0, 96], sizes = [8, 32], strides = [1, 1]} : vector<8x128xf32> to vector<8x32xf32>
    %111 = arith.negf %110 : vector<8x32xf32>
    %112 = math.exp %111 : vector<8x32xf32>
    %cst_20 = arith.constant 1.000000e+00 : f32
    %113 = vector.broadcast %cst_20 : f32 to vector<8x32xf32>
    %114 = arith.addf %113, %112 : vector<8x32xf32>
    %115 = arith.divf %113, %114 : vector<8x32xf32>
    %116 = vector.extract_strided_slice %107 {offsets = [0, 32], sizes = [8, 32], strides = [1, 1]} : vector<8x64xf32> to vector<8x32xf32>
    %117 = arith.mulf %116, %86 : vector<8x32xf32>
    %118 = vector.extract_strided_slice %107 {offsets = [0, 0], sizes = [8, 32], strides = [1, 1]} : vector<8x64xf32> to vector<8x32xf32>
    %119 = arith.mulf %118, %109 : vector<8x32xf32>
    %120 = arith.addf %117, %119 : vector<8x32xf32>
    %121 = math.tanh %120 : vector<8x32xf32>
    %122 = arith.mulf %115, %121 : vector<8x32xf32>
    %c2_i32 = arith.constant 2 : i32
    %123 = vector.broadcast %c2_i32 : i32 to vector<8x1xi32>
    %124 = arith.cmpi sgt, %0, %123 : vector<8x1xi32>
    %125 = vector.shape_cast %124 : vector<8x1xi1> to vector<8x1xi1>
    %126 = vector.broadcast %125 : vector<8x1xi1> to vector<8x32xi1>
    %127 = arith.select %126, %122, %83 : vector<8x32xi1>, vector<8x32xf32>
    %128 = vector.shape_cast %124 : vector<8x1xi1> to vector<8x1xi1>
    %129 = vector.broadcast %128 : vector<8x1xi1> to vector<8x32xi1>
    %130 = arith.select %129, %120, %86 : vector<8x32xi1>, vector<8x32xf32>
    %131 = vector.shape_cast %124 : vector<8x1xi1> to vector<8x1xi1>
    %132 = vector.broadcast %131 : vector<8x1xi1> to vector<8x32xi1>
    %133 = arith.select %132, %122, %10 : vector<8x32xi1>, vector<8x32xf32>
    %134 = vector.extract_strided_slice %133 {offsets = [0, 0], sizes = [1, 32], strides = [1, 1]} : vector<8x32xf32> to vector<1x32xf32>
    %135 = vector.extract_strided_slice %133 {offsets = [1, 0], sizes = [1, 32], strides = [1, 1]} : vector<8x32xf32> to vector<1x32xf32>
    %136 = vector.extract_strided_slice %133 {offsets = [2, 0], sizes = [1, 32], strides = [1, 1]} : vector<8x32xf32> to vector<1x32xf32>
    %137 = vector.extract_strided_slice %133 {offsets = [3, 0], sizes = [1, 32], strides = [1, 1]} : vector<8x32xf32> to vector<1x32xf32>
    %138 = vector.extract_strided_slice %133 {offsets = [4, 0], sizes = [1, 32], strides = [1, 1]} : vector<8x32xf32> to vector<1x32xf32>
    %139 = vector.extract_strided_slice %133 {offsets = [5, 0], sizes = [1, 32], strides = [1, 1]} : vector<8x32xf32> to vector<1x32xf32>
    %140 = vector.extract_strided_slice %133 {offsets = [6, 0], sizes = [1, 32], strides = [1, 1]} : vector<8x32xf32> to vector<1x32xf32>
    %141 = vector.extract_strided_slice %133 {offsets = [7, 0], sizes = [1, 32], strides = [1, 1]} : vector<8x32xf32> to vector<1x32xf32>
    %142 = tpu.concatenate %134, %135, %136, %137, %138, %139, %140, %141 in 1 : vector<1x32xf32>, vector<1x32xf32>, vector<1x32xf32>, vector<1x32xf32>, vector<1x32xf32>, vector<1x32xf32>, vector<1x32xf32>, vector<1x32xf32> -> vector<1x256xf32>
    %143 = vector.extract_strided_slice %6 {offsets = [24, 0], sizes = [8, 128], strides = [1, 1]} : vector<64x128xf32> to vector<8x128xf32>
    %cst_21 = arith.constant dense<0.000000e+00> : vector<8x128xf32>
    %144 = tpu.matmul %127, %7, %cst_21 {dimension_numbers = #tpu.dot_dimension_numbers<[1], [0], [0], [1], [0, 0, 1, 1], [], []>} : vector<8x32xf32>, vector<32x128xf32>, vector<8x128xf32> -> vector<8x128xf32>
    %145 = arith.addf %143, %144 : vector<8x128xf32>
    %146 = vector.extract_strided_slice %145 {offsets = [0, 0], sizes = [8, 64], strides = [1, 1]} : vector<8x128xf32> to vector<8x64xf32>
    %147 = arith.negf %146 : vector<8x64xf32>
    %148 = math.exp %147 : vector<8x64xf32>
    %cst_22 = arith.constant 1.000000e+00 : f32
    %149 = vector.broadcast %cst_22 : f32 to vector<8x64xf32>
    %150 = arith.addf %149, %148 : vector<8x64xf32>
    %151 = arith.divf %149, %150 : vector<8x64xf32>
    %152 = vector.extract_strided_slice %145 {offsets = [0, 64], sizes = [8, 32], strides = [1, 1]} : vector<8x128xf32> to vector<8x32xf32>
    %153 = math.tanh %152 : vector<8x32xf32>
    %154 = vector.extract_strided_slice %145 {offsets = [0, 96], sizes = [8, 32], strides = [1, 1]} : vector<8x128xf32> to vector<8x32xf32>
    %155 = arith.negf %154 : vector<8x32xf32>
    %156 = math.exp %155 : vector<8x32xf32>
    %cst_23 = arith.constant 1.000000e+00 : f32
    %157 = vector.broadcast %cst_23 : f32 to vector<8x32xf32>
    %158 = arith.addf %157, %156 : vector<8x32xf32>
    %159 = arith.divf %157, %158 : vector<8x32xf32>
    %160 = vector.extract_strided_slice %151 {offsets = [0, 32], sizes = [8, 32], strides = [1, 1]} : vector<8x64xf32> to vector<8x32xf32>
    %161 = arith.mulf %160, %130 : vector<8x32xf32>
    %162 = vector.extract_strided_slice %151 {offsets = [0, 0], sizes = [8, 32], strides = [1, 1]} : vector<8x64xf32> to vector<8x32xf32>
    %163 = arith.mulf %162, %153 : vector<8x32xf32>
    %164 = arith.addf %161, %163 : vector<8x32xf32>
    %165 = math.tanh %164 : vector<8x32xf32>
    %166 = arith.mulf %159, %165 : vector<8x32xf32>
    %c3_i32 = arith.constant 3 : i32
    %167 = vector.broadcast %c3_i32 : i32 to vector<8x1xi32>
    %168 = arith.cmpi sgt, %0, %167 : vector<8x1xi32>
    %169 = vector.shape_cast %168 : vector<8x1xi1> to vector<8x1xi1>
    %170 = vector.broadcast %169 : vector<8x1xi1> to vector<8x32xi1>
    %171 = arith.select %170, %166, %127 : vector<8x32xi1>, vector<8x32xf32>
    %172 = vector.shape_cast %168 : vector<8x1xi1> to vector<8x1xi1>
    %173 = vector.broadcast %172 : vector<8x1xi1> to vector<8x32xi1>
    %174 = arith.select %173, %164, %130 : vector<8x32xi1>, vector<8x32xf32>
    %175 = vector.shape_cast %168 : vector<8x1xi1> to vector<8x1xi1>
    %176 = vector.broadcast %175 : vector<8x1xi1> to vector<8x32xi1>
    %177 = arith.select %176, %166, %10 : vector<8x32xi1>, vector<8x32xf32>
    %178 = vector.extract_strided_slice %177 {offsets = [0, 0], sizes = [1, 32], strides = [1, 1]} : vector<8x32xf32> to vector<1x32xf32>
    %179 = vector.extract_strided_slice %177 {offsets = [1, 0], sizes = [1, 32], strides = [1, 1]} : vector<8x32xf32> to vector<1x32xf32>
    %180 = vector.extract_strided_slice %177 {offsets = [2, 0], sizes = [1, 32], strides = [1, 1]} : vector<8x32xf32> to vector<1x32xf32>
    %181 = vector.extract_strided_slice %177 {offsets = [3, 0], sizes = [1, 32], strides = [1, 1]} : vector<8x32xf32> to vector<1x32xf32>
    %182 = vector.extract_strided_slice %177 {offsets = [4, 0], sizes = [1, 32], strides = [1, 1]} : vector<8x32xf32> to vector<1x32xf32>
    %183 = vector.extract_strided_slice %177 {offsets = [5, 0], sizes = [1, 32], strides = [1, 1]} : vector<8x32xf32> to vector<1x32xf32>
    %184 = vector.extract_strided_slice %177 {offsets = [6, 0], sizes = [1, 32], strides = [1, 1]} : vector<8x32xf32> to vector<1x32xf32>
    %185 = vector.extract_strided_slice %177 {offsets = [7, 0], sizes = [1, 32], strides = [1, 1]} : vector<8x32xf32> to vector<1x32xf32>
    %186 = tpu.concatenate %178, %179, %180, %181, %182, %183, %184, %185 in 1 : vector<1x32xf32>, vector<1x32xf32>, vector<1x32xf32>, vector<1x32xf32>, vector<1x32xf32>, vector<1x32xf32>, vector<1x32xf32>, vector<1x32xf32> -> vector<1x256xf32>
    %187 = vector.extract_strided_slice %6 {offsets = [32, 0], sizes = [8, 128], strides = [1, 1]} : vector<64x128xf32> to vector<8x128xf32>
    %cst_24 = arith.constant dense<0.000000e+00> : vector<8x128xf32>
    %188 = tpu.matmul %171, %7, %cst_24 {dimension_numbers = #tpu.dot_dimension_numbers<[1], [0], [0], [1], [0, 0, 1, 1], [], []>} : vector<8x32xf32>, vector<32x128xf32>, vector<8x128xf32> -> vector<8x128xf32>
    %189 = arith.addf %187, %188 : vector<8x128xf32>
    %190 = vector.extract_strided_slice %189 {offsets = [0, 0], sizes = [8, 64], strides = [1, 1]} : vector<8x128xf32> to vector<8x64xf32>
    %191 = arith.negf %190 : vector<8x64xf32>
    %192 = math.exp %191 : vector<8x64xf32>
    %cst_25 = arith.constant 1.000000e+00 : f32
    %193 = vector.broadcast %cst_25 : f32 to vector<8x64xf32>
    %194 = arith.addf %193, %192 : vector<8x64xf32>
    %195 = arith.divf %193, %194 : vector<8x64xf32>
    %196 = vector.extract_strided_slice %189 {offsets = [0, 64], sizes = [8, 32], strides = [1, 1]} : vector<8x128xf32> to vector<8x32xf32>
    %197 = math.tanh %196 : vector<8x32xf32>
    %198 = vector.extract_strided_slice %189 {offsets = [0, 96], sizes = [8, 32], strides = [1, 1]} : vector<8x128xf32> to vector<8x32xf32>
    %199 = arith.negf %198 : vector<8x32xf32>
    %200 = math.exp %199 : vector<8x32xf32>
    %cst_26 = arith.constant 1.000000e+00 : f32
    %201 = vector.broadcast %cst_26 : f32 to vector<8x32xf32>
    %202 = arith.addf %201, %200 : vector<8x32xf32>
    %203 = arith.divf %201, %202 : vector<8x32xf32>
    %204 = vector.extract_strided_slice %195 {offsets = [0, 32], sizes = [8, 32], strides = [1, 1]} : vector<8x64xf32> to vector<8x32xf32>
    %205 = arith.mulf %204, %174 : vector<8x32xf32>
    %206 = vector.extract_strided_slice %195 {offsets = [0, 0], sizes = [8, 32], strides = [1, 1]} : vector<8x64xf32> to vector<8x32xf32>
    %207 = arith.mulf %206, %197 : vector<8x32xf32>
    %208 = arith.addf %205, %207 : vector<8x32xf32>
    %209 = math.tanh %208 : vector<8x32xf32>
    %210 = arith.mulf %203, %209 : vector<8x32xf32>
    %c4_i32 = arith.constant 4 : i32
    %211 = vector.broadcast %c4_i32 : i32 to vector<8x1xi32>
    %212 = arith.cmpi sgt, %0, %211 : vector<8x1xi32>
    %213 = vector.shape_cast %212 : vector<8x1xi1> to vector<8x1xi1>
    %214 = vector.broadcast %213 : vector<8x1xi1> to vector<8x32xi1>
    %215 = arith.select %214, %210, %171 : vector<8x32xi1>, vector<8x32xf32>
    %216 = vector.shape_cast %212 : vector<8x1xi1> to vector<8x1xi1>
    %217 = vector.broadcast %216 : vector<8x1xi1> to vector<8x32xi1>
    %218 = arith.select %217, %208, %174 : vector<8x32xi1>, vector<8x32xf32>
    %219 = vector.shape_cast %212 : vector<8x1xi1> to vector<8x1xi1>
    %220 = vector.broadcast %219 : vector<8x1xi1> to vector<8x32xi1>
    %221 = arith.select %220, %210, %10 : vector<8x32xi1>, vector<8x32xf32>
    %222 = vector.extract_strided_slice %221 {offsets = [0, 0], sizes = [1, 32], strides = [1, 1]} : vector<8x32xf32> to vector<1x32xf32>
    %223 = vector.extract_strided_slice %221 {offsets = [1, 0], sizes = [1, 32], strides = [1, 1]} : vector<8x32xf32> to vector<1x32xf32>
    %224 = vector.extract_strided_slice %221 {offsets = [2, 0], sizes = [1, 32], strides = [1, 1]} : vector<8x32xf32> to vector<1x32xf32>
    %225 = vector.extract_strided_slice %221 {offsets = [3, 0], sizes = [1, 32], strides = [1, 1]} : vector<8x32xf32> to vector<1x32xf32>
    %226 = vector.extract_strided_slice %221 {offsets = [4, 0], sizes = [1, 32], strides = [1, 1]} : vector<8x32xf32> to vector<1x32xf32>
    %227 = vector.extract_strided_slice %221 {offsets = [5, 0], sizes = [1, 32], strides = [1, 1]} : vector<8x32xf32> to vector<1x32xf32>
    %228 = vector.extract_strided_slice %221 {offsets = [6, 0], sizes = [1, 32], strides = [1, 1]} : vector<8x32xf32> to vector<1x32xf32>
    %229 = vector.extract_strided_slice %221 {offsets = [7, 0], sizes = [1, 32], strides = [1, 1]} : vector<8x32xf32> to vector<1x32xf32>
    %230 = tpu.concatenate %222, %223, %224, %225, %226, %227, %228, %229 in 1 : vector<1x32xf32>, vector<1x32xf32>, vector<1x32xf32>, vector<1x32xf32>, vector<1x32xf32>, vector<1x32xf32>, vector<1x32xf32>, vector<1x32xf32> -> vector<1x256xf32>
    %231 = vector.extract_strided_slice %6 {offsets = [40, 0], sizes = [8, 128], strides = [1, 1]} : vector<64x128xf32> to vector<8x128xf32>
    %cst_27 = arith.constant dense<0.000000e+00> : vector<8x128xf32>
    %232 = tpu.matmul %215, %7, %cst_27 {dimension_numbers = #tpu.dot_dimension_numbers<[1], [0], [0], [1], [0, 0, 1, 1], [], []>} : vector<8x32xf32>, vector<32x128xf32>, vector<8x128xf32> -> vector<8x128xf32>
    %233 = arith.addf %231, %232 : vector<8x128xf32>
    %234 = vector.extract_strided_slice %233 {offsets = [0, 0], sizes = [8, 64], strides = [1, 1]} : vector<8x128xf32> to vector<8x64xf32>
    %235 = arith.negf %234 : vector<8x64xf32>
    %236 = math.exp %235 : vector<8x64xf32>
    %cst_28 = arith.constant 1.000000e+00 : f32
    %237 = vector.broadcast %cst_28 : f32 to vector<8x64xf32>
    %238 = arith.addf %237, %236 : vector<8x64xf32>
    %239 = arith.divf %237, %238 : vector<8x64xf32>
    %240 = vector.extract_strided_slice %233 {offsets = [0, 64], sizes = [8, 32], strides = [1, 1]} : vector<8x128xf32> to vector<8x32xf32>
    %241 = math.tanh %240 : vector<8x32xf32>
    %242 = vector.extract_strided_slice %233 {offsets = [0, 96], sizes = [8, 32], strides = [1, 1]} : vector<8x128xf32> to vector<8x32xf32>
    %243 = arith.negf %242 : vector<8x32xf32>
    %244 = math.exp %243 : vector<8x32xf32>
    %cst_29 = arith.constant 1.000000e+00 : f32
    %245 = vector.broadcast %cst_29 : f32 to vector<8x32xf32>
    %246 = arith.addf %245, %244 : vector<8x32xf32>
    %247 = arith.divf %245, %246 : vector<8x32xf32>
    %248 = vector.extract_strided_slice %239 {offsets = [0, 32], sizes = [8, 32], strides = [1, 1]} : vector<8x64xf32> to vector<8x32xf32>
    %249 = arith.mulf %248, %218 : vector<8x32xf32>
    %250 = vector.extract_strided_slice %239 {offsets = [0, 0], sizes = [8, 32], strides = [1, 1]} : vector<8x64xf32> to vector<8x32xf32>
    %251 = arith.mulf %250, %241 : vector<8x32xf32>
    %252 = arith.addf %249, %251 : vector<8x32xf32>
    %253 = math.tanh %252 : vector<8x32xf32>
    %254 = arith.mulf %247, %253 : vector<8x32xf32>
    %c5_i32 = arith.constant 5 : i32
    %255 = vector.broadcast %c5_i32 : i32 to vector<8x1xi32>
    %256 = arith.cmpi sgt, %0, %255 : vector<8x1xi32>
    %257 = vector.shape_cast %256 : vector<8x1xi1> to vector<8x1xi1>
    %258 = vector.broadcast %257 : vector<8x1xi1> to vector<8x32xi1>
    %259 = arith.select %258, %254, %215 : vector<8x32xi1>, vector<8x32xf32>
    %260 = vector.shape_cast %256 : vector<8x1xi1> to vector<8x1xi1>
    %261 = vector.broadcast %260 : vector<8x1xi1> to vector<8x32xi1>
    %262 = arith.select %261, %252, %218 : vector<8x32xi1>, vector<8x32xf32>
    %263 = vector.shape_cast %256 : vector<8x1xi1> to vector<8x1xi1>
    %264 = vector.broadcast %263 : vector<8x1xi1> to vector<8x32xi1>
    %265 = arith.select %264, %254, %10 : vector<8x32xi1>, vector<8x32xf32>
    %266 = vector.extract_strided_slice %265 {offsets = [0, 0], sizes = [1, 32], strides = [1, 1]} : vector<8x32xf32> to vector<1x32xf32>
    %267 = vector.extract_strided_slice %265 {offsets = [1, 0], sizes = [1, 32], strides = [1, 1]} : vector<8x32xf32> to vector<1x32xf32>
    %268 = vector.extract_strided_slice %265 {offsets = [2, 0], sizes = [1, 32], strides = [1, 1]} : vector<8x32xf32> to vector<1x32xf32>
    %269 = vector.extract_strided_slice %265 {offsets = [3, 0], sizes = [1, 32], strides = [1, 1]} : vector<8x32xf32> to vector<1x32xf32>
    %270 = vector.extract_strided_slice %265 {offsets = [4, 0], sizes = [1, 32], strides = [1, 1]} : vector<8x32xf32> to vector<1x32xf32>
    %271 = vector.extract_strided_slice %265 {offsets = [5, 0], sizes = [1, 32], strides = [1, 1]} : vector<8x32xf32> to vector<1x32xf32>
    %272 = vector.extract_strided_slice %265 {offsets = [6, 0], sizes = [1, 32], strides = [1, 1]} : vector<8x32xf32> to vector<1x32xf32>
    %273 = vector.extract_strided_slice %265 {offsets = [7, 0], sizes = [1, 32], strides = [1, 1]} : vector<8x32xf32> to vector<1x32xf32>
    %274 = tpu.concatenate %266, %267, %268, %269, %270, %271, %272, %273 in 1 : vector<1x32xf32>, vector<1x32xf32>, vector<1x32xf32>, vector<1x32xf32>, vector<1x32xf32>, vector<1x32xf32>, vector<1x32xf32>, vector<1x32xf32> -> vector<1x256xf32>
    %275 = vector.extract_strided_slice %6 {offsets = [48, 0], sizes = [8, 128], strides = [1, 1]} : vector<64x128xf32> to vector<8x128xf32>
    %cst_30 = arith.constant dense<0.000000e+00> : vector<8x128xf32>
    %276 = tpu.matmul %259, %7, %cst_30 {dimension_numbers = #tpu.dot_dimension_numbers<[1], [0], [0], [1], [0, 0, 1, 1], [], []>} : vector<8x32xf32>, vector<32x128xf32>, vector<8x128xf32> -> vector<8x128xf32>
    %277 = arith.addf %275, %276 : vector<8x128xf32>
    %278 = vector.extract_strided_slice %277 {offsets = [0, 0], sizes = [8, 64], strides = [1, 1]} : vector<8x128xf32> to vector<8x64xf32>
    %279 = arith.negf %278 : vector<8x64xf32>
    %280 = math.exp %279 : vector<8x64xf32>
    %cst_31 = arith.constant 1.000000e+00 : f32
    %281 = vector.broadcast %cst_31 : f32 to vector<8x64xf32>
    %282 = arith.addf %281, %280 : vector<8x64xf32>
    %283 = arith.divf %281, %282 : vector<8x64xf32>
    %284 = vector.extract_strided_slice %277 {offsets = [0, 64], sizes = [8, 32], strides = [1, 1]} : vector<8x128xf32> to vector<8x32xf32>
    %285 = math.tanh %284 : vector<8x32xf32>
    %286 = vector.extract_strided_slice %277 {offsets = [0, 96], sizes = [8, 32], strides = [1, 1]} : vector<8x128xf32> to vector<8x32xf32>
    %287 = arith.negf %286 : vector<8x32xf32>
    %288 = math.exp %287 : vector<8x32xf32>
    %cst_32 = arith.constant 1.000000e+00 : f32
    %289 = vector.broadcast %cst_32 : f32 to vector<8x32xf32>
    %290 = arith.addf %289, %288 : vector<8x32xf32>
    %291 = arith.divf %289, %290 : vector<8x32xf32>
    %292 = vector.extract_strided_slice %283 {offsets = [0, 32], sizes = [8, 32], strides = [1, 1]} : vector<8x64xf32> to vector<8x32xf32>
    %293 = arith.mulf %292, %262 : vector<8x32xf32>
    %294 = vector.extract_strided_slice %283 {offsets = [0, 0], sizes = [8, 32], strides = [1, 1]} : vector<8x64xf32> to vector<8x32xf32>
    %295 = arith.mulf %294, %285 : vector<8x32xf32>
    %296 = arith.addf %293, %295 : vector<8x32xf32>
    %297 = math.tanh %296 : vector<8x32xf32>
    %298 = arith.mulf %291, %297 : vector<8x32xf32>
    %c6_i32 = arith.constant 6 : i32
    %299 = vector.broadcast %c6_i32 : i32 to vector<8x1xi32>
    %300 = arith.cmpi sgt, %0, %299 : vector<8x1xi32>
    %301 = vector.shape_cast %300 : vector<8x1xi1> to vector<8x1xi1>
    %302 = vector.broadcast %301 : vector<8x1xi1> to vector<8x32xi1>
    %303 = arith.select %302, %298, %259 : vector<8x32xi1>, vector<8x32xf32>
    %304 = vector.shape_cast %300 : vector<8x1xi1> to vector<8x1xi1>
    %305 = vector.broadcast %304 : vector<8x1xi1> to vector<8x32xi1>
    %306 = arith.select %305, %296, %262 : vector<8x32xi1>, vector<8x32xf32>
    %307 = vector.shape_cast %300 : vector<8x1xi1> to vector<8x1xi1>
    %308 = vector.broadcast %307 : vector<8x1xi1> to vector<8x32xi1>
    %309 = arith.select %308, %298, %10 : vector<8x32xi1>, vector<8x32xf32>
    %310 = vector.extract_strided_slice %309 {offsets = [0, 0], sizes = [1, 32], strides = [1, 1]} : vector<8x32xf32> to vector<1x32xf32>
    %311 = vector.extract_strided_slice %309 {offsets = [1, 0], sizes = [1, 32], strides = [1, 1]} : vector<8x32xf32> to vector<1x32xf32>
    %312 = vector.extract_strided_slice %309 {offsets = [2, 0], sizes = [1, 32], strides = [1, 1]} : vector<8x32xf32> to vector<1x32xf32>
    %313 = vector.extract_strided_slice %309 {offsets = [3, 0], sizes = [1, 32], strides = [1, 1]} : vector<8x32xf32> to vector<1x32xf32>
    %314 = vector.extract_strided_slice %309 {offsets = [4, 0], sizes = [1, 32], strides = [1, 1]} : vector<8x32xf32> to vector<1x32xf32>
    %315 = vector.extract_strided_slice %309 {offsets = [5, 0], sizes = [1, 32], strides = [1, 1]} : vector<8x32xf32> to vector<1x32xf32>
    %316 = vector.extract_strided_slice %309 {offsets = [6, 0], sizes = [1, 32], strides = [1, 1]} : vector<8x32xf32> to vector<1x32xf32>
    %317 = vector.extract_strided_slice %309 {offsets = [7, 0], sizes = [1, 32], strides = [1, 1]} : vector<8x32xf32> to vector<1x32xf32>
    %318 = tpu.concatenate %310, %311, %312, %313, %314, %315, %316, %317 in 1 : vector<1x32xf32>, vector<1x32xf32>, vector<1x32xf32>, vector<1x32xf32>, vector<1x32xf32>, vector<1x32xf32>, vector<1x32xf32>, vector<1x32xf32> -> vector<1x256xf32>
    %319 = vector.extract_strided_slice %6 {offsets = [56, 0], sizes = [8, 128], strides = [1, 1]} : vector<64x128xf32> to vector<8x128xf32>
    %cst_33 = arith.constant dense<0.000000e+00> : vector<8x128xf32>
    %320 = tpu.matmul %303, %7, %cst_33 {dimension_numbers = #tpu.dot_dimension_numbers<[1], [0], [0], [1], [0, 0, 1, 1], [], []>} : vector<8x32xf32>, vector<32x128xf32>, vector<8x128xf32> -> vector<8x128xf32>
    %321 = arith.addf %319, %320 : vector<8x128xf32>
    %322 = vector.extract_strided_slice %321 {offsets = [0, 0], sizes = [8, 64], strides = [1, 1]} : vector<8x128xf32> to vector<8x64xf32>
    %323 = arith.negf %322 : vector<8x64xf32>
    %324 = math.exp %323 : vector<8x64xf32>
    %cst_34 = arith.constant 1.000000e+00 : f32
    %325 = vector.broadcast %cst_34 : f32 to vector<8x64xf32>
    %326 = arith.addf %325, %324 : vector<8x64xf32>
    %327 = arith.divf %325, %326 : vector<8x64xf32>
    %328 = vector.extract_strided_slice %321 {offsets = [0, 64], sizes = [8, 32], strides = [1, 1]} : vector<8x128xf32> to vector<8x32xf32>
    %329 = math.tanh %328 : vector<8x32xf32>
    %330 = vector.extract_strided_slice %321 {offsets = [0, 96], sizes = [8, 32], strides = [1, 1]} : vector<8x128xf32> to vector<8x32xf32>
    %331 = arith.negf %330 : vector<8x32xf32>
    %332 = math.exp %331 : vector<8x32xf32>
    %cst_35 = arith.constant 1.000000e+00 : f32
    %333 = vector.broadcast %cst_35 : f32 to vector<8x32xf32>
    %334 = arith.addf %333, %332 : vector<8x32xf32>
    %335 = arith.divf %333, %334 : vector<8x32xf32>
    %336 = vector.extract_strided_slice %327 {offsets = [0, 32], sizes = [8, 32], strides = [1, 1]} : vector<8x64xf32> to vector<8x32xf32>
    %337 = arith.mulf %336, %306 : vector<8x32xf32>
    %338 = vector.extract_strided_slice %327 {offsets = [0, 0], sizes = [8, 32], strides = [1, 1]} : vector<8x64xf32> to vector<8x32xf32>
    %339 = arith.mulf %338, %329 : vector<8x32xf32>
    %340 = arith.addf %337, %339 : vector<8x32xf32>
    %341 = math.tanh %340 : vector<8x32xf32>
    %342 = arith.mulf %335, %341 : vector<8x32xf32>
    %c7_i32 = arith.constant 7 : i32
    %343 = vector.broadcast %c7_i32 : i32 to vector<8x1xi32>
    %344 = arith.cmpi sgt, %0, %343 : vector<8x1xi32>
    %345 = vector.shape_cast %344 : vector<8x1xi1> to vector<8x1xi1>
    %346 = vector.broadcast %345 : vector<8x1xi1> to vector<8x32xi1>
    %347 = arith.select %346, %342, %303 : vector<8x32xi1>, vector<8x32xf32>
    %348 = vector.shape_cast %344 : vector<8x1xi1> to vector<8x1xi1>
    %349 = vector.broadcast %348 : vector<8x1xi1> to vector<8x32xi1>
    %350 = arith.select %349, %340, %306 : vector<8x32xi1>, vector<8x32xf32>
    %351 = vector.shape_cast %344 : vector<8x1xi1> to vector<8x1xi1>
    %352 = vector.broadcast %351 : vector<8x1xi1> to vector<8x32xi1>
    %353 = arith.select %352, %342, %10 : vector<8x32xi1>, vector<8x32xf32>
    %354 = vector.extract_strided_slice %353 {offsets = [0, 0], sizes = [1, 32], strides = [1, 1]} : vector<8x32xf32> to vector<1x32xf32>
    %355 = vector.extract_strided_slice %353 {offsets = [1, 0], sizes = [1, 32], strides = [1, 1]} : vector<8x32xf32> to vector<1x32xf32>
    %356 = vector.extract_strided_slice %353 {offsets = [2, 0], sizes = [1, 32], strides = [1, 1]} : vector<8x32xf32> to vector<1x32xf32>
    %357 = vector.extract_strided_slice %353 {offsets = [3, 0], sizes = [1, 32], strides = [1, 1]} : vector<8x32xf32> to vector<1x32xf32>
    %358 = vector.extract_strided_slice %353 {offsets = [4, 0], sizes = [1, 32], strides = [1, 1]} : vector<8x32xf32> to vector<1x32xf32>
    %359 = vector.extract_strided_slice %353 {offsets = [5, 0], sizes = [1, 32], strides = [1, 1]} : vector<8x32xf32> to vector<1x32xf32>
    %360 = vector.extract_strided_slice %353 {offsets = [6, 0], sizes = [1, 32], strides = [1, 1]} : vector<8x32xf32> to vector<1x32xf32>
    %361 = vector.extract_strided_slice %353 {offsets = [7, 0], sizes = [1, 32], strides = [1, 1]} : vector<8x32xf32> to vector<1x32xf32>
    %362 = tpu.concatenate %354, %355, %356, %357, %358, %359, %360, %361 in 1 : vector<1x32xf32>, vector<1x32xf32>, vector<1x32xf32>, vector<1x32xf32>, vector<1x32xf32>, vector<1x32xf32>, vector<1x32xf32>, vector<1x32xf32> -> vector<1x256xf32>
    %363 = tpu.concatenate %54, %98, %142, %186, %230, %274, %318, %362 in 0 : vector<1x256xf32>, vector<1x256xf32>, vector<1x256xf32>, vector<1x256xf32>, vector<1x256xf32>, vector<1x256xf32>, vector<1x256xf32>, vector<1x256xf32> -> vector<8x256xf32>
    %c0_36 = arith.constant 0 : index
    %c0_37 = arith.constant 0 : index
    %364 = vector.load %arg13[%c0_36, %c0_37] : memref<8x256xf32, #tpu.memory_space<vmem>>, vector<8x256xf32>
    tpu.vector_store %arg13[%c0_36, %c0_37], %363 {strides = array<i32>} : memref<8x256xf32, #tpu.memory_space<vmem>>, vector<8x256xf32>,
    %c0_38 = arith.constant 0 : index
    %c0_39 = arith.constant 0 : index
    %365 = vector.load %arg3[%c0_38, %c0_39] : memref<4x8xf32, #tpu.memory_space<vmem>>, vector<4x8xf32>
    %cst_40 = arith.constant dense<0.000000e+00> : vector<4x32xf32>
    %366 = tpu.matmul %365, %347, %cst_40 {dimension_numbers = #tpu.dot_dimension_numbers<[1], [0], [0], [1], [0, 0, 1, 1], [], []>} : vector<4x8xf32>, vector<8x32xf32>, vector<4x32xf32> -> vector<4x32xf32>
    %cst_41 = arith.constant dense<0.000000e+00> : vector<4x32xf32>
    %367 = tpu.matmul %365, %350, %cst_41 {dimension_numbers = #tpu.dot_dimension_numbers<[1], [0], [0], [1], [0, 0, 1, 1], [], []>} : vector<4x8xf32>, vector<8x32xf32>, vector<4x32xf32> -> vector<4x32xf32>
    %c0_42 = arith.constant 0 : index
    %c0_43 = arith.constant 0 : index
    %368 = vector.load %arg7[%c0_42, %c0_43] : memref<32x128xf32, #tpu.memory_space<vmem>>, vector<32x128xf32>
    %cst_44 = arith.constant dense<0.000000e+00> : vector<4x128xf32>
    %369 = tpu.matmul %366, %368, %cst_44 {dimension_numbers = #tpu.dot_dimension_numbers<[1], [0], [0], [1], [0, 0, 1, 1], [], []>} : vector<4x32xf32>, vector<32x128xf32>, vector<4x128xf32> -> vector<4x128xf32>
    %c0_45 = arith.constant 0 : index
    %c0_46 = arith.constant 0 : index
    %370 = vector.load %arg9[%c0_45, %c0_46] : memref<1x128xf32, #tpu.memory_space<vmem>>, vector<1x128xf32>
    %371 = vector.broadcast %370 : vector<1x128xf32> to vector<4x128xf32>
    %372 = arith.addf %369, %371 : vector<4x128xf32>
    %c0_47 = arith.constant 0 : index
    %c0_48 = arith.constant 0 : index
    %373 = vector.load %arg10[%c0_47, %c0_48] : memref<32x128xf32, #tpu.memory_space<vmem>>, vector<32x128xf32>
    %cst_49 = arith.constant dense<0.000000e+00> : vector<4x128xf32>
    %374 = tpu.matmul %367, %373, %cst_49 {dimension_numbers = #tpu.dot_dimension_numbers<[1], [0], [0], [1], [0, 0, 1, 1], [], []>} : vector<4x32xf32>, vector<32x128xf32>, vector<4x128xf32> -> vector<4x128xf32>
    %c0_50 = arith.constant 0 : index
    %c0_51 = arith.constant 0 : index
    %375 = vector.load %arg12[%c0_50, %c0_51] : memref<1x128xf32, #tpu.memory_space<vmem>>, vector<1x128xf32>
    %376 = vector.broadcast %375 : vector<1x128xf32> to vector<4x128xf32>
    %377 = arith.addf %374, %376 : vector<4x128xf32>
    %c0_52 = arith.constant 0 : index
    %c0_53 = arith.constant 0 : index
    %378 = vector.load %arg8[%c0_52, %c0_53] : memref<32x128xf32, #tpu.memory_space<vmem>>, vector<32x128xf32>
    %c0_54 = arith.constant 0 : index
    %c0_55 = arith.constant 0 : index
    %379 = vector.load %arg11[%c0_54, %c0_55] : memref<32x128xf32, #tpu.memory_space<vmem>>, vector<32x128xf32>
    %c0_56 = arith.constant 0 : index
    %c0_57 = arith.constant 0 : index
    %c0_58 = arith.constant 0 : index
    %380 = vector.load %arg2[%c0_56, %c0_57, %c0_58] : memref<2x2x32xf32, #tpu.memory_space<vmem>>, vector<2x2x32xf32>
    %381 = vector.extract_strided_slice %380 {offsets = [0, 1, 0], sizes = [2, 1, 32], strides = [1, 1, 1]} : vector<2x2x32xf32> to vector<2x1x32xf32>
    %382 = vector.broadcast %381 : vector<2x1x32xf32> to vector<2x2x32xf32>
    %383 = arith.mulf %380, %382 : vector<2x2x32xf32>
    %cst_59 = arith.constant dense<0.000000e+00> : vector<2x2xf32>
    %384 = vector.multi_reduction <add>, %383, %cst_59 [2] : vector<2x2x32xf32> to vector<2x2xf32>
    %385 = arith.mulf %380, %380 : vector<2x2x32xf32>
    %cst_60 = arith.constant dense<0.000000e+00> : vector<2x2xf32>
    %386 = vector.multi_reduction <add>, %385, %cst_60 [2] : vector<2x2x32xf32> to vector<2x2xf32>
    %387 = math.sqrt %386 : vector<2x2xf32>
    %388 = vector.extract_strided_slice %387 {offsets = [0, 1], sizes = [2, 1], strides = [1, 1]} : vector<2x2xf32> to vector<2x1xf32>
    %cst_61 = arith.constant 9.99999993E-9 : f32
    %389 = vector.broadcast %cst_61 : f32 to vector<2x2xf32>
    %390 = arith.maximumf %387, %389 : vector<2x2xf32>
    %cst_62 = arith.constant 9.99999993E-9 : f32
    %391 = vector.broadcast %cst_62 : f32 to vector<2x1xf32>
    %392 = arith.maximumf %388, %391 : vector<2x1xf32>
    %393 = vector.broadcast %392 : vector<2x1xf32> to vector<2x2xf32>
    %394 = arith.mulf %390, %393 : vector<2x2xf32>
    %395 = arith.divf %384, %394 : vector<2x2xf32>
    %cst_63 = arith.constant dense<0xFF800000> : vector<2xf32>
    %396 = vector.multi_reduction <maximumf>, %395, %cst_63 [1] : vector<2x2xf32> to vector<2xf32>
    %397 = vector.shape_cast %396 : vector<2xf32> to vector<2x1xf32>
    %398 = vector.broadcast %397 : vector<2x1xf32> to vector<2x2xf32>
    %399 = arith.subf %395, %398 : vector<2x2xf32>
    %400 = math.exp %399 : vector<2x2xf32>
    %cst_64 = arith.constant dense<0.000000e+00> : vector<2xf32>
    %401 = vector.multi_reduction <add>, %400, %cst_64 [1] : vector<2x2xf32> to vector<2xf32>
    %402 = vector.shape_cast %401 : vector<2xf32> to vector<2x1xf32>
    %403 = vector.broadcast %402 : vector<2x1xf32> to vector<2x2xf32>
    %404 = arith.divf %400, %403 : vector<2x2xf32>
    %cst_65 = arith.constant 0.000000e+00 : f32
    %405 = vector.broadcast %cst_65 : f32 to vector<2x32xf32>
    %cst_66 = arith.constant 0.000000e+00 : f32
    %406 = vector.broadcast %cst_66 : f32 to vector<2x32xf32>
    %cst_67 = arith.constant 0.000000e+00 : f32
    %407 = vector.broadcast %cst_67 : f32 to vector<2x32xf32>
    %cst_68 = arith.constant 0.000000e+00 : f32
    %408 = vector.broadcast %cst_68 : f32 to vector<2x32xf32>
    %cst_69 = arith.constant 0.000000e+00 : f32
    %409 = vector.broadcast %cst_69 : f32 to vector<2x32xf32>
    %cst_70 = arith.constant 0.000000e+00 : f32
    %410 = vector.broadcast %cst_70 : f32 to vector<2x32xf32>
    %411 = vector.extract_strided_slice %404 {offsets = [0, 0], sizes = [2, 1], strides = [1, 1]} : vector<2x2xf32> to vector<2x1xf32>
    %412 = vector.extract_strided_slice %372 {offsets = [0, 0], sizes = [2, 128], strides = [1, 1]} : vector<4x128xf32> to vector<2x128xf32>
    %cst_71 = arith.constant dense<0.000000e+00> : vector<2x128xf32>
    %413 = tpu.matmul %405, %378, %cst_71 {dimension_numbers = #tpu.dot_dimension_numbers<[1], [0], [0], [1], [0, 0, 1, 1], [], []>} : vector<2x32xf32>, vector<32x128xf32>, vector<2x128xf32> -> vector<2x128xf32>
    %414 = arith.addf %412, %413 : vector<2x128xf32>
    %415 = vector.extract_strided_slice %414 {offsets = [0, 0], sizes = [2, 64], strides = [1, 1]} : vector<2x128xf32> to vector<2x64xf32>
    %416 = arith.negf %415 : vector<2x64xf32>
    %417 = math.exp %416 : vector<2x64xf32>
    %cst_72 = arith.constant 1.000000e+00 : f32
    %418 = vector.broadcast %cst_72 : f32 to vector<2x64xf32>
    %419 = arith.addf %418, %417 : vector<2x64xf32>
    %420 = arith.divf %418, %419 : vector<2x64xf32>
    %421 = vector.extract_strided_slice %420 {offsets = [0, 32], sizes = [2, 32], strides = [1, 1]} : vector<2x64xf32> to vector<2x32xf32>
    %422 = arith.mulf %421, %406 : vector<2x32xf32>
    %423 = vector.extract_strided_slice %420 {offsets = [0, 0], sizes = [2, 32], strides = [1, 1]} : vector<2x64xf32> to vector<2x32xf32>
    %424 = vector.extract_strided_slice %414 {offsets = [0, 64], sizes = [2, 32], strides = [1, 1]} : vector<2x128xf32> to vector<2x32xf32>
    %425 = math.tanh %424 : vector<2x32xf32>
    %426 = arith.mulf %423, %425 : vector<2x32xf32>
    %427 = arith.addf %422, %426 : vector<2x32xf32>
    %428 = vector.extract_strided_slice %414 {offsets = [0, 96], sizes = [2, 32], strides = [1, 1]} : vector<2x128xf32> to vector<2x32xf32>
    %429 = arith.negf %428 : vector<2x32xf32>
    %430 = math.exp %429 : vector<2x32xf32>
    %cst_73 = arith.constant 1.000000e+00 : f32
    %431 = vector.broadcast %cst_73 : f32 to vector<2x32xf32>
    %432 = arith.addf %431, %430 : vector<2x32xf32>
    %433 = arith.divf %431, %432 : vector<2x32xf32>
    %434 = math.tanh %427 : vector<2x32xf32>
    %435 = arith.mulf %433, %434 : vector<2x32xf32>
    %436 = vector.broadcast %411 : vector<2x1xf32> to vector<2x32xf32>
    %437 = arith.mulf %435, %436 : vector<2x32xf32>
    %438 = arith.addf %409, %437 : vector<2x32xf32>
    %439 = vector.extract_strided_slice %377 {offsets = [0, 0], sizes = [2, 128], strides = [1, 1]} : vector<4x128xf32> to vector<2x128xf32>
    %cst_74 = arith.constant dense<0.000000e+00> : vector<2x128xf32>
    %440 = tpu.matmul %407, %379, %cst_74 {dimension_numbers = #tpu.dot_dimension_numbers<[1], [0], [0], [1], [0, 0, 1, 1], [], []>} : vector<2x32xf32>, vector<32x128xf32>, vector<2x128xf32> -> vector<2x128xf32>
    %441 = arith.addf %439, %440 : vector<2x128xf32>
    %442 = vector.extract_strided_slice %441 {offsets = [0, 0], sizes = [2, 64], strides = [1, 1]} : vector<2x128xf32> to vector<2x64xf32>
    %443 = arith.negf %442 : vector<2x64xf32>
    %444 = math.exp %443 : vector<2x64xf32>
    %cst_75 = arith.constant 1.000000e+00 : f32
    %445 = vector.broadcast %cst_75 : f32 to vector<2x64xf32>
    %446 = arith.addf %445, %444 : vector<2x64xf32>
    %447 = arith.divf %445, %446 : vector<2x64xf32>
    %448 = vector.extract_strided_slice %447 {offsets = [0, 32], sizes = [2, 32], strides = [1, 1]} : vector<2x64xf32> to vector<2x32xf32>
    %449 = arith.mulf %448, %408 : vector<2x32xf32>
    %450 = vector.extract_strided_slice %447 {offsets = [0, 0], sizes = [2, 32], strides = [1, 1]} : vector<2x64xf32> to vector<2x32xf32>
    %451 = vector.extract_strided_slice %441 {offsets = [0, 64], sizes = [2, 32], strides = [1, 1]} : vector<2x128xf32> to vector<2x32xf32>
    %452 = math.tanh %451 : vector<2x32xf32>
    %453 = arith.mulf %450, %452 : vector<2x32xf32>
    %454 = arith.addf %449, %453 : vector<2x32xf32>
    %455 = vector.extract_strided_slice %441 {offsets = [0, 96], sizes = [2, 32], strides = [1, 1]} : vector<2x128xf32> to vector<2x32xf32>
    %456 = arith.negf %455 : vector<2x32xf32>
    %457 = math.exp %456 : vector<2x32xf32>
    %cst_76 = arith.constant 1.000000e+00 : f32
    %458 = vector.broadcast %cst_76 : f32 to vector<2x32xf32>
    %459 = arith.addf %458, %457 : vector<2x32xf32>
    %460 = arith.divf %458, %459 : vector<2x32xf32>
    %461 = math.tanh %454 : vector<2x32xf32>
    %462 = arith.mulf %460, %461 : vector<2x32xf32>
    %463 = vector.broadcast %411 : vector<2x1xf32> to vector<2x32xf32>
    %464 = arith.mulf %462, %463 : vector<2x32xf32>
    %465 = arith.addf %410, %464 : vector<2x32xf32>
    %466 = vector.extract_strided_slice %404 {offsets = [0, 1], sizes = [2, 1], strides = [1, 1]} : vector<2x2xf32> to vector<2x1xf32>
    %467 = vector.extract_strided_slice %372 {offsets = [2, 0], sizes = [2, 128], strides = [1, 1]} : vector<4x128xf32> to vector<2x128xf32>
    %cst_77 = arith.constant dense<0.000000e+00> : vector<2x128xf32>
    %468 = tpu.matmul %435, %378, %cst_77 {dimension_numbers = #tpu.dot_dimension_numbers<[1], [0], [0], [1], [0, 0, 1, 1], [], []>} : vector<2x32xf32>, vector<32x128xf32>, vector<2x128xf32> -> vector<2x128xf32>
    %469 = arith.addf %467, %468 : vector<2x128xf32>
    %470 = vector.extract_strided_slice %469 {offsets = [0, 0], sizes = [2, 64], strides = [1, 1]} : vector<2x128xf32> to vector<2x64xf32>
    %471 = arith.negf %470 : vector<2x64xf32>
    %472 = math.exp %471 : vector<2x64xf32>
    %cst_78 = arith.constant 1.000000e+00 : f32
    %473 = vector.broadcast %cst_78 : f32 to vector<2x64xf32>
    %474 = arith.addf %473, %472 : vector<2x64xf32>
    %475 = arith.divf %473, %474 : vector<2x64xf32>
    %476 = vector.extract_strided_slice %475 {offsets = [0, 32], sizes = [2, 32], strides = [1, 1]} : vector<2x64xf32> to vector<2x32xf32>
    %477 = arith.mulf %476, %427 : vector<2x32xf32>
    %478 = vector.extract_strided_slice %475 {offsets = [0, 0], sizes = [2, 32], strides = [1, 1]} : vector<2x64xf32> to vector<2x32xf32>
    %479 = vector.extract_strided_slice %469 {offsets = [0, 64], sizes = [2, 32], strides = [1, 1]} : vector<2x128xf32> to vector<2x32xf32>
    %480 = math.tanh %479 : vector<2x32xf32>
    %481 = arith.mulf %478, %480 : vector<2x32xf32>
    %482 = arith.addf %477, %481 : vector<2x32xf32>
    %483 = vector.extract_strided_slice %469 {offsets = [0, 96], sizes = [2, 32], strides = [1, 1]} : vector<2x128xf32> to vector<2x32xf32>
    %484 = arith.negf %483 : vector<2x32xf32>
    %485 = math.exp %484 : vector<2x32xf32>
    %cst_79 = arith.constant 1.000000e+00 : f32
    %486 = vector.broadcast %cst_79 : f32 to vector<2x32xf32>
    %487 = arith.addf %486, %485 : vector<2x32xf32>
    %488 = arith.divf %486, %487 : vector<2x32xf32>
    %489 = math.tanh %482 : vector<2x32xf32>
    %490 = arith.mulf %488, %489 : vector<2x32xf32>
    %491 = vector.broadcast %466 : vector<2x1xf32> to vector<2x32xf32>
    %492 = arith.mulf %490, %491 : vector<2x32xf32>
    %493 = arith.addf %438, %492 : vector<2x32xf32>
    %494 = vector.extract_strided_slice %377 {offsets = [2, 0], sizes = [2, 128], strides = [1, 1]} : vector<4x128xf32> to vector<2x128xf32>
    %cst_80 = arith.constant dense<0.000000e+00> : vector<2x128xf32>
    %495 = tpu.matmul %462, %379, %cst_80 {dimension_numbers = #tpu.dot_dimension_numbers<[1], [0], [0], [1], [0, 0, 1, 1], [], []>} : vector<2x32xf32>, vector<32x128xf32>, vector<2x128xf32> -> vector<2x128xf32>
    %496 = arith.addf %494, %495 : vector<2x128xf32>
    %497 = vector.extract_strided_slice %496 {offsets = [0, 0], sizes = [2, 64], strides = [1, 1]} : vector<2x128xf32> to vector<2x64xf32>
    %498 = arith.negf %497 : vector<2x64xf32>
    %499 = math.exp %498 : vector<2x64xf32>
    %cst_81 = arith.constant 1.000000e+00 : f32
    %500 = vector.broadcast %cst_81 : f32 to vector<2x64xf32>
    %501 = arith.addf %500, %499 : vector<2x64xf32>
    %502 = arith.divf %500, %501 : vector<2x64xf32>
    %503 = vector.extract_strided_slice %502 {offsets = [0, 32], sizes = [2, 32], strides = [1, 1]} : vector<2x64xf32> to vector<2x32xf32>
    %504 = arith.mulf %503, %454 : vector<2x32xf32>
    %505 = vector.extract_strided_slice %502 {offsets = [0, 0], sizes = [2, 32], strides = [1, 1]} : vector<2x64xf32> to vector<2x32xf32>
    %506 = vector.extract_strided_slice %496 {offsets = [0, 64], sizes = [2, 32], strides = [1, 1]} : vector<2x128xf32> to vector<2x32xf32>
    %507 = math.tanh %506 : vector<2x32xf32>
    %508 = arith.mulf %505, %507 : vector<2x32xf32>
    %509 = arith.addf %504, %508 : vector<2x32xf32>
    %510 = vector.extract_strided_slice %496 {offsets = [0, 96], sizes = [2, 32], strides = [1, 1]} : vector<2x128xf32> to vector<2x32xf32>
    %511 = arith.negf %510 : vector<2x32xf32>
    %512 = math.exp %511 : vector<2x32xf32>
    %cst_82 = arith.constant 1.000000e+00 : f32
    %513 = vector.broadcast %cst_82 : f32 to vector<2x32xf32>
    %514 = arith.addf %513, %512 : vector<2x32xf32>
    %515 = arith.divf %513, %514 : vector<2x32xf32>
    %516 = math.tanh %509 : vector<2x32xf32>
    %517 = arith.mulf %515, %516 : vector<2x32xf32>
    %518 = vector.broadcast %466 : vector<2x1xf32> to vector<2x32xf32>
    %519 = arith.mulf %517, %518 : vector<2x32xf32>
    %520 = arith.addf %465, %519 : vector<2x32xf32>
    %c0_83 = arith.constant 0 : index
    %c0_84 = arith.constant 0 : index
    %521 = vector.load %arg14[%c0_83, %c0_84] : memref<2x32xf32, #tpu.memory_space<vmem>>, vector<2x32xf32>
    tpu.vector_store %arg14[%c0_83, %c0_84], %493 {strides = array<i32>} : memref<2x32xf32, #tpu.memory_space<vmem>>, vector<2x32xf32>,
    %c0_85 = arith.constant 0 : index
    %c0_86 = arith.constant 0 : index
    %522 = vector.load %arg15[%c0_85, %c0_86] : memref<2x32xf32, #tpu.memory_space<vmem>>, vector<2x32xf32>
    tpu.vector_store %arg15[%c0_85, %c0_86], %520 {strides = array<i32>} : memref<2x32xf32, #tpu.memory_space<vmem>>, vector<2x32xf32>,
    return
  }
}

</mosaic_0001>

<llo_original>
// kernel: tpu_custom_call.1
$region0: #{tpu_custom_call.1}
  #allocation0 [shape = 'u32[]', space=smem, size = 0x4, offset = 0x4, fixed_abs, tag = 'smem constant byte address 0x4 - core index']
  #allocation1 [shape = 'u32[144,128]{1,0:T(1,128)}', space=vmem, size = 0x12000, scoped, tag = 'internal scratch']
  %s0 = inlined_call_operand.vmem [shape: s32[8,1], index: 0, kind: input, shape index: {}]
  %s1 = inlined_call_operand.vmem [shape: f32[64,32], index: 1, kind: input, shape index: {}]
  %s2 = inlined_call_operand.hbm [shape: f32[2,2,32], index: 2, kind: input, shape index: {}]
  %s3 = inlined_call_operand.hbm [shape: f32[4,8], index: 3, kind: input, shape index: {}]
  %s4 = inlined_call_operand.vmem [shape: f32[32,128], index: 4, kind: input, shape index: {}]
  %s5 = inlined_call_operand.vmem [shape: f32[32,128], index: 5, kind: input, shape index: {}]
  %s6 = inlined_call_operand.vmem [shape: f32[1,128], index: 6, kind: input, shape index: {}]
  %s7 = inlined_call_operand.vmem [shape: f32[32,128], index: 7, kind: input, shape index: {}]
  %s8 = inlined_call_operand.vmem [shape: f32[32,128], index: 8, kind: input, shape index: {}]
  %s9 = inlined_call_operand.vmem [shape: f32[1,128], index: 9, kind: input, shape index: {}]
  %s10 = inlined_call_operand.hbm [shape: f32[32,128], index: 10, kind: input, shape index: {}]
  %s11 = inlined_call_operand.hbm [shape: f32[32,128], index: 11, kind: input, shape index: {}]
  %s12 = inlined_call_operand.vmem [shape: f32[1,128], index: 12, kind: input, shape index: {}]
  %s13 = inlined_call_operand.hbm [shape: f32[8,256], index: 13, kind: output, shape index: {0}]
  %s14 = inlined_call_operand.hbm [shape: f32[2,32], index: 14, kind: output, shape index: {1}]
  %s15 = inlined_call_operand.hbm [shape: f32[2,32], index: 15, kind: output, shape index: {2}]
  %16 = xla_tuple %s13, %s14, %s15
  %s17 = sld [smem:[#allocation0]]
  $region94: #{tpu_custom_call.1} parent=0
    _
  %s19 = ssub.s32 1, %s17
  %s20 = scalar_select 0, %s19, %s17
  $region1: #{tpu_custom_call.1} parent=0
    #allocation2 [shape = 'u8[2048]{0}', space=vmem, size = 0x800, scoped, tag = 'input window, operand 2, single buffered']
    #allocation3 [shape = 's32[1]{0}', space=sflag, size = 0x4, scoped, tag = 'scoped memory for tpu_custom_call.1']
    #allocation4 [shape = 's32[1]{0}', space=sflag, size = 0x4, scoped, tag = 'scoped memory for tpu_custom_call.1']
    #allocation5 [shape = 'u8[2048]{0}', space=vmem, size = 0x800, scoped, tag = 'input window, operand 3, single buffered']
    #allocation6 [shape = 's32[1]{0}', space=sflag, size = 0x4, scoped, tag = 'scoped memory for tpu_custom_call.1']
    #allocation7 [shape = 'u8[16384]{0}', space=vmem, size = 0x4000, scoped, tag = 'input window, operand 10, single buffered']
    #allocation8 [shape = 'u8[16384]{0}', space=vmem, size = 0x4000, scoped, tag = 'input window, operand 11, single buffered']
    #allocation9 [shape = 's32[1]{0}', space=sflag, size = 0x4, scoped, tag = 'scoped memory for tpu_custom_call.1']
    #allocation10 [shape = 'u8[8192]{0}', space=vmem, size = 0x2000, scoped, tag = 'output window, operand 0, single buffered']
    #allocation11 [shape = 'u8[1024]{0}', space=vmem, size = 0x400, scoped, tag = 'output window, operand 1, single buffered']
    #allocation12 [shape = 's32[1]{0}', space=sflag, size = 0x4, scoped, tag = 'scoped memory for tpu_custom_call.1']
    #allocation13 [shape = 'u8[1024]{0}', space=vmem, size = 0x400, scoped, tag = 'output window, operand 2, single buffered']
    %21 = vsyncpa [#allocation3], 0
    %22 = vsyncpa [#allocation6], 0
    %23 = vsyncpa [#allocation9], 0
    %24 = vsyncpa [#allocation4], 0
    %25 = vsyncpa [#allocation12], 0
    // Predicated region
    $region2: #{tpu_custom_call.1} parent=1 // pred_check
      _
    $region3: #{tpu_custom_call.1} parent=1 // pred_check_branch
      %27 = sbr.rel (0) target = $region5
    $region4: #{tpu_custom_call.1} parent=1 // pred_region
      _
    $region5: #{tpu_custom_call.1} parent=1 // pred_fallthru
      _
    // Predicated region
    $region6: #{tpu_custom_call.1} parent=1 // pred_check
      _
    $region7: #{tpu_custom_call.1} parent=1 // pred_check_branch
      %29 = sbr.rel (0) target = $region9
    $region8: #{tpu_custom_call.1} parent=1 // pred_region
      _
    $region9: #{tpu_custom_call.1} parent=1 // pred_fallthru
      _
    // Predicated region
    $region10: #{tpu_custom_call.1} parent=1 // pred_check
      _
    $region11: #{tpu_custom_call.1} parent=1 // pred_check_branch
      %31 = sbr.rel (0) target = $region13
    $region12: #{tpu_custom_call.1} parent=1 // pred_region
      %s33 = ssub.s32 64, 64
      %34 = vsyncadd [#allocation3], %s33
      %s35 = sshll.u32 [#allocation2], 4
      %s36 = int_to_ptr.vmem [resolvable:$true] %s35
      %41 = dma.hbm_to_vmem [thread:$0]  %s2, 64, %s36, [#allocation3], 32, 32, 2
    $region13: #{tpu_custom_call.1} parent=1 // pred_fallthru
      _
    // Predicated region
    $region14: #{tpu_custom_call.1} parent=1 // pred_check
      _
    $region15: #{tpu_custom_call.1} parent=1 // pred_check_branch
      %43 = sbr.rel (0) target = $region17
    $region16: #{tpu_custom_call.1} parent=1 // pred_region
      %s45 = ssub.s32 64, 64
      %46 = vsyncadd [#allocation6], %s45
      %s48 = sshll.u32 [#allocation5], 4
      %s49 = int_to_ptr.vmem [resolvable:$true] %s48
      %51 = dma.hbm_to_vmem [thread:$0]  %s3, 64, %s49, [#allocation6]
    $region17: #{tpu_custom_call.1} parent=1 // pred_fallthru
      _
    // Predicated region
    $region18: #{tpu_custom_call.1} parent=1 // pred_check
      _
    $region19: #{tpu_custom_call.1} parent=1 // pred_check_branch
      %53 = sbr.rel (0) target = $region21
    $region20: #{tpu_custom_call.1} parent=1 // pred_region
      _
    $region21: #{tpu_custom_call.1} parent=1 // pred_fallthru
      _
    // Predicated region
    $region22: #{tpu_custom_call.1} parent=1 // pred_check
      _
    $region23: #{tpu_custom_call.1} parent=1 // pred_check_branch
      %55 = sbr.rel (0) target = $region25
    $region24: #{tpu_custom_call.1} parent=1 // pred_region
      _
    $region25: #{tpu_custom_call.1} parent=1 // pred_fallthru
      _
    // Predicated region
    $region26: #{tpu_custom_call.1} parent=1 // pred_check
      _
    $region27: #{tpu_custom_call.1} parent=1 // pred_check_branch
      %57 = sbr.rel (0) target = $region29
    $region28: #{tpu_custom_call.1} parent=1 // pred_region
      _
    $region29: #{tpu_custom_call.1} parent=1 // pred_fallthru
      _
    // Predicated region
    $region30: #{tpu_custom_call.1} parent=1 // pred_check
      _
    $region31: #{tpu_custom_call.1} parent=1 // pred_check_branch
      %59 = sbr.rel (0) target = $region33
    $region32: #{tpu_custom_call.1} parent=1 // pred_region
      _
    $region33: #{tpu_custom_call.1} parent=1 // pred_fallthru
      _
    // Predicated region
    $region34: #{tpu_custom_call.1} parent=1 // pred_check
      _
    $region35: #{tpu_custom_call.1} parent=1 // pred_check_branch
      %61 = sbr.rel (0) target = $region37
    $region36: #{tpu_custom_call.1} parent=1 // pred_region
      _
    $region37: #{tpu_custom_call.1} parent=1 // pred_fallthru
      _
    // Predicated region
    $region38: #{tpu_custom_call.1} parent=1 // pred_check
      _
    $region39: #{tpu_custom_call.1} parent=1 // pred_check_branch
      %63 = sbr.rel (0) target = $region41
    $region40: #{tpu_custom_call.1} parent=1 // pred_region
      _
    $region41: #{tpu_custom_call.1} parent=1 // pred_fallthru
      _
    // Predicated region
    $region42: #{tpu_custom_call.1} parent=1 // pred_check
      _
    $region43: #{tpu_custom_call.1} parent=1 // pred_check_branch
      %65 = sbr.rel (0) target = $region45
    $region44: #{tpu_custom_call.1} parent=1 // pred_region
      %s67 = ssub.s32 512, 512
      %68 = vsyncadd [#allocation6], %s67
      %s69 = sshll.u32 [#allocation7], 4
      %s70 = int_to_ptr.vmem [resolvable:$true] %s69
      %75 = dma.hbm_to_vmem [thread:$0]  %s10, 512, %s70, [#allocation6], 128, 128, 8
    $region45: #{tpu_custom_call.1} parent=1 // pred_fallthru
      _
    // Predicated region
    $region46: #{tpu_custom_call.1} parent=1 // pred_check
      _
    $region47: #{tpu_custom_call.1} parent=1 // pred_check_branch
      %77 = sbr.rel (0) target = $region49
    $region48: #{tpu_custom_call.1} parent=1 // pred_region
      %s79 = ssub.s32 512, 512
      %80 = vsyncadd [#allocation9], %s79
      %s81 = sshll.u32 [#allocation8], 4
      %s82 = int_to_ptr.vmem [resolvable:$true] %s81
      %87 = dma.hbm_to_vmem [thread:$0]  %s11, 512, %s82, [#allocation9], 128, 128, 8
    $region49: #{tpu_custom_call.1} parent=1 // pred_fallthru
      _
    // Predicated region
    $region50: #{tpu_custom_call.1} parent=1 // pred_check
      _
    $region51: #{tpu_custom_call.1} parent=1 // pred_check_branch
      %89 = sbr.rel (0) target = $region53
    $region52: #{tpu_custom_call.1} parent=1 // pred_region
      _
    $region53: #{tpu_custom_call.1} parent=1 // pred_fallthru
      _
    // Predicated region
    $region54: #{tpu_custom_call.1} parent=1 // pred_check
      _
    $region55: #{tpu_custom_call.1} parent=1 // pred_check_branch
      %91 = sbr.rel (0) target = $region57
    $region56: #{tpu_custom_call.1} parent=1 // pred_region
      %92 = dma.done [#allocation3], 64
    $region57: #{tpu_custom_call.1} parent=1 // pred_fallthru
      _
    // Predicated region
    $region58: #{tpu_custom_call.1} parent=1 // pred_check
      _
    $region59: #{tpu_custom_call.1} parent=1 // pred_check_branch
      %94 = sbr.rel (0) target = $region61
    $region60: #{tpu_custom_call.1} parent=1 // pred_region
      %95 = dma.done [#allocation6], 64
    $region61: #{tpu_custom_call.1} parent=1 // pred_fallthru
      _
    // Predicated region
    $region62: #{tpu_custom_call.1} parent=1 // pred_check
      _
    $region63: #{tpu_custom_call.1} parent=1 // pred_check_branch
      %97 = sbr.rel (0) target = $region65
    $region64: #{tpu_custom_call.1} parent=1 // pred_region
      %98 = dma.done [#allocation6], 512
    $region65: #{tpu_custom_call.1} parent=1 // pred_fallthru
      _
    // Predicated region
    $region66: #{tpu_custom_call.1} parent=1 // pred_check
      _
    $region67: #{tpu_custom_call.1} parent=1 // pred_check_branch
      %100 = sbr.rel (0) target = $region69
    $region68: #{tpu_custom_call.1} parent=1 // pred_region
      %101 = dma.done [#allocation9], 512
    $region69: #{tpu_custom_call.1} parent=1 // pred_fallthru
      _
    %v102 = vld [vmem:[%s0] sm:$0xff]
    %v103 = vld [vmem:[%s1] sm:$0xff]
    %v104 = vld [vmem:[%s1 + $0x8] sm:$0xff]
    %v105 = vld [vmem:[%s1 + $0x10] sm:$0xff]
    %v106 = vld [vmem:[%s1 + $0x18] sm:$0xff]
    %v107 = vld [vmem:[%s1 + $0x20] sm:$0xff]
    %v108 = vld [vmem:[%s1 + $0x28] sm:$0xff]
    %v109 = vld [vmem:[%s1 + $0x30] sm:$0xff]
    %v110 = vld [vmem:[%s1 + $0x38] sm:$0xff]
    %v111 = vld [vmem:[%s4] sm:$0xff]
    %v112 = vld [vmem:[%s4 + $0x8] sm:$0xff]
    %v113 = vld [vmem:[%s4 + $0x10] sm:$0xff]
    %v114 = vld [vmem:[%s4 + $0x18] sm:$0xff]
    %v115 = vld [vmem:[%s6] sm:$0x1]
    %v117 = vlaneseq
    %v118 = vshrl.u32 %v117, 7
    %v119 = vsub.s32 0, %v118
    %v120 = vrot.slane %v115, %v119
    %vm122 = vcmask 261120
    %v124 = vsel %vm122, %v103, 0
    %v127 = vsel %vm122, %v104, 0
    %v130 = vsel %vm122, %v105, 0
    %v133 = vsel %vm122, %v106, 0
    %v136 = vsel %vm122, %v107, 0
    %v139 = vsel %vm122, %v108, 0
    %v142 = vsel %vm122, %v109, 0
    %v145 = vsel %vm122, %v110, 0
    %147 = vmatprep.subr.mxu0 0.0
    %148 = vmatpush1.msra.mxu0 %v111
    %149 = vmatprep.subr.mxu0 0.0
    %150 = vmatpush1.msra.mxu0 %v112
    %151 = vmatprep.subr.mxu0 0.0
    %152 = vmatpush1.msra.mxu0 %v113
    %153 = vmatprep.subr.mxu0 0.0
    %154 = vmatpush1.msra.mxu0 %v114
    %155 = vmatprep.subr.mxu0 0.0
    %156 = vmatpush1.msra.mxu0 0.0
    %157 = vmatprep.subr.mxu0 0.0
    %158 = vmatpush1.msra.mxu0 0.0
    %159 = vmatprep.subr.mxu0 0.0
    %160 = vmatpush1.msra.mxu0 0.0
    %161 = vmatprep.subr.mxu0 0.0
    %162 = vmatpush1.msra.mxu0 0.0
    %163 = vmatprep.subr.mxu0 0.0
    %164 = vmatpush1.msra.mxu0 0.0
    %165 = vmatprep.subr.mxu0 0.0
    %166 = vmatpush1.msra.mxu0 0.0
    %167 = vmatprep.subr.mxu0 0.0
    %168 = vmatpush1.msra.mxu0 0.0
    %169 = vmatprep.subr.mxu0 0.0
    %170 = vmatpush1.msra.mxu0 0.0
    %171 = vmatprep.subr.mxu0 0.0
    %172 = vmatpush1.msra.mxu0 0.0
    %173 = vmatprep.subr.mxu0 0.0
    %174 = vmatpush1.msra.mxu0 0.0
    %175 = vmatprep.subr.mxu0 0.0
    %176 = vmatpush1.msra.mxu0 0.0
    %177 = vmatprep.subr.mxu0 0.0
    %178 = vmatpush1.msra.mxu0 0.0
    %179 = vmatprep.subr.mxu0 0.0
    %180 = vmatpush1.msra.mxu0 0.0
    %181 = vmatprep.subr.mxu0 0.0
    %182 = vmatpush1.msra.mxu0 0.0
    %183 = vmatprep.subr.mxu0 0.0
    %184 = vmatpush1.msra.mxu0 0.0
    %185 = vmatprep.subr.mxu0 0.0
    %186 = vmatpush1.msra.mxu0 0.0
    %187 = vmatprep.subr.mxu0 0.0
    %188 = vmatpush1.msra.mxu0 0.0
    %189 = vmatprep.subr.mxu0 0.0
    %190 = vmatpush1.msra.mxu0 0.0
    %191 = vmatprep.subr.mxu0 0.0
    %192 = vmatpush1.msra.mxu0 0.0
    %193 = vmatprep.subr.mxu0 0.0
    %194 = vmatpush1.msra.mxu0 0.0
    %195 = vmatprep.subr.mxu0 0.0
    %196 = vmatpush1.msra.mxu0 0.0
    %197 = vmatprep.subr.mxu0 0.0
    %198 = vmatpush1.msra.mxu0 0.0
    %199 = vmatprep.subr.mxu0 0.0
    %200 = vmatpush1.msra.mxu0 0.0
    %201 = vmatprep.subr.mxu0 0.0
    %202 = vmatpush1.msra.mxu0 0.0
    %203 = vmatprep.subr.mxu0 0.0
    %204 = vmatpush1.msra.mxu0 0.0
    %205 = vmatprep.subr.mxu0 0.0
    %206 = vmatpush1.msra.mxu0 0.0
    %207 = vmatprep.subr.mxu0 0.0
    %208 = vmatpush1.msra.mxu0 0.0
    %209 = vmatprep.subr.mxu0 0.0
    %210 = vmatpush1.msra.mxu0 0.0
    %211 = vmatprep.mubr.f32.mxu0 0.0
    %212 = vmatmul.mubr.f32.gmra.mrb[0].mxu0 %v124
    %v213 = vpop.f32.mrb[0].mxu0
    %v214 = vadd.f32 %v120, %v213
    %v215 = vpop.f32.mrb[0].mxu0
    %216 = vmatprep.mubr.f32.mxu0 0.0
    %217 = vmatmul.mubr.f32.gmra.mrb[0].mxu0 %v127
    %v218 = vpop.f32.mrb[0].mxu0
    %v219 = vadd.f32 %v120, %v218
    %v220 = vpop.f32.mrb[0].mxu0
    %221 = vmatprep.mubr.f32.mxu0 0.0
    %222 = vmatmul.mubr.f32.gmra.mrb[0].mxu0 %v130
    %v223 = vpop.f32.mrb[0].mxu0
    %v224 = vadd.f32 %v120, %v223
    %v225 = vpop.f32.mrb[0].mxu0
    %226 = vmatprep.mubr.f32.mxu0 0.0
    %227 = vmatmul.mubr.f32.gmra.mrb[0].mxu0 %v133
    %v228 = vpop.f32.mrb[0].mxu0
    %v229 = vadd.f32 %v120, %v228
    %v230 = vpop.f32.mrb[0].mxu0
    %231 = vmatprep.mubr.f32.mxu0 0.0
    %232 = vmatmul.mubr.f32.gmra.mrb[0].mxu0 %v136
    %v233 = vpop.f32.mrb[0].mxu0
    %v234 = vadd.f32 %v120, %v233
    %v235 = vpop.f32.mrb[0].mxu0
    %236 = vmatprep.mubr.f32.mxu0 0.0
    %237 = vmatmul.mubr.f32.gmra.mrb[0].mxu0 %v139
    %v238 = vpop.f32.mrb[0].mxu0
    %v239 = vadd.f32 %v120, %v238
    %v240 = vpop.f32.mrb[0].mxu0
    %241 = vmatprep.mubr.f32.mxu0 0.0
    %242 = vmatmul.mubr.f32.gmra.mrb[0].mxu0 %v142
    %v243 = vpop.f32.mrb[0].mxu0
    %v244 = vadd.f32 %v120, %v243
    %v245 = vpop.f32.mrb[0].mxu0
    %246 = vmatprep.mubr.f32.mxu0 0.0
    %247 = vmatmul.mubr.f32.gmra.mrb[0].mxu0 %v145
    %v248 = vpop.f32.mrb[0].mxu0
    %v249 = vadd.f32 %v120, %v248
    %v250 = vpop.f32.mrb[0].mxu0
    %251 = vdwg.mxu0
    %v252 = vld [vmem:[%s5] sm:$0xff]
    %v253 = vld [vmem:[%s5 + $0x8] sm:$0xff]
    %v254 = vld [vmem:[%s5 + $0x10] sm:$0xff]
    %v255 = vld [vmem:[%s5 + $0x18] sm:$0xff]
    %v257 = vsel %vm122, 0.0, 0
    %259 = vmatprep.subr.mxu0 0.0
    %260 = vmatpush1.msra.mxu0 %v252
    %261 = vmatprep.subr.mxu0 0.0
    %262 = vmatpush1.msra.mxu0 %v253
    %263 = vmatprep.subr.mxu0 0.0
    %264 = vmatpush1.msra.mxu0 %v254
    %265 = vmatprep.subr.mxu0 0.0
    %266 = vmatpush1.msra.mxu0 %v255
    %267 = vmatprep.subr.mxu0 0.0
    %268 = vmatpush1.msra.mxu0 0.0
    %269 = vmatprep.subr.mxu0 0.0
    %270 = vmatpush1.msra.mxu0 0.0
    %271 = vmatprep.subr.mxu0 0.0
    %272 = vmatpush1.msra.mxu0 0.0
    %273 = vmatprep.subr.mxu0 0.0
    %274 = vmatpush1.msra.mxu0 0.0
    %275 = vmatprep.subr.mxu0 0.0
    %276 = vmatpush1.msra.mxu0 0.0
    %277 = vmatprep.subr.mxu0 0.0
    %278 = vmatpush1.msra.mxu0 0.0
    %279 = vmatprep.subr.mxu0 0.0
    %280 = vmatpush1.msra.mxu0 0.0
    %281 = vmatprep.subr.mxu0 0.0
    %282 = vmatpush1.msra.mxu0 0.0
    %283 = vmatprep.subr.mxu0 0.0
    %284 = vmatpush1.msra.mxu0 0.0
    %285 = vmatprep.subr.mxu0 0.0
    %286 = vmatpush1.msra.mxu0 0.0
    %287 = vmatprep.subr.mxu0 0.0
    %288 = vmatpush1.msra.mxu0 0.0
    %289 = vmatprep.subr.mxu0 0.0
    %290 = vmatpush1.msra.mxu0 0.0
    %291 = vmatprep.subr.mxu0 0.0
    %292 = vmatpush1.msra.mxu0 0.0
    %293 = vmatprep.subr.mxu0 0.0
    %294 = vmatpush1.msra.mxu0 0.0
    %295 = vmatprep.subr.mxu0 0.0
    %296 = vmatpush1.msra.mxu0 0.0
    %297 = vmatprep.subr.mxu0 0.0
    %298 = vmatpush1.msra.mxu0 0.0
    %299 = vmatprep.subr.mxu0 0.0
    %300 = vmatpush1.msra.mxu0 0.0
    %301 = vmatprep.subr.mxu0 0.0
    %302 = vmatpush1.msra.mxu0 0.0
    %303 = vmatprep.subr.mxu0 0.0
    %304 = vmatpush1.msra.mxu0 0.0
    %305 = vmatprep.subr.mxu0 0.0
    %306 = vmatpush1.msra.mxu0 0.0
    %307 = vmatprep.subr.mxu0 0.0
    %308 = vmatpush1.msra.mxu0 0.0
    %309 = vmatprep.subr.mxu0 0.0
    %310 = vmatpush1.msra.mxu0 0.0
    %311 = vmatprep.subr.mxu0 0.0
    %312 = vmatpush1.msra.mxu0 0.0
    %313 = vmatprep.subr.mxu0 0.0
    %314 = vmatpush1.msra.mxu0 0.0
    %315 = vmatprep.subr.mxu0 0.0
    %316 = vmatpush1.msra.mxu0 0.0
    %317 = vmatprep.subr.mxu0 0.0
    %318 = vmatpush1.msra.mxu0 0.0
    %319 = vmatprep.subr.mxu0 0.0
    %320 = vmatpush1.msra.mxu0 0.0
    %321 = vmatprep.subr.mxu0 0.0
    %322 = vmatpush1.msra.mxu0 0.0
    %323 = vmatprep.mubr.f32.mxu0 0.0
    %324 = vmatmul.mubr.f32.gmra.mrb[0].mxu0 %v257
    %v325 = vpop.f32.mrb[0].mxu0
    %v326 = vadd.f32 0.0, %v325
    %v327 = vpop.f32.mrb[0].mxu0
    %328 = vdwg.mxu0
    %v329 = vadd.f32 %v214, %v326
    %v330 = vxor.u32 %v329, 2147483648
    %v331 = vmul.f32 %v330, 1.442695
    %v332 = vpow.pop %v331
    %v333 = vadd.f32 %v332, 1.0
    %v334 = vrcp.pop %v333
    %v335 = vmul.f32 1.0, %v334
    %v336 = vtanh.pop %v329
    %v337 = vmul.f32 %v335, 0.0
    %339 = vrot.lane.b32.xlu0 %v336, 64
    %v340 = vpop.permute.xlu0 %339
    %v342 = vmul.f32 %v335, %v340
    %344 = vrot.lane.b32.xlu0 %v342, 32
    %v345 = vpop.permute.xlu0 %344
    %v347 = vadd.f32 %v337, %v345
    %v348 = vtanh.pop %v347
    %350 = vrot.lane.b32.xlu0 %v348, 64
    %v351 = vpop.permute.xlu0 %350
    %v353 = vmul.f32 %v335, %v351
    %vm354 = vcmp.gt.s32.totalorder %v102, 0
    %v355 = vsel %vm354, 1, 0
    %356 = vset.pattern.permute.xlu0 0
    %357 = vperm.xlu0 %356, %v355
    %v358 = vpop.permute.xlu0 %357
    %vm359 = vcmp.eq.s32.totalorder %v358, 1
    %v360 = vsel %vm359, %v353, 0.0
    %v361 = vsel %vm359, %v347, 0.0
    %363 = vrot.lane.b32.xlu0 %v360, 32
    %v364 = vpop.permute.xlu0 %363
    %v366 = vrot.slane %v360, 1
    %367 = vrot.lane.b32.xlu0 %v366, 64
    %v368 = vpop.permute.xlu0 %367
    %v370 = vrot.slane %v360, 2
    %371 = vrot.lane.b32.xlu0 %v370, 96
    %v372 = vpop.permute.xlu0 %371
    %v374 = vrot.slane %v360, 3
    %v376 = vrot.slane %v360, 4
    %377 = vrot.lane.b32.xlu0 %v376, 32
    %v378 = vpop.permute.xlu0 %377
    %v380 = vrot.slane %v360, 5
    %381 = vrot.lane.b32.xlu0 %v380, 64
    %v382 = vpop.permute.xlu0 %381
    %v384 = vrot.slane %v360, 6
    %385 = vrot.lane.b32.xlu0 %v384, 96
    %v386 = vpop.permute.xlu0 %385
    %v388 = vrot.slane %v360, 7
    %v390 = vsel %vm122, %v364, %v368
    %vm391 = vcmask 523264
    %v392 = vsel %vm391, %v390, %v372
    %vm393 = vcmask 785408
    %v394 = vsel %vm393, %v392, %v374
    %v395 = vsel %vm122, %v378, %v382
    %v396 = vsel %vm391, %v395, %v386
    %v397 = vsel %vm393, %v396, %v388
    %v398 = vsel %vm122, %v364, 0
    %400 = vmatprep.subr.mxu0 0.0
    %401 = vmatpush1.msra.mxu0 %v252
    %402 = vmatprep.subr.mxu0 0.0
    %403 = vmatpush1.msra.mxu0 %v253
    %404 = vmatprep.subr.mxu0 0.0
    %405 = vmatpush1.msra.mxu0 %v254
    %406 = vmatprep.subr.mxu0 0.0
    %407 = vmatpush1.msra.mxu0 %v255
    %408 = vmatprep.subr.mxu0 0.0
    %409 = vmatpush1.msra.mxu0 0.0
    %410 = vmatprep.subr.mxu0 0.0
    %411 = vmatpush1.msra.mxu0 0.0
    %412 = vmatprep.subr.mxu0 0.0
    %413 = vmatpush1.msra.mxu0 0.0
    %414 = vmatprep.subr.mxu0 0.0
    %415 = vmatpush1.msra.mxu0 0.0
    %416 = vmatprep.subr.mxu0 0.0
    %417 = vmatpush1.msra.mxu0 0.0
    %418 = vmatprep.subr.mxu0 0.0
    %419 = vmatpush1.msra.mxu0 0.0
    %420 = vmatprep.subr.mxu0 0.0
    %421 = vmatpush1.msra.mxu0 0.0
    %422 = vmatprep.subr.mxu0 0.0
    %423 = vmatpush1.msra.mxu0 0.0
    %424 = vmatprep.subr.mxu0 0.0
    %425 = vmatpush1.msra.mxu0 0.0
    %426 = vmatprep.subr.mxu0 0.0
    %427 = vmatpush1.msra.mxu0 0.0
    %428 = vmatprep.subr.mxu0 0.0
    %429 = vmatpush1.msra.mxu0 0.0
    %430 = vmatprep.subr.mxu0 0.0
    %431 = vmatpush1.msra.mxu0 0.0
    %432 = vmatprep.subr.mxu0 0.0
    %433 = vmatpush1.msra.mxu0 0.0
    %434 = vmatprep.subr.mxu0 0.0
    %435 = vmatpush1.msra.mxu0 0.0
    %436 = vmatprep.subr.mxu0 0.0
    %437 = vmatpush1.msra.mxu0 0.0
    %438 = vmatprep.subr.mxu0 0.0
    %439 = vmatpush1.msra.mxu0 0.0
    %440 = vmatprep.subr.mxu0 0.0
    %441 = vmatpush1.msra.mxu0 0.0
    %442 = vmatprep.subr.mxu0 0.0
    %443 = vmatpush1.msra.mxu0 0.0
    %444 = vmatprep.subr.mxu0 0.0
    %445 = vmatpush1.msra.mxu0 0.0
    %446 = vmatprep.subr.mxu0 0.0
    %447 = vmatpush1.msra.mxu0 0.0
    %448 = vmatprep.subr.mxu0 0.0
    %449 = vmatpush1.msra.mxu0 0.0
    %450 = vmatprep.subr.mxu0 0.0
    %451 = vmatpush1.msra.mxu0 0.0
    %452 = vmatprep.subr.mxu0 0.0
    %453 = vmatpush1.msra.mxu0 0.0
    %454 = vmatprep.subr.mxu0 0.0
    %455 = vmatpush1.msra.mxu0 0.0
    %456 = vmatprep.subr.mxu0 0.0
    %457 = vmatpush1.msra.mxu0 0.0
    %458 = vmatprep.subr.mxu0 0.0
    %459 = vmatpush1.msra.mxu0 0.0
    %460 = vmatprep.subr.mxu0 0.0
    %461 = vmatpush1.msra.mxu0 0.0
    %462 = vmatprep.subr.mxu0 0.0
    %463 = vmatpush1.msra.mxu0 0.0
    %464 = vmatprep.mubr.f32.mxu0 0.0
    %465 = vmatmul.mubr.f32.gmra.mrb[0].mxu0 %v398
    %v466 = vpop.f32.mrb[0].mxu0
    %v467 = vadd.f32 0.0, %v466
    %v468 = vpop.f32.mrb[0].mxu0
    %469 = vdwg.mxu0
    %v470 = vadd.f32 %v219, %v467
    %v471 = vxor.u32 %v470, 2147483648
    %v472 = vmul.f32 %v471, 1.442695
    %v473 = vpow.pop %v472
    %v474 = vadd.f32 %v473, 1.0
    %v475 = vrcp.pop %v474
    %v476 = vmul.f32 1.0, %v475
    %v477 = vtanh.pop %v470
    %v478 = vmul.f32 %v476, %v361
    %480 = vrot.lane.b32.xlu0 %v477, 64
    %v481 = vpop.permute.xlu0 %480
    %v483 = vmul.f32 %v476, %v481
    %485 = vrot.lane.b32.xlu0 %v483, 32
    %v486 = vpop.permute.xlu0 %485
    %v488 = vadd.f32 %v478, %v486
    %v489 = vtanh.pop %v488
    %491 = vrot.lane.b32.xlu0 %v489, 64
    %v492 = vpop.permute.xlu0 %491
    %v494 = vmul.f32 %v476, %v492
    %vm495 = vcmp.gt.s32.totalorder %v102, 1
    %v496 = vsel %vm495, 1, 0
    %497 = vset.pattern.permute.xlu0 0
    %498 = vperm.xlu0 %497, %v496
    %v499 = vpop.permute.xlu0 %498
    %vm500 = vcmp.eq.s32.totalorder %v499, 1
    %v501 = vsel %vm500, %v494, %v360
    %v502 = vsel %vm500, %v488, %v361
    %v503 = vsel %vm500, %v494, 0.0
    %505 = vrot.lane.b32.xlu0 %v503, 32
    %v506 = vpop.permute.xlu0 %505
    %v508 = vrot.slane %v503, 1
    %509 = vrot.lane.b32.xlu0 %v508, 64
    %v510 = vpop.permute.xlu0 %509
    %v512 = vrot.slane %v503, 2
    %513 = vrot.lane.b32.xlu0 %v512, 96
    %v514 = vpop.permute.xlu0 %513
    %v516 = vrot.slane %v503, 3
    %v518 = vrot.slane %v503, 4
    %519 = vrot.lane.b32.xlu0 %v518, 32
    %v520 = vpop.permute.xlu0 %519
    %v522 = vrot.slane %v503, 5
    %523 = vrot.lane.b32.xlu0 %v522, 64
    %v524 = vpop.permute.xlu0 %523
    %v526 = vrot.slane %v503, 6
    %527 = vrot.lane.b32.xlu0 %v526, 96
    %v528 = vpop.permute.xlu0 %527
    %v530 = vrot.slane %v503, 7
    %v532 = vsel %vm122, %v506, %v510
    %v533 = vsel %vm391, %v532, %v514
    %v534 = vsel %vm393, %v533, %v516
    %v535 = vsel %vm122, %v520, %v524
    %v536 = vsel %vm391, %v535, %v528
    %v537 = vsel %vm393, %v536, %v530
    %539 = vrot.lane.b32.xlu0 %v501, 32
    %v540 = vpop.permute.xlu0 %539
    %v541 = vsel %vm122, %v540, 0
    %543 = vmatprep.subr.mxu0 0.0
    %544 = vmatpush1.msra.mxu0 %v252
    %545 = vmatprep.subr.mxu0 0.0
    %546 = vmatpush1.msra.mxu0 %v253
    %547 = vmatprep.subr.mxu0 0.0
    %548 = vmatpush1.msra.mxu0 %v254
    %549 = vmatprep.subr.mxu0 0.0
    %550 = vmatpush1.msra.mxu0 %v255
    %551 = vmatprep.subr.mxu0 0.0
    %552 = vmatpush1.msra.mxu0 0.0
    %553 = vmatprep.subr.mxu0 0.0
    %554 = vmatpush1.msra.mxu0 0.0
    %555 = vmatprep.subr.mxu0 0.0
    %556 = vmatpush1.msra.mxu0 0.0
    %557 = vmatprep.subr.mxu0 0.0
    %558 = vmatpush1.msra.mxu0 0.0
    %559 = vmatprep.subr.mxu0 0.0
    %560 = vmatpush1.msra.mxu0 0.0
    %561 = vmatprep.subr.mxu0 0.0
    %562 = vmatpush1.msra.mxu0 0.0
    %563 = vmatprep.subr.mxu0 0.0
    %564 = vmatpush1.msra.mxu0 0.0
    %565 = vmatprep.subr.mxu0 0.0
    %566 = vmatpush1.msra.mxu0 0.0
    %567 = vmatprep.subr.mxu0 0.0
    %568 = vmatpush1.msra.mxu0 0.0
    %569 = vmatprep.subr.mxu0 0.0
    %570 = vmatpush1.msra.mxu0 0.0
    %571 = vmatprep.subr.mxu0 0.0
    %572 = vmatpush1.msra.mxu0 0.0
    %573 = vmatprep.subr.mxu0 0.0
    %574 = vmatpush1.msra.mxu0 0.0
    %575 = vmatprep.subr.mxu0 0.0
    %576 = vmatpush1.msra.mxu0 0.0
    %577 = vmatprep.subr.mxu0 0.0
    %578 = vmatpush1.msra.mxu0 0.0
    %579 = vmatprep.subr.mxu0 0.0
    %580 = vmatpush1.msra.mxu0 0.0
    %581 = vmatprep.subr.mxu0 0.0
    %582 = vmatpush1.msra.mxu0 0.0
    %583 = vmatprep.subr.mxu0 0.0
    %584 = vmatpush1.msra.mxu0 0.0
    %585 = vmatprep.subr.mxu0 0.0
    %586 = vmatpush1.msra.mxu0 0.0
    %587 = vmatprep.subr.mxu0 0.0
    %588 = vmatpush1.msra.mxu0 0.0
    %589 = vmatprep.subr.mxu0 0.0
    %590 = vmatpush1.msra.mxu0 0.0
    %591 = vmatprep.subr.mxu0 0.0
    %592 = vmatpush1.msra.mxu0 0.0
    %593 = vmatprep.subr.mxu0 0.0
    %594 = vmatpush1.msra.mxu0 0.0
    %595 = vmatprep.subr.mxu0 0.0
    %596 = vmatpush1.msra.mxu0 0.0
    %597 = vmatprep.subr.mxu0 0.0
    %598 = vmatpush1.msra.mxu0 0.0
    %599 = vmatprep.subr.mxu0 0.0
    %600 = vmatpush1.msra.mxu0 0.0
    %601 = vmatprep.subr.mxu0 0.0
    %602 = vmatpush1.msra.mxu0 0.0
    %603 = vmatprep.subr.mxu0 0.0
    %604 = vmatpush1.msra.mxu0 0.0
    %605 = vmatprep.subr.mxu0 0.0
    %606 = vmatpush1.msra.mxu0 0.0
    %607 = vmatprep.mubr.f32.mxu0 0.0
    %608 = vmatmul.mubr.f32.gmra.mrb[0].mxu0 %v541
    %v609 = vpop.f32.mrb[0].mxu0
    %v610 = vadd.f32 0.0, %v609
    %v611 = vpop.f32.mrb[0].mxu0
    %612 = vdwg.mxu0
    %v613 = vadd.f32 %v224, %v610
    %v614 = vxor.u32 %v613, 2147483648
    %v615 = vmul.f32 %v614, 1.442695
    %v616 = vpow.pop %v615
    %v617 = vadd.f32 %v616, 1.0
    %v618 = vrcp.pop %v617
    %v619 = vmul.f32 1.0, %v618
    %v620 = vtanh.pop %v613
    %v621 = vmul.f32 %v619, %v502
    %623 = vrot.lane.b32.xlu0 %v620, 64
    %v624 = vpop.permute.xlu0 %623
    %v626 = vmul.f32 %v619, %v624
    %628 = vrot.lane.b32.xlu0 %v626, 32
    %v629 = vpop.permute.xlu0 %628
    %v631 = vadd.f32 %v621, %v629
    %v632 = vtanh.pop %v631
    %634 = vrot.lane.b32.xlu0 %v632, 64
    %v635 = vpop.permute.xlu0 %634
    %v637 = vmul.f32 %v619, %v635
    %vm638 = vcmp.gt.s32.totalorder %v102, 2
    %v639 = vsel %vm638, 1, 0
    %640 = vset.pattern.permute.xlu0 0
    %641 = vperm.xlu0 %640, %v639
    %v642 = vpop.permute.xlu0 %641
    %vm643 = vcmp.eq.s32.totalorder %v642, 1
    %v644 = vsel %vm643, %v637, %v501
    %v645 = vsel %vm643, %v631, %v502
    %v646 = vsel %vm643, %v637, 0.0
    %648 = vrot.lane.b32.xlu0 %v646, 32
    %v649 = vpop.permute.xlu0 %648
    %v651 = vrot.slane %v646, 1
    %652 = vrot.lane.b32.xlu0 %v651, 64
    %v653 = vpop.permute.xlu0 %652
    %v655 = vrot.slane %v646, 2
    %656 = vrot.lane.b32.xlu0 %v655, 96
    %v657 = vpop.permute.xlu0 %656
    %v659 = vrot.slane %v646, 3
    %v661 = vrot.slane %v646, 4
    %662 = vrot.lane.b32.xlu0 %v661, 32
    %v663 = vpop.permute.xlu0 %662
    %v665 = vrot.slane %v646, 5
    %666 = vrot.lane.b32.xlu0 %v665, 64
    %v667 = vpop.permute.xlu0 %666
    %v669 = vrot.slane %v646, 6
    %670 = vrot.lane.b32.xlu0 %v669, 96
    %v671 = vpop.permute.xlu0 %670
    %v673 = vrot.slane %v646, 7
    %v675 = vsel %vm122, %v649, %v653
    %v676 = vsel %vm391, %v675, %v657
    %v677 = vsel %vm393, %v676, %v659
    %v678 = vsel %vm122, %v663, %v667
    %v679 = vsel %vm391, %v678, %v671
    %v680 = vsel %vm393, %v679, %v673
    %682 = vrot.lane.b32.xlu0 %v644, 32
    %v683 = vpop.permute.xlu0 %682
    %v684 = vsel %vm122, %v683, 0
    %686 = vmatprep.subr.mxu0 0.0
    %687 = vmatpush1.msra.mxu0 %v252
    %688 = vmatprep.subr.mxu0 0.0
    %689 = vmatpush1.msra.mxu0 %v253
    %690 = vmatprep.subr.mxu0 0.0
    %691 = vmatpush1.msra.mxu0 %v254
    %692 = vmatprep.subr.mxu0 0.0
    %693 = vmatpush1.msra.mxu0 %v255
    %694 = vmatprep.subr.mxu0 0.0
    %695 = vmatpush1.msra.mxu0 0.0
    %696 = vmatprep.subr.mxu0 0.0
    %697 = vmatpush1.msra.mxu0 0.0
    %698 = vmatprep.subr.mxu0 0.0
    %699 = vmatpush1.msra.mxu0 0.0
    %700 = vmatprep.subr.mxu0 0.0
    %701 = vmatpush1.msra.mxu0 0.0
    %702 = vmatprep.subr.mxu0 0.0
    %703 = vmatpush1.msra.mxu0 0.0
    %704 = vmatprep.subr.mxu0 0.0
    %705 = vmatpush1.msra.mxu0 0.0
    %706 = vmatprep.subr.mxu0 0.0
    %707 = vmatpush1.msra.mxu0 0.0
    %708 = vmatprep.subr.mxu0 0.0
    %709 = vmatpush1.msra.mxu0 0.0
    %710 = vmatprep.subr.mxu0 0.0
    %711 = vmatpush1.msra.mxu0 0.0
    %712 = vmatprep.subr.mxu0 0.0
    %713 = vmatpush1.msra.mxu0 0.0
    %714 = vmatprep.subr.mxu0 0.0
    %715 = vmatpush1.msra.mxu0 0.0
    %716 = vmatprep.subr.mxu0 0.0
    %717 = vmatpush1.msra.mxu0 0.0
    %718 = vmatprep.subr.mxu0 0.0
    %719 = vmatpush1.msra.mxu0 0.0
    %720 = vmatprep.subr.mxu0 0.0
    %721 = vmatpush1.msra.mxu0 0.0
    %722 = vmatprep.subr.mxu0 0.0
    %723 = vmatpush1.msra.mxu0 0.0
    %724 = vmatprep.subr.mxu0 0.0
    %725 = vmatpush1.msra.mxu0 0.0
    %726 = vmatprep.subr.mxu0 0.0
    %727 = vmatpush1.msra.mxu0 0.0
    %728 = vmatprep.subr.mxu0 0.0
    %729 = vmatpush1.msra.mxu0 0.0
    %730 = vmatprep.subr.mxu0 0.0
    %731 = vmatpush1.msra.mxu0 0.0
    %732 = vmatprep.subr.mxu0 0.0
    %733 = vmatpush1.msra.mxu0 0.0
    %734 = vmatprep.subr.mxu0 0.0
    %735 = vmatpush1.msra.mxu0 0.0
    %736 = vmatprep.subr.mxu0 0.0
    %737 = vmatpush1.msra.mxu0 0.0
    %738 = vmatprep.subr.mxu0 0.0
    %739 = vmatpush1.msra.mxu0 0.0
    %740 = vmatprep.subr.mxu0 0.0
    %741 = vmatpush1.msra.mxu0 0.0
    %742 = vmatprep.subr.mxu0 0.0
    %743 = vmatpush1.msra.mxu0 0.0
    %744 = vmatprep.subr.mxu0 0.0
    %745 = vmatpush1.msra.mxu0 0.0
    %746 = vmatprep.subr.mxu0 0.0
    %747 = vmatpush1.msra.mxu0 0.0
    %748 = vmatprep.subr.mxu0 0.0
    %749 = vmatpush1.msra.mxu0 0.0
    %750 = vmatprep.mubr.f32.mxu0 0.0
    %751 = vmatmul.mubr.f32.gmra.mrb[0].mxu0 %v684
    %v752 = vpop.f32.mrb[0].mxu0
    %v753 = vadd.f32 0.0, %v752
    %v754 = vpop.f32.mrb[0].mxu0
    %755 = vdwg.mxu0
    %v756 = vadd.f32 %v229, %v753
    %v757 = vxor.u32 %v756, 2147483648
    %v758 = vmul.f32 %v757, 1.442695
    %v759 = vpow.pop %v758
    %v760 = vadd.f32 %v759, 1.0
    %v761 = vrcp.pop %v760
    %v762 = vmul.f32 1.0, %v761
    %v763 = vtanh.pop %v756
    %v764 = vmul.f32 %v762, %v645
    %766 = vrot.lane.b32.xlu0 %v763, 64
    %v767 = vpop.permute.xlu0 %766
    %v769 = vmul.f32 %v762, %v767
    %771 = vrot.lane.b32.xlu0 %v769, 32
    %v772 = vpop.permute.xlu0 %771
    %v774 = vadd.f32 %v764, %v772
    %v775 = vtanh.pop %v774
    %777 = vrot.lane.b32.xlu0 %v775, 64
    %v778 = vpop.permute.xlu0 %777
    %v780 = vmul.f32 %v762, %v778
    %vm781 = vcmp.gt.s32.totalorder %v102, 3
    %v782 = vsel %vm781, 1, 0
    %783 = vset.pattern.permute.xlu0 0
    %784 = vperm.xlu0 %783, %v782
    %v785 = vpop.permute.xlu0 %784
    %vm786 = vcmp.eq.s32.totalorder %v785, 1
    %v787 = vsel %vm786, %v780, %v644
    %v788 = vsel %vm786, %v774, %v645
    %v789 = vsel %vm786, %v780, 0.0
    %791 = vrot.lane.b32.xlu0 %v789, 32
    %v792 = vpop.permute.xlu0 %791
    %v794 = vrot.slane %v789, 1
    %795 = vrot.lane.b32.xlu0 %v794, 64
    %v796 = vpop.permute.xlu0 %795
    %v798 = vrot.slane %v789, 2
    %799 = vrot.lane.b32.xlu0 %v798, 96
    %v800 = vpop.permute.xlu0 %799
    %v802 = vrot.slane %v789, 3
    %v804 = vrot.slane %v789, 4
    %805 = vrot.lane.b32.xlu0 %v804, 32
    %v806 = vpop.permute.xlu0 %805
    %v808 = vrot.slane %v789, 5
    %809 = vrot.lane.b32.xlu0 %v808, 64
    %v810 = vpop.permute.xlu0 %809
    %v812 = vrot.slane %v789, 6
    %813 = vrot.lane.b32.xlu0 %v812, 96
    %v814 = vpop.permute.xlu0 %813
    %v816 = vrot.slane %v789, 7
    %v818 = vsel %vm122, %v792, %v796
    %v819 = vsel %vm391, %v818, %v800
    %v820 = vsel %vm393, %v819, %v802
    %v821 = vsel %vm122, %v806, %v810
    %v822 = vsel %vm391, %v821, %v814
    %v823 = vsel %vm393, %v822, %v816
    %825 = vrot.lane.b32.xlu0 %v787, 32
    %v826 = vpop.permute.xlu0 %825
    %v827 = vsel %vm122, %v826, 0
    %829 = vmatprep.subr.mxu0 0.0
    %830 = vmatpush1.msra.mxu0 %v252
    %831 = vmatprep.subr.mxu0 0.0
    %832 = vmatpush1.msra.mxu0 %v253
    %833 = vmatprep.subr.mxu0 0.0
    %834 = vmatpush1.msra.mxu0 %v254
    %835 = vmatprep.subr.mxu0 0.0
    %836 = vmatpush1.msra.mxu0 %v255
    %837 = vmatprep.subr.mxu0 0.0
    %838 = vmatpush1.msra.mxu0 0.0
    %839 = vmatprep.subr.mxu0 0.0
    %840 = vmatpush1.msra.mxu0 0.0
    %841 = vmatprep.subr.mxu0 0.0
    %842 = vmatpush1.msra.mxu0 0.0
    %843 = vmatprep.subr.mxu0 0.0
    %844 = vmatpush1.msra.mxu0 0.0
    %845 = vmatprep.subr.mxu0 0.0
    %846 = vmatpush1.msra.mxu0 0.0
    %847 = vmatprep.subr.mxu0 0.0
    %848 = vmatpush1.msra.mxu0 0.0
    %849 = vmatprep.subr.mxu0 0.0
    %850 = vmatpush1.msra.mxu0 0.0
    %851 = vmatprep.subr.mxu0 0.0
    %852 = vmatpush1.msra.mxu0 0.0
    %853 = vmatprep.subr.mxu0 0.0
    %854 = vmatpush1.msra.mxu0 0.0
    %855 = vmatprep.subr.mxu0 0.0
    %856 = vmatpush1.msra.mxu0 0.0
    %857 = vmatprep.subr.mxu0 0.0
    %858 = vmatpush1.msra.mxu0 0.0
    %859 = vmatprep.subr.mxu0 0.0
    %860 = vmatpush1.msra.mxu0 0.0
    %861 = vmatprep.subr.mxu0 0.0
    %862 = vmatpush1.msra.mxu0 0.0
    %863 = vmatprep.subr.mxu0 0.0
    %864 = vmatpush1.msra.mxu0 0.0
    %865 = vmatprep.subr.mxu0 0.0
    %866 = vmatpush1.msra.mxu0 0.0
    %867 = vmatprep.subr.mxu0 0.0
    %868 = vmatpush1.msra.mxu0 0.0
    %869 = vmatprep.subr.mxu0 0.0
    %870 = vmatpush1.msra.mxu0 0.0
    %871 = vmatprep.subr.mxu0 0.0
    %872 = vmatpush1.msra.mxu0 0.0
    %873 = vmatprep.subr.mxu0 0.0
    %874 = vmatpush1.msra.mxu0 0.0
    %875 = vmatprep.subr.mxu0 0.0
    %876 = vmatpush1.msra.mxu0 0.0
    %877 = vmatprep.subr.mxu0 0.0
    %878 = vmatpush1.msra.mxu0 0.0
    %879 = vmatprep.subr.mxu0 0.0
    %880 = vmatpush1.msra.mxu0 0.0
    %881 = vmatprep.subr.mxu0 0.0
    %882 = vmatpush1.msra.mxu0 0.0
    %883 = vmatprep.subr.mxu0 0.0
    %884 = vmatpush1.msra.mxu0 0.0
    %885 = vmatprep.subr.mxu0 0.0
    %886 = vmatpush1.msra.mxu0 0.0
    %887 = vmatprep.subr.mxu0 0.0
    %888 = vmatpush1.msra.mxu0 0.0
    %889 = vmatprep.subr.mxu0 0.0
    %890 = vmatpush1.msra.mxu0 0.0
    %891 = vmatprep.subr.mxu0 0.0
    %892 = vmatpush1.msra.mxu0 0.0
    %893 = vmatprep.mubr.f32.mxu0 0.0
    %894 = vmatmul.mubr.f32.gmra.mrb[0].mxu0 %v827
    %v895 = vpop.f32.mrb[0].mxu0
    %v896 = vadd.f32 0.0, %v895
    %v897 = vpop.f32.mrb[0].mxu0
    %898 = vdwg.mxu0
    %v899 = vadd.f32 %v234, %v896
    %v900 = vxor.u32 %v899, 2147483648
    %v901 = vmul.f32 %v900, 1.442695
    %v902 = vpow.pop %v901
    %v903 = vadd.f32 %v902, 1.0
    %v904 = vrcp.pop %v903
    %v905 = vmul.f32 1.0, %v904
    %v906 = vtanh.pop %v899
    %v907 = vmul.f32 %v905, %v788
    %909 = vrot.lane.b32.xlu0 %v906, 64
    %v910 = vpop.permute.xlu0 %909
    %v912 = vmul.f32 %v905, %v910
    %914 = vrot.lane.b32.xlu0 %v912, 32
    %v915 = vpop.permute.xlu0 %914
    %v917 = vadd.f32 %v907, %v915
    %v918 = vtanh.pop %v917
    %920 = vrot.lane.b32.xlu0 %v918, 64
    %v921 = vpop.permute.xlu0 %920
    %v923 = vmul.f32 %v905, %v921
    %vm924 = vcmp.gt.s32.totalorder %v102, 4
    %v925 = vsel %vm924, 1, 0
    %926 = vset.pattern.permute.xlu0 0
    %927 = vperm.xlu0 %926, %v925
    %v928 = vpop.permute.xlu0 %927
    %vm929 = vcmp.eq.s32.totalorder %v928, 1
    %v930 = vsel %vm929, %v923, %v787
    %v931 = vsel %vm929, %v917, %v788
    %v932 = vsel %vm929, %v923, 0.0
    %934 = vrot.lane.b32.xlu0 %v932, 32
    %v935 = vpop.permute.xlu0 %934
    %v937 = vrot.slane %v932, 1
    %938 = vrot.lane.b32.xlu0 %v937, 64
    %v939 = vpop.permute.xlu0 %938
    %v941 = vrot.slane %v932, 2
    %942 = vrot.lane.b32.xlu0 %v941, 96
    %v943 = vpop.permute.xlu0 %942
    %v945 = vrot.slane %v932, 3
    %v947 = vrot.slane %v932, 4
    %948 = vrot.lane.b32.xlu0 %v947, 32
    %v949 = vpop.permute.xlu0 %948
    %v951 = vrot.slane %v932, 5
    %952 = vrot.lane.b32.xlu0 %v951, 64
    %v953 = vpop.permute.xlu0 %952
    %v955 = vrot.slane %v932, 6
    %956 = vrot.lane.b32.xlu0 %v955, 96
    %v957 = vpop.permute.xlu0 %956
    %v959 = vrot.slane %v932, 7
    %v961 = vsel %vm122, %v935, %v939
    %v962 = vsel %vm391, %v961, %v943
    %v963 = vsel %vm393, %v962, %v945
    %v964 = vsel %vm122, %v949, %v953
    %v965 = vsel %vm391, %v964, %v957
    %v966 = vsel %vm393, %v965, %v959
    %968 = vrot.lane.b32.xlu0 %v930, 32
    %v969 = vpop.permute.xlu0 %968
    %v970 = vsel %vm122, %v969, 0
    %972 = vmatprep.subr.mxu0 0.0
    %973 = vmatpush1.msra.mxu0 %v252
    %974 = vmatprep.subr.mxu0 0.0
    %975 = vmatpush1.msra.mxu0 %v253
    %976 = vmatprep.subr.mxu0 0.0
    %977 = vmatpush1.msra.mxu0 %v254
    %978 = vmatprep.subr.mxu0 0.0
    %979 = vmatpush1.msra.mxu0 %v255
    %980 = vmatprep.subr.mxu0 0.0
    %981 = vmatpush1.msra.mxu0 0.0
    %982 = vmatprep.subr.mxu0 0.0
    %983 = vmatpush1.msra.mxu0 0.0
    %984 = vmatprep.subr.mxu0 0.0
    %985 = vmatpush1.msra.mxu0 0.0
    %986 = vmatprep.subr.mxu0 0.0
    %987 = vmatpush1.msra.mxu0 0.0
    %988 = vmatprep.subr.mxu0 0.0
    %989 = vmatpush1.msra.mxu0 0.0
    %990 = vmatprep.subr.mxu0 0.0
    %991 = vmatpush1.msra.mxu0 0.0
    %992 = vmatprep.subr.mxu0 0.0
    %993 = vmatpush1.msra.mxu0 0.0
    %994 = vmatprep.subr.mxu0 0.0
    %995 = vmatpush1.msra.mxu0 0.0
    %996 = vmatprep.subr.mxu0 0.0
    %997 = vmatpush1.msra.mxu0 0.0
    %998 = vmatprep.subr.mxu0 0.0
    %999 = vmatpush1.msra.mxu0 0.0
    %1000 = vmatprep.subr.mxu0 0.0
    %1001 = vmatpush1.msra.mxu0 0.0
    %1002 = vmatprep.subr.mxu0 0.0
    %1003 = vmatpush1.msra.mxu0 0.0
    %1004 = vmatprep.subr.mxu0 0.0
    %1005 = vmatpush1.msra.mxu0 0.0
    %1006 = vmatprep.subr.mxu0 0.0
    %1007 = vmatpush1.msra.mxu0 0.0
    %1008 = vmatprep.subr.mxu0 0.0
    %1009 = vmatpush1.msra.mxu0 0.0
    %1010 = vmatprep.subr.mxu0 0.0
    %1011 = vmatpush1.msra.mxu0 0.0
    %1012 = vmatprep.subr.mxu0 0.0
    %1013 = vmatpush1.msra.mxu0 0.0
    %1014 = vmatprep.subr.mxu0 0.0
    %1015 = vmatpush1.msra.mxu0 0.0
    %1016 = vmatprep.subr.mxu0 0.0
    %1017 = vmatpush1.msra.mxu0 0.0
    %1018 = vmatprep.subr.mxu0 0.0
    %1019 = vmatpush1.msra.mxu0 0.0
    %1020 = vmatprep.subr.mxu0 0.0
    %1021 = vmatpush1.msra.mxu0 0.0
    %1022 = vmatprep.subr.mxu0 0.0
    %1023 = vmatpush1.msra.mxu0 0.0
    %1024 = vmatprep.subr.mxu0 0.0
    %1025 = vmatpush1.msra.mxu0 0.0
    %1026 = vmatprep.subr.mxu0 0.0
    %1027 = vmatpush1.msra.mxu0 0.0
    %1028 = vmatprep.subr.mxu0 0.0
    %1029 = vmatpush1.msra.mxu0 0.0
    %1030 = vmatprep.subr.mxu0 0.0
    %1031 = vmatpush1.msra.mxu0 0.0
    %1032 = vmatprep.subr.mxu0 0.0
    %1033 = vmatpush1.msra.mxu0 0.0
    %1034 = vmatprep.subr.mxu0 0.0
    %1035 = vmatpush1.msra.mxu0 0.0
    %1036 = vmatprep.mubr.f32.mxu0 0.0
    %1037 = vmatmul.mubr.f32.gmra.mrb[0].mxu0 %v970
    %v1038 = vpop.f32.mrb[0].mxu0
    %v1039 = vadd.f32 0.0, %v1038
    %v1040 = vpop.f32.mrb[0].mxu0
    %1041 = vdwg.mxu0
    %v1042 = vadd.f32 %v239, %v1039
    %v1043 = vxor.u32 %v1042, 2147483648
    %v1044 = vmul.f32 %v1043, 1.442695
    %v1045 = vpow.pop %v1044
    %v1046 = vadd.f32 %v1045, 1.0
    %v1047 = vrcp.pop %v1046
    %v1048 = vmul.f32 1.0, %v1047
    %v1049 = vtanh.pop %v1042
    %v1050 = vmul.f32 %v1048, %v931
    %1052 = vrot.lane.b32.xlu0 %v1049, 64
    %v1053 = vpop.permute.xlu0 %1052
    %v1055 = vmul.f32 %v1048, %v1053
    %1057 = vrot.lane.b32.xlu0 %v1055, 32
    %v1058 = vpop.permute.xlu0 %1057
    %v1060 = vadd.f32 %v1050, %v1058
    %v1061 = vtanh.pop %v1060
    %1063 = vrot.lane.b32.xlu0 %v1061, 64
    %v1064 = vpop.permute.xlu0 %1063
    %v1066 = vmul.f32 %v1048, %v1064
    %vm1067 = vcmp.gt.s32.totalorder %v102, 5
    %v1068 = vsel %vm1067, 1, 0
    %1069 = vset.pattern.permute.xlu0 0
    %1070 = vperm.xlu0 %1069, %v1068
    %v1071 = vpop.permute.xlu0 %1070
    %vm1072 = vcmp.eq.s32.totalorder %v1071, 1
    %v1073 = vsel %vm1072, %v1066, %v930
    %v1074 = vsel %vm1072, %v1060, %v931
    %v1075 = vsel %vm1072, %v1066, 0.0
    %1077 = vrot.lane.b32.xlu0 %v1075, 32
    %v1078 = vpop.permute.xlu0 %1077
    %v1080 = vrot.slane %v1075, 1
    %1081 = vrot.lane.b32.xlu0 %v1080, 64
    %v1082 = vpop.permute.xlu0 %1081
    %v1084 = vrot.slane %v1075, 2
    %1085 = vrot.lane.b32.xlu0 %v1084, 96
    %v1086 = vpop.permute.xlu0 %1085
    %v1088 = vrot.slane %v1075, 3
    %v1090 = vrot.slane %v1075, 4
    %1091 = vrot.lane.b32.xlu0 %v1090, 32
    %v1092 = vpop.permute.xlu0 %1091
    %v1094 = vrot.slane %v1075, 5
    %1095 = vrot.lane.b32.xlu0 %v1094, 64
    %v1096 = vpop.permute.xlu0 %1095
    %v1098 = vrot.slane %v1075, 6
    %1099 = vrot.lane.b32.xlu0 %v1098, 96
    %v1100 = vpop.permute.xlu0 %1099
    %v1102 = vrot.slane %v1075, 7
    %v1104 = vsel %vm122, %v1078, %v1082
    %v1105 = vsel %vm391, %v1104, %v1086
    %v1106 = vsel %vm393, %v1105, %v1088
    %v1107 = vsel %vm122, %v1092, %v1096
    %v1108 = vsel %vm391, %v1107, %v1100
    %v1109 = vsel %vm393, %v1108, %v1102
    %1111 = vrot.lane.b32.xlu0 %v1073, 32
    %v1112 = vpop.permute.xlu0 %1111
    %v1113 = vsel %vm122, %v1112, 0
    %1115 = vmatprep.subr.mxu0 0.0
    %1116 = vmatpush1.msra.mxu0 %v252
    %1117 = vmatprep.subr.mxu0 0.0
    %1118 = vmatpush1.msra.mxu0 %v253
    %1119 = vmatprep.subr.mxu0 0.0
    %1120 = vmatpush1.msra.mxu0 %v254
    %1121 = vmatprep.subr.mxu0 0.0
    %1122 = vmatpush1.msra.mxu0 %v255
    %1123 = vmatprep.subr.mxu0 0.0
    %1124 = vmatpush1.msra.mxu0 0.0
    %1125 = vmatprep.subr.mxu0 0.0
    %1126 = vmatpush1.msra.mxu0 0.0
    %1127 = vmatprep.subr.mxu0 0.0
    %1128 = vmatpush1.msra.mxu0 0.0
    %1129 = vmatprep.subr.mxu0 0.0
    %1130 = vmatpush1.msra.mxu0 0.0
    %1131 = vmatprep.subr.mxu0 0.0
    %1132 = vmatpush1.msra.mxu0 0.0
    %1133 = vmatprep.subr.mxu0 0.0
    %1134 = vmatpush1.msra.mxu0 0.0
    %1135 = vmatprep.subr.mxu0 0.0
    %1136 = vmatpush1.msra.mxu0 0.0
    %1137 = vmatprep.subr.mxu0 0.0
    %1138 = vmatpush1.msra.mxu0 0.0
    %1139 = vmatprep.subr.mxu0 0.0
    %1140 = vmatpush1.msra.mxu0 0.0
    %1141 = vmatprep.subr.mxu0 0.0
    %1142 = vmatpush1.msra.mxu0 0.0
    %1143 = vmatprep.subr.mxu0 0.0
    %1144 = vmatpush1.msra.mxu0 0.0
    %1145 = vmatprep.subr.mxu0 0.0
    %1146 = vmatpush1.msra.mxu0 0.0
    %1147 = vmatprep.subr.mxu0 0.0
    %1148 = vmatpush1.msra.mxu0 0.0
    %1149 = vmatprep.subr.mxu0 0.0
    %1150 = vmatpush1.msra.mxu0 0.0
    %1151 = vmatprep.subr.mxu0 0.0
    %1152 = vmatpush1.msra.mxu0 0.0
    %1153 = vmatprep.subr.mxu0 0.0
    %1154 = vmatpush1.msra.mxu0 0.0
    %1155 = vmatprep.subr.mxu0 0.0
    %1156 = vmatpush1.msra.mxu0 0.0
    %1157 = vmatprep.subr.mxu0 0.0
    %1158 = vmatpush1.msra.mxu0 0.0
    %1159 = vmatprep.subr.mxu0 0.0
    %1160 = vmatpush1.msra.mxu0 0.0
    %1161 = vmatprep.subr.mxu0 0.0
    %1162 = vmatpush1.msra.mxu0 0.0
    %1163 = vmatprep.subr.mxu0 0.0
    %1164 = vmatpush1.msra.mxu0 0.0
    %1165 = vmatprep.subr.mxu0 0.0
    %1166 = vmatpush1.msra.mxu0 0.0
    %1167 = vmatprep.subr.mxu0 0.0
    %1168 = vmatpush1.msra.mxu0 0.0
    %1169 = vmatprep.subr.mxu0 0.0
    %1170 = vmatpush1.msra.mxu0 0.0
    %1171 = vmatprep.subr.mxu0 0.0
    %1172 = vmatpush1.msra.mxu0 0.0
    %1173 = vmatprep.subr.mxu0 0.0
    %1174 = vmatpush1.msra.mxu0 0.0
    %1175 = vmatprep.subr.mxu0 0.0
    %1176 = vmatpush1.msra.mxu0 0.0
    %1177 = vmatprep.subr.mxu0 0.0
    %1178 = vmatpush1.msra.mxu0 0.0
    %1179 = vmatprep.mubr.f32.mxu0 0.0
    %1180 = vmatmul.mubr.f32.gmra.mrb[0].mxu0 %v1113
    %v1181 = vpop.f32.mrb[0].mxu0
    %v1182 = vadd.f32 0.0, %v1181
    %v1183 = vpop.f32.mrb[0].mxu0
    %1184 = vdwg.mxu0
    %v1185 = vadd.f32 %v244, %v1182
    %v1186 = vxor.u32 %v1185, 2147483648
    %v1187 = vmul.f32 %v1186, 1.442695
    %v1188 = vpow.pop %v1187
    %v1189 = vadd.f32 %v1188, 1.0
    %v1190 = vrcp.pop %v1189
    %v1191 = vmul.f32 1.0, %v1190
    %v1192 = vtanh.pop %v1185
    %v1193 = vmul.f32 %v1191, %v1074
    %1195 = vrot.lane.b32.xlu0 %v1192, 64
    %v1196 = vpop.permute.xlu0 %1195
    %v1198 = vmul.f32 %v1191, %v1196
    %1200 = vrot.lane.b32.xlu0 %v1198, 32
    %v1201 = vpop.permute.xlu0 %1200
    %v1203 = vadd.f32 %v1193, %v1201
    %v1204 = vtanh.pop %v1203
    %1206 = vrot.lane.b32.xlu0 %v1204, 64
    %v1207 = vpop.permute.xlu0 %1206
    %v1209 = vmul.f32 %v1191, %v1207
    %vm1210 = vcmp.gt.s32.totalorder %v102, 6
    %v1211 = vsel %vm1210, 1, 0
    %1212 = vset.pattern.permute.xlu0 0
    %1213 = vperm.xlu0 %1212, %v1211
    %v1214 = vpop.permute.xlu0 %1213
    %vm1215 = vcmp.eq.s32.totalorder %v1214, 1
    %v1216 = vsel %vm1215, %v1209, %v1073
    %v1217 = vsel %vm1215, %v1203, %v1074
    %v1218 = vsel %vm1215, %v1209, 0.0
    %1220 = vrot.lane.b32.xlu0 %v1218, 32
    %v1221 = vpop.permute.xlu0 %1220
    %v1223 = vrot.slane %v1218, 1
    %1224 = vrot.lane.b32.xlu0 %v1223, 64
    %v1225 = vpop.permute.xlu0 %1224
    %v1227 = vrot.slane %v1218, 2
    %1228 = vrot.lane.b32.xlu0 %v1227, 96
    %v1229 = vpop.permute.xlu0 %1228
    %v1231 = vrot.slane %v1218, 3
    %v1233 = vrot.slane %v1218, 4
    %1234 = vrot.lane.b32.xlu0 %v1233, 32
    %v1235 = vpop.permute.xlu0 %1234
    %v1237 = vrot.slane %v1218, 5
    %1238 = vrot.lane.b32.xlu0 %v1237, 64
    %v1239 = vpop.permute.xlu0 %1238
    %v1241 = vrot.slane %v1218, 6
    %1242 = vrot.lane.b32.xlu0 %v1241, 96
    %v1243 = vpop.permute.xlu0 %1242
    %v1245 = vrot.slane %v1218, 7
    %v1247 = vsel %vm122, %v1221, %v1225
    %v1248 = vsel %vm391, %v1247, %v1229
    %v1249 = vsel %vm393, %v1248, %v1231
    %v1250 = vsel %vm122, %v1235, %v1239
    %v1251 = vsel %vm391, %v1250, %v1243
    %v1252 = vsel %vm393, %v1251, %v1245
    %1254 = vrot.lane.b32.xlu0 %v1216, 32
    %v1255 = vpop.permute.xlu0 %1254
    %v1256 = vsel %vm122, %v1255, 0
    %1258 = vmatprep.subr.mxu0 0.0
    %1259 = vmatpush1.msra.mxu0 %v252
    %1260 = vmatprep.subr.mxu0 0.0
    %1261 = vmatpush1.msra.mxu0 %v253
    %1262 = vmatprep.subr.mxu0 0.0
    %1263 = vmatpush1.msra.mxu0 %v254
    %1264 = vmatprep.subr.mxu0 0.0
    %1265 = vmatpush1.msra.mxu0 %v255
    %1266 = vmatprep.subr.mxu0 0.0
    %1267 = vmatpush1.msra.mxu0 0.0
    %1268 = vmatprep.subr.mxu0 0.0
    %1269 = vmatpush1.msra.mxu0 0.0
    %1270 = vmatprep.subr.mxu0 0.0
    %1271 = vmatpush1.msra.mxu0 0.0
    %1272 = vmatprep.subr.mxu0 0.0
    %1273 = vmatpush1.msra.mxu0 0.0
    %1274 = vmatprep.subr.mxu0 0.0
    %1275 = vmatpush1.msra.mxu0 0.0
    %1276 = vmatprep.subr.mxu0 0.0
    %1277 = vmatpush1.msra.mxu0 0.0
    %1278 = vmatprep.subr.mxu0 0.0
    %1279 = vmatpush1.msra.mxu0 0.0
    %1280 = vmatprep.subr.mxu0 0.0
    %1281 = vmatpush1.msra.mxu0 0.0
    %1282 = vmatprep.subr.mxu0 0.0
    %1283 = vmatpush1.msra.mxu0 0.0
    %1284 = vmatprep.subr.mxu0 0.0
    %1285 = vmatpush1.msra.mxu0 0.0
    %1286 = vmatprep.subr.mxu0 0.0
    %1287 = vmatpush1.msra.mxu0 0.0
    %1288 = vmatprep.subr.mxu0 0.0
    %1289 = vmatpush1.msra.mxu0 0.0
    %1290 = vmatprep.subr.mxu0 0.0
    %1291 = vmatpush1.msra.mxu0 0.0
    %1292 = vmatprep.subr.mxu0 0.0
    %1293 = vmatpush1.msra.mxu0 0.0
    %1294 = vmatprep.subr.mxu0 0.0
    %1295 = vmatpush1.msra.mxu0 0.0
    %1296 = vmatprep.subr.mxu0 0.0
    %1297 = vmatpush1.msra.mxu0 0.0
    %1298 = vmatprep.subr.mxu0 0.0
    %1299 = vmatpush1.msra.mxu0 0.0
    %1300 = vmatprep.subr.mxu0 0.0
    %1301 = vmatpush1.msra.mxu0 0.0
    %1302 = vmatprep.subr.mxu0 0.0
    %1303 = vmatpush1.msra.mxu0 0.0
    %1304 = vmatprep.subr.mxu0 0.0
    %1305 = vmatpush1.msra.mxu0 0.0
    %1306 = vmatprep.subr.mxu0 0.0
    %1307 = vmatpush1.msra.mxu0 0.0
    %1308 = vmatprep.subr.mxu0 0.0
    %1309 = vmatpush1.msra.mxu0 0.0
    %1310 = vmatprep.subr.mxu0 0.0
    %1311 = vmatpush1.msra.mxu0 0.0
    %1312 = vmatprep.subr.mxu0 0.0
    %1313 = vmatpush1.msra.mxu0 0.0
    %1314 = vmatprep.subr.mxu0 0.0
    %1315 = vmatpush1.msra.mxu0 0.0
    %1316 = vmatprep.subr.mxu0 0.0
    %1317 = vmatpush1.msra.mxu0 0.0
    %1318 = vmatprep.subr.mxu0 0.0
    %1319 = vmatpush1.msra.mxu0 0.0
    %1320 = vmatprep.subr.mxu0 0.0
    %1321 = vmatpush1.msra.mxu0 0.0
    %1322 = vmatprep.mubr.f32.mxu0 0.0
    %1323 = vmatmul.mubr.f32.gmra.mrb[0].mxu0 %v1256
    %v1324 = vpop.f32.mrb[0].mxu0
    %v1325 = vadd.f32 0.0, %v1324
    %v1326 = vpop.f32.mrb[0].mxu0
    %1327 = vdwg.mxu0
    %v1328 = vadd.f32 %v249, %v1325
    %v1329 = vxor.u32 %v1328, 2147483648
    %v1330 = vmul.f32 %v1329, 1.442695
    %v1331 = vpow.pop %v1330
    %v1332 = vadd.f32 %v1331, 1.0
    %v1333 = vrcp.pop %v1332
    %v1334 = vmul.f32 1.0, %v1333
    %v1335 = vtanh.pop %v1328
    %v1336 = vmul.f32 %v1334, %v1217
    %1338 = vrot.lane.b32.xlu0 %v1335, 64
    %v1339 = vpop.permute.xlu0 %1338
    %v1341 = vmul.f32 %v1334, %v1339
    %1343 = vrot.lane.b32.xlu0 %v1341, 32
    %v1344 = vpop.permute.xlu0 %1343
    %v1346 = vadd.f32 %v1336, %v1344
    %v1347 = vtanh.pop %v1346
    %1349 = vrot.lane.b32.xlu0 %v1347, 64
    %v1350 = vpop.permute.xlu0 %1349
    %v1352 = vmul.f32 %v1334, %v1350
    %vm1353 = vcmp.gt.s32.totalorder %v102, 7
    %v1354 = vsel %vm1353, 1, 0
    %1355 = vset.pattern.permute.xlu0 0
    %1356 = vperm.xlu0 %1355, %v1354
    %v1357 = vpop.permute.xlu0 %1356
    %vm1358 = vcmp.eq.s32.totalorder %v1357, 1
    %v1359 = vsel %vm1358, %v1352, %v1216
    %v1360 = vsel %vm1358, %v1346, %v1217
    %v1361 = vsel %vm1358, %v1352, 0.0
    %1363 = vrot.lane.b32.xlu0 %v1361, 32
    %v1364 = vpop.permute.xlu0 %1363
    %v1366 = vrot.slane %v1361, 1
    %1367 = vrot.lane.b32.xlu0 %v1366, 64
    %v1368 = vpop.permute.xlu0 %1367
    %v1370 = vrot.slane %v1361, 2
    %1371 = vrot.lane.b32.xlu0 %v1370, 96
    %v1372 = vpop.permute.xlu0 %1371
    %v1374 = vrot.slane %v1361, 3
    %v1376 = vrot.slane %v1361, 4
    %1377 = vrot.lane.b32.xlu0 %v1376, 32
    %v1378 = vpop.permute.xlu0 %1377
    %v1380 = vrot.slane %v1361, 5
    %1381 = vrot.lane.b32.xlu0 %v1380, 64
    %v1382 = vpop.permute.xlu0 %1381
    %v1384 = vrot.slane %v1361, 6
    %1385 = vrot.lane.b32.xlu0 %v1384, 96
    %v1386 = vpop.permute.xlu0 %1385
    %v1388 = vrot.slane %v1361, 7
    %v1390 = vsel %vm122, %v1364, %v1368
    %v1391 = vsel %vm391, %v1390, %v1372
    %v1392 = vsel %vm393, %v1391, %v1374
    %v1393 = vsel %vm122, %v1378, %v1382
    %v1394 = vsel %vm391, %v1393, %v1386
    %v1395 = vsel %vm393, %v1394, %v1388
    %v1398 = vrot.slane %v534, 7
    %v1399 = vrot.slane %v537, 7
    %v1404 = vrot.slane %v677, 6
    %v1405 = vrot.slane %v680, 6
    %v1410 = vrot.slane %v820, 5
    %v1411 = vrot.slane %v823, 5
    %v1416 = vrot.slane %v963, 4
    %v1417 = vrot.slane %v966, 4
    %v1422 = vrot.slane %v1106, 3
    %v1423 = vrot.slane %v1109, 3
    %v1428 = vrot.slane %v1249, 2
    %v1429 = vrot.slane %v1252, 2
    %v1434 = vrot.slane %v1392, 1
    %v1435 = vrot.slane %v1395, 1
    %vm1438 = vcmask 1040384
    %v1439 = vsel %vm1438, %v394, %v1398
    %v1440 = vsel %vm1438, %v397, %v1399
    %vm1441 = vcmask 1041408
    %v1442 = vsel %vm1441, %v1439, %v1404
    %v1443 = vsel %vm1441, %v1440, %v1405
    %vm1444 = vcmask 1042432
    %v1445 = vsel %vm1444, %v1442, %v1410
    %v1446 = vsel %vm1444, %v1443, %v1411
    %vm1447 = vcmask 1043456
    %v1448 = vsel %vm1447, %v1445, %v1416
    %v1449 = vsel %vm1447, %v1446, %v1417
    %vm1450 = vcmask 1044480
    %v1451 = vsel %vm1450, %v1448, %v1422
    %v1452 = vsel %vm1450, %v1449, %v1423
    %vm1453 = vcmask 1045504
    %v1454 = vsel %vm1453, %v1451, %v1428
    %v1455 = vsel %vm1453, %v1452, %v1429
    %vm1456 = vcmask 1046528
    %v1457 = vsel %vm1456, %v1454, %v1434
    %v1458 = vsel %vm1456, %v1455, %v1435
    %1459 = vst [vmem:[#allocation10] sm:$0xff] %v1457
    %1460 = vst [vmem:[#allocation10 + $0x8] sm:$0xff] %v1458
    %v1461 = vld [vmem:[#allocation5] sm:$0xf]
    %1463 = vrot.lane.b32.xlu0 %v1359, 32
    %v1464 = vpop.permute.xlu0 %1463
    %vm1466 = vcmask 64512
    %v1468 = vsel %vm1466, %v1461, 0
    %1470 = vmatprep.subr.mxu0 0.0
    %1471 = vmatpush1.msra.mxu0 %v1464
    %1472 = vmatprep.subr.mxu0 0.0
    %1473 = vmatpush1.msra.mxu0 0.0
    %1474 = vmatprep.subr.mxu0 0.0
    %1475 = vmatpush1.msra.mxu0 0.0
    %1476 = vmatprep.subr.mxu0 0.0
    %1477 = vmatpush1.msra.mxu0 0.0
    %1478 = vmatprep.subr.mxu0 0.0
    %1479 = vmatpush1.msra.mxu0 0.0
    %1480 = vmatprep.subr.mxu0 0.0
    %1481 = vmatpush1.msra.mxu0 0.0
    %1482 = vmatprep.subr.mxu0 0.0
    %1483 = vmatpush1.msra.mxu0 0.0
    %1484 = vmatprep.subr.mxu0 0.0
    %1485 = vmatpush1.msra.mxu0 0.0
    %1486 = vmatprep.subr.mxu0 0.0
    %1487 = vmatpush1.msra.mxu0 0.0
    %1488 = vmatprep.subr.mxu0 0.0
    %1489 = vmatpush1.msra.mxu0 0.0
    %1490 = vmatprep.subr.mxu0 0.0
    %1491 = vmatpush1.msra.mxu0 0.0
    %1492 = vmatprep.subr.mxu0 0.0
    %1493 = vmatpush1.msra.mxu0 0.0
    %1494 = vmatprep.subr.mxu0 0.0
    %1495 = vmatpush1.msra.mxu0 0.0
    %1496 = vmatprep.subr.mxu0 0.0
    %1497 = vmatpush1.msra.mxu0 0.0
    %1498 = vmatprep.subr.mxu0 0.0
    %1499 = vmatpush1.msra.mxu0 0.0
    %1500 = vmatprep.subr.mxu0 0.0
    %1501 = vmatpush1.msra.mxu0 0.0
    %1502 = vmatprep.subr.mxu0 0.0
    %1503 = vmatpush1.msra.mxu0 0.0
    %1504 = vmatprep.subr.mxu0 0.0
    %1505 = vmatpush1.msra.mxu0 0.0
    %1506 = vmatprep.subr.mxu0 0.0
    %1507 = vmatpush1.msra.mxu0 0.0
    %1508 = vmatprep.subr.mxu0 0.0
    %1509 = vmatpush1.msra.mxu0 0.0
    %1510 = vmatprep.subr.mxu0 0.0
    %1511 = vmatpush1.msra.mxu0 0.0
    %1512 = vmatprep.subr.mxu0 0.0
    %1513 = vmatpush1.msra.mxu0 0.0
    %1514 = vmatprep.subr.mxu0 0.0
    %1515 = vmatpush1.msra.mxu0 0.0
    %1516 = vmatprep.subr.mxu0 0.0
    %1517 = vmatpush1.msra.mxu0 0.0
    %1518 = vmatprep.subr.mxu0 0.0
    %1519 = vmatpush1.msra.mxu0 0.0
    %1520 = vmatprep.subr.mxu0 0.0
    %1521 = vmatpush1.msra.mxu0 0.0
    %1522 = vmatprep.subr.mxu0 0.0
    %1523 = vmatpush1.msra.mxu0 0.0
    %1524 = vmatprep.subr.mxu0 0.0
    %1525 = vmatpush1.msra.mxu0 0.0
    %1526 = vmatprep.subr.mxu0 0.0
    %1527 = vmatpush1.msra.mxu0 0.0
    %1528 = vmatprep.subr.mxu0 0.0
    %1529 = vmatpush1.msra.mxu0 0.0
    %1530 = vmatprep.subr.mxu0 0.0
    %1531 = vmatpush1.msra.mxu0 0.0
    %1532 = vmatprep.subr.mxu0 0.0
    %1533 = vmatpush1.msra.mxu0 0.0
    %1534 = vmatprep.mubr.f32.mxu0 0.0
    %1535 = vmatmul.mubr.f32.gmra.mrb[0].mxu0 %v1468
    %v1536 = vpop.f32.mrb[0].mxu0
    %v1537 = vadd.f32 0.0, %v1536
    %v1538 = vpop.f32.mrb[0].mxu0
    %1539 = vdwg.mxu0
    %1541 = vrot.lane.b32.xlu0 %v1360, 96
    %v1542 = vpop.permute.xlu0 %1541
    %1544 = vmatprep.subr.mxu0 0.0
    %1545 = vmatpush1.msra.mxu0 %v1542
    %1546 = vmatprep.subr.mxu0 0.0
    %1547 = vmatpush1.msra.mxu0 0.0
    %1548 = vmatprep.subr.mxu0 0.0
    %1549 = vmatpush1.msra.mxu0 0.0
    %1550 = vmatprep.subr.mxu0 0.0
    %1551 = vmatpush1.msra.mxu0 0.0
    %1552 = vmatprep.subr.mxu0 0.0
    %1553 = vmatpush1.msra.mxu0 0.0
    %1554 = vmatprep.subr.mxu0 0.0
    %1555 = vmatpush1.msra.mxu0 0.0
    %1556 = vmatprep.subr.mxu0 0.0
    %1557 = vmatpush1.msra.mxu0 0.0
    %1558 = vmatprep.subr.mxu0 0.0
    %1559 = vmatpush1.msra.mxu0 0.0
    %1560 = vmatprep.subr.mxu0 0.0
    %1561 = vmatpush1.msra.mxu0 0.0
    %1562 = vmatprep.subr.mxu0 0.0
    %1563 = vmatpush1.msra.mxu0 0.0
    %1564 = vmatprep.subr.mxu0 0.0
    %1565 = vmatpush1.msra.mxu0 0.0
    %1566 = vmatprep.subr.mxu0 0.0
    %1567 = vmatpush1.msra.mxu0 0.0
    %1568 = vmatprep.subr.mxu0 0.0
    %1569 = vmatpush1.msra.mxu0 0.0
    %1570 = vmatprep.subr.mxu0 0.0
    %1571 = vmatpush1.msra.mxu0 0.0
    %1572 = vmatprep.subr.mxu0 0.0
    %1573 = vmatpush1.msra.mxu0 0.0
    %1574 = vmatprep.subr.mxu0 0.0
    %1575 = vmatpush1.msra.mxu0 0.0
    %1576 = vmatprep.subr.mxu0 0.0
    %1577 = vmatpush1.msra.mxu0 0.0
    %1578 = vmatprep.subr.mxu0 0.0
    %1579 = vmatpush1.msra.mxu0 0.0
    %1580 = vmatprep.subr.mxu0 0.0
    %1581 = vmatpush1.msra.mxu0 0.0
    %1582 = vmatprep.subr.mxu0 0.0
    %1583 = vmatpush1.msra.mxu0 0.0
    %1584 = vmatprep.subr.mxu0 0.0
    %1585 = vmatpush1.msra.mxu0 0.0
    %1586 = vmatprep.subr.mxu0 0.0
    %1587 = vmatpush1.msra.mxu0 0.0
    %1588 = vmatprep.subr.mxu0 0.0
    %1589 = vmatpush1.msra.mxu0 0.0
    %1590 = vmatprep.subr.mxu0 0.0
    %1591 = vmatpush1.msra.mxu0 0.0
    %1592 = vmatprep.subr.mxu0 0.0
    %1593 = vmatpush1.msra.mxu0 0.0
    %1594 = vmatprep.subr.mxu0 0.0
    %1595 = vmatpush1.msra.mxu0 0.0
    %1596 = vmatprep.subr.mxu0 0.0
    %1597 = vmatpush1.msra.mxu0 0.0
    %1598 = vmatprep.subr.mxu0 0.0
    %1599 = vmatpush1.msra.mxu0 0.0
    %1600 = vmatprep.subr.mxu0 0.0
    %1601 = vmatpush1.msra.mxu0 0.0
    %1602 = vmatprep.subr.mxu0 0.0
    %1603 = vmatpush1.msra.mxu0 0.0
    %1604 = vmatprep.subr.mxu0 0.0
    %1605 = vmatpush1.msra.mxu0 0.0
    %1606 = vmatprep.subr.mxu0 0.0
    %1607 = vmatpush1.msra.mxu0 0.0
    %1608 = vmatprep.mubr.f32.mxu0 0.0
    %1609 = vmatmul.mubr.f32.gmra.mrb[0].mxu0 %v1468
    %v1610 = vpop.f32.mrb[0].mxu0
    %v1611 = vadd.f32 0.0, %v1610
    %v1612 = vpop.f32.mrb[0].mxu0
    %1613 = vdwg.mxu0
    %v1614 = vld [vmem:[%s7] sm:$0xff]
    %v1615 = vld [vmem:[%s7 + $0x8] sm:$0xff]
    %v1616 = vld [vmem:[%s7 + $0x10] sm:$0xff]
    %v1617 = vld [vmem:[%s7 + $0x18] sm:$0xff]
    %v1618 = vld [vmem:[%s9] sm:$0x1]
    %v1620 = vlaneseq
    %v1621 = vshrl.u32 %v1620, 7
    %v1622 = vsub.s32 0, %v1621
    %v1623 = vrot.slane %v1618, %v1622
    %v1626 = vsel %vm122, %v1537, 0
    %1628 = vmatprep.subr.mxu0 0.0
    %1629 = vmatpush1.msra.mxu0 %v1614
    %1630 = vmatprep.subr.mxu0 0.0
    %1631 = vmatpush1.msra.mxu0 %v1615
    %1632 = vmatprep.subr.mxu0 0.0
    %1633 = vmatpush1.msra.mxu0 %v1616
    %1634 = vmatprep.subr.mxu0 0.0
    %1635 = vmatpush1.msra.mxu0 %v1617
    %1636 = vmatprep.subr.mxu0 0.0
    %1637 = vmatpush1.msra.mxu0 0.0
    %1638 = vmatprep.subr.mxu0 0.0
    %1639 = vmatpush1.msra.mxu0 0.0
    %1640 = vmatprep.subr.mxu0 0.0
    %1641 = vmatpush1.msra.mxu0 0.0
    %1642 = vmatprep.subr.mxu0 0.0
    %1643 = vmatpush1.msra.mxu0 0.0
    %1644 = vmatprep.subr.mxu0 0.0
    %1645 = vmatpush1.msra.mxu0 0.0
    %1646 = vmatprep.subr.mxu0 0.0
    %1647 = vmatpush1.msra.mxu0 0.0
    %1648 = vmatprep.subr.mxu0 0.0
    %1649 = vmatpush1.msra.mxu0 0.0
    %1650 = vmatprep.subr.mxu0 0.0
    %1651 = vmatpush1.msra.mxu0 0.0
    %1652 = vmatprep.subr.mxu0 0.0
    %1653 = vmatpush1.msra.mxu0 0.0
    %1654 = vmatprep.subr.mxu0 0.0
    %1655 = vmatpush1.msra.mxu0 0.0
    %1656 = vmatprep.subr.mxu0 0.0
    %1657 = vmatpush1.msra.mxu0 0.0
    %1658 = vmatprep.subr.mxu0 0.0
    %1659 = vmatpush1.msra.mxu0 0.0
    %1660 = vmatprep.subr.mxu0 0.0
    %1661 = vmatpush1.msra.mxu0 0.0
    %1662 = vmatprep.subr.mxu0 0.0
    %1663 = vmatpush1.msra.mxu0 0.0
    %1664 = vmatprep.subr.mxu0 0.0
    %1665 = vmatpush1.msra.mxu0 0.0
    %1666 = vmatprep.subr.mxu0 0.0
    %1667 = vmatpush1.msra.mxu0 0.0
    %1668 = vmatprep.subr.mxu0 0.0
    %1669 = vmatpush1.msra.mxu0 0.0
    %1670 = vmatprep.subr.mxu0 0.0
    %1671 = vmatpush1.msra.mxu0 0.0
    %1672 = vmatprep.subr.mxu0 0.0
    %1673 = vmatpush1.msra.mxu0 0.0
    %1674 = vmatprep.subr.mxu0 0.0
    %1675 = vmatpush1.msra.mxu0 0.0
    %1676 = vmatprep.subr.mxu0 0.0
    %1677 = vmatpush1.msra.mxu0 0.0
    %1678 = vmatprep.subr.mxu0 0.0
    %1679 = vmatpush1.msra.mxu0 0.0
    %1680 = vmatprep.subr.mxu0 0.0
    %1681 = vmatpush1.msra.mxu0 0.0
    %1682 = vmatprep.subr.mxu0 0.0
    %1683 = vmatpush1.msra.mxu0 0.0
    %1684 = vmatprep.subr.mxu0 0.0
    %1685 = vmatpush1.msra.mxu0 0.0
    %1686 = vmatprep.subr.mxu0 0.0
    %1687 = vmatpush1.msra.mxu0 0.0
    %1688 = vmatprep.subr.mxu0 0.0
    %1689 = vmatpush1.msra.mxu0 0.0
    %1690 = vmatprep.subr.mxu0 0.0
    %1691 = vmatpush1.msra.mxu0 0.0
    %1692 = vmatprep.mubr.f32.mxu0 0.0
    %1693 = vmatmul.mubr.f32.gmra.mrb[0].mxu0 %v1626
    %v1694 = vpop.f32.mrb[0].mxu0
    %v1695 = vadd.f32 %v1623, %v1694
    %v1696 = vpop.f32.mrb[0].mxu0
    %1697 = vdwg.mxu0
    %v1698 = vld [vmem:[#allocation7] sm:$0xff]
    %v1699 = vld [vmem:[#allocation7 + $0x8] sm:$0xff]
    %v1700 = vld [vmem:[#allocation7 + $0x10] sm:$0xff]
    %v1701 = vld [vmem:[#allocation7 + $0x18] sm:$0xff]
    %v1702 = vld [vmem:[%s12] sm:$0x1]
    %v1704 = vlaneseq
    %v1705 = vshrl.u32 %v1704, 7
    %v1706 = vsub.s32 0, %v1705
    %v1707 = vrot.slane %v1702, %v1706
    %v1710 = vsel %vm122, %v1611, 0
    %1712 = vmatprep.subr.mxu0 0.0
    %1713 = vmatpush1.msra.mxu0 %v1698
    %1714 = vmatprep.subr.mxu0 0.0
    %1715 = vmatpush1.msra.mxu0 %v1699
    %1716 = vmatprep.subr.mxu0 0.0
    %1717 = vmatpush1.msra.mxu0 %v1700
    %1718 = vmatprep.subr.mxu0 0.0
    %1719 = vmatpush1.msra.mxu0 %v1701
    %1720 = vmatprep.subr.mxu0 0.0
    %1721 = vmatpush1.msra.mxu0 0.0
    %1722 = vmatprep.subr.mxu0 0.0
    %1723 = vmatpush1.msra.mxu0 0.0
    %1724 = vmatprep.subr.mxu0 0.0
    %1725 = vmatpush1.msra.mxu0 0.0
    %1726 = vmatprep.subr.mxu0 0.0
    %1727 = vmatpush1.msra.mxu0 0.0
    %1728 = vmatprep.subr.mxu0 0.0
    %1729 = vmatpush1.msra.mxu0 0.0
    %1730 = vmatprep.subr.mxu0 0.0
    %1731 = vmatpush1.msra.mxu0 0.0
    %1732 = vmatprep.subr.mxu0 0.0
    %1733 = vmatpush1.msra.mxu0 0.0
    %1734 = vmatprep.subr.mxu0 0.0
    %1735 = vmatpush1.msra.mxu0 0.0
    %1736 = vmatprep.subr.mxu0 0.0
    %1737 = vmatpush1.msra.mxu0 0.0
    %1738 = vmatprep.subr.mxu0 0.0
    %1739 = vmatpush1.msra.mxu0 0.0
    %1740 = vmatprep.subr.mxu0 0.0
    %1741 = vmatpush1.msra.mxu0 0.0
    %1742 = vmatprep.subr.mxu0 0.0
    %1743 = vmatpush1.msra.mxu0 0.0
    %1744 = vmatprep.subr.mxu0 0.0
    %1745 = vmatpush1.msra.mxu0 0.0
    %1746 = vmatprep.subr.mxu0 0.0
    %1747 = vmatpush1.msra.mxu0 0.0
    %1748 = vmatprep.subr.mxu0 0.0
    %1749 = vmatpush1.msra.mxu0 0.0
    %1750 = vmatprep.subr.mxu0 0.0
    %1751 = vmatpush1.msra.mxu0 0.0
    %1752 = vmatprep.subr.mxu0 0.0
    %1753 = vmatpush1.msra.mxu0 0.0
    %1754 = vmatprep.subr.mxu0 0.0
    %1755 = vmatpush1.msra.mxu0 0.0
    %1756 = vmatprep.subr.mxu0 0.0
    %1757 = vmatpush1.msra.mxu0 0.0
    %1758 = vmatprep.subr.mxu0 0.0
    %1759 = vmatpush1.msra.mxu0 0.0
    %1760 = vmatprep.subr.mxu0 0.0
    %1761 = vmatpush1.msra.mxu0 0.0
    %1762 = vmatprep.subr.mxu0 0.0
    %1763 = vmatpush1.msra.mxu0 0.0
    %1764 = vmatprep.subr.mxu0 0.0
    %1765 = vmatpush1.msra.mxu0 0.0
    %1766 = vmatprep.subr.mxu0 0.0
    %1767 = vmatpush1.msra.mxu0 0.0
    %1768 = vmatprep.subr.mxu0 0.0
    %1769 = vmatpush1.msra.mxu0 0.0
    %1770 = vmatprep.subr.mxu0 0.0
    %1771 = vmatpush1.msra.mxu0 0.0
    %1772 = vmatprep.subr.mxu0 0.0
    %1773 = vmatpush1.msra.mxu0 0.0
    %1774 = vmatprep.subr.mxu0 0.0
    %1775 = vmatpush1.msra.mxu0 0.0
    %1776 = vmatprep.mubr.f32.mxu0 0.0
    %1777 = vmatmul.mubr.f32.gmra.mrb[0].mxu0 %v1710
    %v1778 = vpop.f32.mrb[0].mxu0
    %v1779 = vadd.f32 %v1707, %v1778
    %v1780 = vpop.f32.mrb[0].mxu0
    %1781 = vdwg.mxu0
    %v1782 = vld [vmem:[%s8] sm:$0xff]
    %v1783 = vld [vmem:[%s8 + $0x8] sm:$0xff]
    %v1784 = vld [vmem:[%s8 + $0x10] sm:$0xff]
    %v1785 = vld [vmem:[%s8 + $0x18] sm:$0xff]
    %v1786 = vld [vmem:[#allocation8] sm:$0xff]
    %v1787 = vld [vmem:[#allocation8 + $0x8] sm:$0xff]
    %v1788 = vld [vmem:[#allocation8 + $0x10] sm:$0xff]
    %v1789 = vld [vmem:[#allocation8 + $0x18] sm:$0xff]
    %v1790 = vld [vmem:[#allocation2] sm:$0x3]
    %v1791 = vld [vmem:[#allocation2 + $0x2] sm:$0x3]
    %v1792 = vlaneseq
    %v1793 = vshrl.u32 %v1792, 7
    %v1794 = vsub.s32 1, %v1793
    %v1795 = vrot.slane %v1790, %v1794
    %v1796 = vlaneseq
    %v1797 = vshrl.u32 %v1796, 7
    %v1798 = vsub.s32 1, %v1797
    %v1799 = vrot.slane %v1791, %v1798
    %v1800 = vmul.f32 %v1790, %v1795
    %v1801 = vmul.f32 %v1791, %v1799
    %vm1802 = vcmask 254976
    %v1803 = vsel %vm1802, %v1800, 0.0
    %1804 = vadd.xlane.f32.xlu0 %v1803
    %v1805 = vpop.xlane.xlu0 %1804
    %v1806 = vsel %vm1802, %v1801, 0.0
    %1807 = vadd.xlane.f32.xlu0 %v1806
    %v1808 = vpop.xlane.xlu0 %1807
    %v1809 = vmul.f32 %v1790, %v1790
    %v1810 = vmul.f32 %v1791, %v1791
    %v1811 = vsel %vm1802, %v1809, 0.0
    %1812 = vadd.xlane.f32.xlu0 %v1811
    %v1813 = vpop.xlane.xlu0 %1812
    %v1814 = vsel %vm1802, %v1810, 0.0
    %1815 = vadd.xlane.f32.xlu0 %v1814
    %v1816 = vpop.xlane.xlu0 %1815
    %v1817 = vrsqrt.pop %v1813
    %v1818 = vmul.f32 %v1813, %v1817
    %vm1819 = vcmp.eq.f32.partialorder %v1813, inf
    %v1820 = vsel %vm1819, %v1813, %v1818
    %vm1821 = vcmp.eq.f32.partialorder %v1813, 0.0
    %v1822 = vand.u32 %v1813, 2147483648
    %v1823 = vsel %vm1821, %v1822, %v1820
    %v1824 = vrsqrt.pop %v1816
    %v1825 = vmul.f32 %v1816, %v1824
    %vm1826 = vcmp.eq.f32.partialorder %v1816, inf
    %v1827 = vsel %vm1826, %v1816, %v1825
    %vm1828 = vcmp.eq.f32.partialorder %v1816, 0.0
    %v1829 = vand.u32 %v1816, 2147483648
    %v1830 = vsel %vm1828, %v1829, %v1827
    %v1831 = vmax.f32 %v1823, 1e-08
    %v1832 = vmax.f32 %v1830, 1e-08
    %v1833 = vlaneseq
    %v1834 = vshrl.u32 %v1833, 7
    %v1835 = vsub.s32 1, %v1834
    %v1836 = vrot.slane %v1831, %v1835
    %v1837 = vlaneseq
    %v1838 = vshrl.u32 %v1837, 7
    %v1839 = vsub.s32 1, %v1838
    %v1840 = vrot.slane %v1832, %v1839
    %v1841 = vmul.f32 %v1831, %v1836
    %v1842 = vmul.f32 %v1832, %v1840
    %v1843 = vrcp.pop %v1841
    %v1844 = vmul.f32 %v1805, %v1843
    %v1845 = vrcp.pop %v1842
    %v1846 = vmul.f32 %v1808, %v1845
    %v1849 = vlaneseq
    %v1850 = vand.u32 %v1849, 127
    %v1851 = vlaneseq
    %v1852 = vshrl.u32 %v1851, 7
    %v1853 = vsub.s32 %v1850, %v1852
    %v1854 = vrot.slane %v1844, %v1853
    %v1855 = vlaneseq
    %v1856 = vshrl.u32 %v1855, 7
    %v1857 = vsub.s32 %v1850, %v1856
    %v1858 = vrot.slane %v1846, %v1857
    %vm1859 = vcmask 1041409
    %v1860 = vsel %vm1859, %v1858, %v1854
    %vm1862 = vcmask 9216
    %v1863 = vsel %vm1862, %v1860, -inf
    %1864 = vmax.xlane.f32.xlu0 %v1863
    %v1865 = vpop.xlane.xlu0 %1864
    %v1867 = vlaneseq
    %v1868 = vshrl.u32 %v1867, 7
    %v1869 = vsub.s32 0, %v1868
    %v1870 = vrot.slane %v1865, %v1869
    %v1871 = vlaneseq
    %v1872 = vshrl.u32 %v1871, 7
    %v1873 = vsub.s32 1, %v1872
    %v1874 = vrot.slane %v1865, %v1873
    %v1877 = vsub.f32 %v1844, %v1870
    %v1878 = vsub.f32 %v1846, %v1874
    %v1879 = vmul.f32 %v1877, 1.442695
    %v1880 = vpow.pop %v1879
    %v1881 = vmul.f32 %v1878, 1.442695
    %v1882 = vpow.pop %v1881
    %1885 = vset.pattern.permute.xlu0 0
    %1886 = vperm.xlu0 %1885, %v1880
    %v1887 = vpop.permute.xlu0 %1886
    %1888 = vset.pattern.permute.xlu0 0
    %1889 = vperm.xlu0 %1888, %v1882
    %v1890 = vpop.permute.xlu0 %1889
    %v1891 = vlaneseq
    %v1892 = vshrl.u32 %v1891, 7
    %v1893 = vsub.s32 %v1850, %v1892
    %v1894 = vrot.slane %v1887, %v1893
    %v1895 = vlaneseq
    %v1896 = vshrl.u32 %v1895, 7
    %v1897 = vsub.s32 %v1850, %v1896
    %v1898 = vrot.slane %v1890, %v1897
    %v1899 = vsel %vm1859, %v1898, %v1894
    %v1901 = vsel %vm1862, %v1899, 0.0
    %1902 = vadd.xlane.f32.xlu0 %v1901
    %v1903 = vpop.xlane.xlu0 %1902
    %v1905 = vlaneseq
    %v1906 = vshrl.u32 %v1905, 7
    %v1907 = vsub.s32 0, %v1906
    %v1908 = vrot.slane %v1903, %v1907
    %v1909 = vlaneseq
    %v1910 = vshrl.u32 %v1909, 7
    %v1911 = vsub.s32 1, %v1910
    %v1912 = vrot.slane %v1903, %v1911
    %v1915 = vrcp.pop %v1908
    %v1916 = vmul.f32 %v1880, %v1915
    %v1917 = vrcp.pop %v1912
    %v1918 = vmul.f32 %v1882, %v1917
    %1919 = vmatprep.subr.mxu0 0.0
    %1920 = vmatpush1.msra.mxu0 %v1782
    %1921 = vmatprep.subr.mxu0 0.0
    %1922 = vmatpush1.msra.mxu0 %v1783
    %1923 = vmatprep.subr.mxu0 0.0
    %1924 = vmatpush1.msra.mxu0 %v1784
    %1925 = vmatprep.subr.mxu0 0.0
    %1926 = vmatpush1.msra.mxu0 %v1785
    %1927 = vmatprep.subr.mxu0 0.0
    %1928 = vmatpush1.msra.mxu0 0.0
    %1929 = vmatprep.subr.mxu0 0.0
    %1930 = vmatpush1.msra.mxu0 0.0
    %1931 = vmatprep.subr.mxu0 0.0
    %1932 = vmatpush1.msra.mxu0 0.0
    %1933 = vmatprep.subr.mxu0 0.0
    %1934 = vmatpush1.msra.mxu0 0.0
    %1935 = vmatprep.subr.mxu0 0.0
    %1936 = vmatpush1.msra.mxu0 0.0
    %1937 = vmatprep.subr.mxu0 0.0
    %1938 = vmatpush1.msra.mxu0 0.0
    %1939 = vmatprep.subr.mxu0 0.0
    %1940 = vmatpush1.msra.mxu0 0.0
    %1941 = vmatprep.subr.mxu0 0.0
    %1942 = vmatpush1.msra.mxu0 0.0
    %1943 = vmatprep.subr.mxu0 0.0
    %1944 = vmatpush1.msra.mxu0 0.0
    %1945 = vmatprep.subr.mxu0 0.0
    %1946 = vmatpush1.msra.mxu0 0.0
    %1947 = vmatprep.subr.mxu0 0.0
    %1948 = vmatpush1.msra.mxu0 0.0
    %1949 = vmatprep.subr.mxu0 0.0
    %1950 = vmatpush1.msra.mxu0 0.0
    %1951 = vmatprep.subr.mxu0 0.0
    %1952 = vmatpush1.msra.mxu0 0.0
    %1953 = vmatprep.subr.mxu0 0.0
    %1954 = vmatpush1.msra.mxu0 0.0
    %1955 = vmatprep.subr.mxu0 0.0
    %1956 = vmatpush1.msra.mxu0 0.0
    %1957 = vmatprep.subr.mxu0 0.0
    %1958 = vmatpush1.msra.mxu0 0.0
    %1959 = vmatprep.subr.mxu0 0.0
    %1960 = vmatpush1.msra.mxu0 0.0
    %1961 = vmatprep.subr.mxu0 0.0
    %1962 = vmatpush1.msra.mxu0 0.0
    %1963 = vmatprep.subr.mxu0 0.0
    %1964 = vmatpush1.msra.mxu0 0.0
    %1965 = vmatprep.subr.mxu0 0.0
    %1966 = vmatpush1.msra.mxu0 0.0
    %1967 = vmatprep.subr.mxu0 0.0
    %1968 = vmatpush1.msra.mxu0 0.0
    %1969 = vmatprep.subr.mxu0 0.0
    %1970 = vmatpush1.msra.mxu0 0.0
    %1971 = vmatprep.subr.mxu0 0.0
    %1972 = vmatpush1.msra.mxu0 0.0
    %1973 = vmatprep.subr.mxu0 0.0
    %1974 = vmatpush1.msra.mxu0 0.0
    %1975 = vmatprep.subr.mxu0 0.0
    %1976 = vmatpush1.msra.mxu0 0.0
    %1977 = vmatprep.subr.mxu0 0.0
    %1978 = vmatpush1.msra.mxu0 0.0
    %1979 = vmatprep.subr.mxu0 0.0
    %1980 = vmatpush1.msra.mxu0 0.0
    %1981 = vmatprep.subr.mxu0 0.0
    %1982 = vmatpush1.msra.mxu0 0.0
    %1983 = vmatprep.mubr.f32.mxu0 0.0
    %1984 = vmatmul.mubr.f32.gmra.mrb[0].mxu0 %v257
    %v1985 = vpop.f32.mrb[0].mxu0
    %v1986 = vadd.f32 0.0, %v1985
    %v1987 = vpop.f32.mrb[0].mxu0
    %1988 = vdwg.mxu0
    %v1989 = vadd.f32 %v1695, %v1986
    %v1990 = vxor.u32 %v1989, 2147483648
    %v1991 = vmul.f32 %v1990, 1.442695
    %v1992 = vpow.pop %v1991
    %v1993 = vadd.f32 %v1992, 1.0
    %v1994 = vrcp.pop %v1993
    %v1995 = vmul.f32 1.0, %v1994
    %v1996 = vmul.f32 %v1995, 0.0
    %v1997 = vtanh.pop %v1989
    %1999 = vrot.lane.b32.xlu0 %v1997, 64
    %v2000 = vpop.permute.xlu0 %1999
    %v2002 = vmul.f32 %v1995, %v2000
    %2004 = vrot.lane.b32.xlu0 %v2002, 32
    %v2005 = vpop.permute.xlu0 %2004
    %v2007 = vadd.f32 %v1996, %v2005
    %v2008 = vtanh.pop %v2007
    %2010 = vrot.lane.b32.xlu0 %v2008, 64
    %v2011 = vpop.permute.xlu0 %2010
    %v2013 = vmul.f32 %v1995, %v2011
    %v2014 = vlaneseq
    %v2015 = vshrl.u32 %v2014, 7
    %v2016 = vsub.s32 0, %v2015
    %v2017 = vrot.slane %v1916, %v2016
    %v2018 = vlaneseq
    %v2019 = vshrl.u32 %v2018, 7
    %v2020 = vsub.s32 0, %v2019
    %v2021 = vrot.slane %v1918, %v2020
    %2024 = vset.pattern.permute.xlu0 0
    %2025 = vperm.xlu0 %2024, %v2017
    %v2026 = vpop.permute.xlu0 %2025
    %2027 = vset.pattern.permute.xlu0 0
    %2028 = vperm.xlu0 %2027, %v2021
    %v2029 = vpop.permute.xlu0 %2028
    %v2030 = vsel %vm1859, %v2029, %v2026
    %v2032 = vmul.f32 %v2013, %v2030
    %v2033 = vadd.f32 %v2032, 0.0
    %2034 = vmatprep.subr.mxu0 0.0
    %2035 = vmatpush1.msra.mxu0 %v1786
    %2036 = vmatprep.subr.mxu0 0.0
    %2037 = vmatpush1.msra.mxu0 %v1787
    %2038 = vmatprep.subr.mxu0 0.0
    %2039 = vmatpush1.msra.mxu0 %v1788
    %2040 = vmatprep.subr.mxu0 0.0
    %2041 = vmatpush1.msra.mxu0 %v1789
    %2042 = vmatprep.subr.mxu0 0.0
    %2043 = vmatpush1.msra.mxu0 0.0
    %2044 = vmatprep.subr.mxu0 0.0
    %2045 = vmatpush1.msra.mxu0 0.0
    %2046 = vmatprep.subr.mxu0 0.0
    %2047 = vmatpush1.msra.mxu0 0.0
    %2048 = vmatprep.subr.mxu0 0.0
    %2049 = vmatpush1.msra.mxu0 0.0
    %2050 = vmatprep.subr.mxu0 0.0
    %2051 = vmatpush1.msra.mxu0 0.0
    %2052 = vmatprep.subr.mxu0 0.0
    %2053 = vmatpush1.msra.mxu0 0.0
    %2054 = vmatprep.subr.mxu0 0.0
    %2055 = vmatpush1.msra.mxu0 0.0
    %2056 = vmatprep.subr.mxu0 0.0
    %2057 = vmatpush1.msra.mxu0 0.0
    %2058 = vmatprep.subr.mxu0 0.0
    %2059 = vmatpush1.msra.mxu0 0.0
    %2060 = vmatprep.subr.mxu0 0.0
    %2061 = vmatpush1.msra.mxu0 0.0
    %2062 = vmatprep.subr.mxu0 0.0
    %2063 = vmatpush1.msra.mxu0 0.0
    %2064 = vmatprep.subr.mxu0 0.0
    %2065 = vmatpush1.msra.mxu0 0.0
    %2066 = vmatprep.subr.mxu0 0.0
    %2067 = vmatpush1.msra.mxu0 0.0
    %2068 = vmatprep.subr.mxu0 0.0
    %2069 = vmatpush1.msra.mxu0 0.0
    %2070 = vmatprep.subr.mxu0 0.0
    %2071 = vmatpush1.msra.mxu0 0.0
    %2072 = vmatprep.subr.mxu0 0.0
    %2073 = vmatpush1.msra.mxu0 0.0
    %2074 = vmatprep.subr.mxu0 0.0
    %2075 = vmatpush1.msra.mxu0 0.0
    %2076 = vmatprep.subr.mxu0 0.0
    %2077 = vmatpush1.msra.mxu0 0.0
    %2078 = vmatprep.subr.mxu0 0.0
    %2079 = vmatpush1.msra.mxu0 0.0
    %2080 = vmatprep.subr.mxu0 0.0
    %2081 = vmatpush1.msra.mxu0 0.0
    %2082 = vmatprep.subr.mxu0 0.0
    %2083 = vmatpush1.msra.mxu0 0.0
    %2084 = vmatprep.subr.mxu0 0.0
    %2085 = vmatpush1.msra.mxu0 0.0
    %2086 = vmatprep.subr.mxu0 0.0
    %2087 = vmatpush1.msra.mxu0 0.0
    %2088 = vmatprep.subr.mxu0 0.0
    %2089 = vmatpush1.msra.mxu0 0.0
    %2090 = vmatprep.subr.mxu0 0.0
    %2091 = vmatpush1.msra.mxu0 0.0
    %2092 = vmatprep.subr.mxu0 0.0
    %2093 = vmatpush1.msra.mxu0 0.0
    %2094 = vmatprep.subr.mxu0 0.0
    %2095 = vmatpush1.msra.mxu0 0.0
    %2096 = vmatprep.subr.mxu0 0.0
    %2097 = vmatpush1.msra.mxu0 0.0
    %2098 = vmatprep.mubr.f32.mxu0 0.0
    %2099 = vmatmul.mubr.f32.gmra.mrb[0].mxu0 %v257
    %v2100 = vpop.f32.mrb[0].mxu0
    %v2101 = vadd.f32 0.0, %v2100
    %v2102 = vpop.f32.mrb[0].mxu0
    %2103 = vdwg.mxu0
    %v2104 = vadd.f32 %v1779, %v2101
    %v2105 = vxor.u32 %v2104, 2147483648
    %v2106 = vmul.f32 %v2105, 1.442695
    %v2107 = vpow.pop %v2106
    %v2108 = vadd.f32 %v2107, 1.0
    %v2109 = vrcp.pop %v2108
    %v2110 = vmul.f32 1.0, %v2109
    %v2111 = vmul.f32 %v2110, 0.0
    %v2112 = vtanh.pop %v2104
    %2114 = vrot.lane.b32.xlu0 %v2112, 64
    %v2115 = vpop.permute.xlu0 %2114
    %v2117 = vmul.f32 %v2110, %v2115
    %2119 = vrot.lane.b32.xlu0 %v2117, 32
    %v2120 = vpop.permute.xlu0 %2119
    %v2122 = vadd.f32 %v2111, %v2120
    %v2123 = vtanh.pop %v2122
    %2125 = vrot.lane.b32.xlu0 %v2123, 64
    %v2126 = vpop.permute.xlu0 %2125
    %v2128 = vmul.f32 %v2110, %v2126
    %v2129 = vmul.f32 %v2128, %v2030
    %v2130 = vadd.f32 %v2129, 0.0
    %2132 = vrot.lane.b32.xlu0 %v2013, 32
    %v2133 = vpop.permute.xlu0 %2132
    %v2134 = vsel %vm122, %v2133, 0
    %2136 = vmatprep.subr.mxu0 0.0
    %2137 = vmatpush1.msra.mxu0 %v1782
    %2138 = vmatprep.subr.mxu0 0.0
    %2139 = vmatpush1.msra.mxu0 %v1783
    %2140 = vmatprep.subr.mxu0 0.0
    %2141 = vmatpush1.msra.mxu0 %v1784
    %2142 = vmatprep.subr.mxu0 0.0
    %2143 = vmatpush1.msra.mxu0 %v1785
    %2144 = vmatprep.subr.mxu0 0.0
    %2145 = vmatpush1.msra.mxu0 0.0
    %2146 = vmatprep.subr.mxu0 0.0
    %2147 = vmatpush1.msra.mxu0 0.0
    %2148 = vmatprep.subr.mxu0 0.0
    %2149 = vmatpush1.msra.mxu0 0.0
    %2150 = vmatprep.subr.mxu0 0.0
    %2151 = vmatpush1.msra.mxu0 0.0
    %2152 = vmatprep.subr.mxu0 0.0
    %2153 = vmatpush1.msra.mxu0 0.0
    %2154 = vmatprep.subr.mxu0 0.0
    %2155 = vmatpush1.msra.mxu0 0.0
    %2156 = vmatprep.subr.mxu0 0.0
    %2157 = vmatpush1.msra.mxu0 0.0
    %2158 = vmatprep.subr.mxu0 0.0
    %2159 = vmatpush1.msra.mxu0 0.0
    %2160 = vmatprep.subr.mxu0 0.0
    %2161 = vmatpush1.msra.mxu0 0.0
    %2162 = vmatprep.subr.mxu0 0.0
    %2163 = vmatpush1.msra.mxu0 0.0
    %2164 = vmatprep.subr.mxu0 0.0
    %2165 = vmatpush1.msra.mxu0 0.0
    %2166 = vmatprep.subr.mxu0 0.0
    %2167 = vmatpush1.msra.mxu0 0.0
    %2168 = vmatprep.subr.mxu0 0.0
    %2169 = vmatpush1.msra.mxu0 0.0
    %2170 = vmatprep.subr.mxu0 0.0
    %2171 = vmatpush1.msra.mxu0 0.0
    %2172 = vmatprep.subr.mxu0 0.0
    %2173 = vmatpush1.msra.mxu0 0.0
    %2174 = vmatprep.subr.mxu0 0.0
    %2175 = vmatpush1.msra.mxu0 0.0
    %2176 = vmatprep.subr.mxu0 0.0
    %2177 = vmatpush1.msra.mxu0 0.0
    %2178 = vmatprep.subr.mxu0 0.0
    %2179 = vmatpush1.msra.mxu0 0.0
    %2180 = vmatprep.subr.mxu0 0.0
    %2181 = vmatpush1.msra.mxu0 0.0
    %2182 = vmatprep.subr.mxu0 0.0
    %2183 = vmatpush1.msra.mxu0 0.0
    %2184 = vmatprep.subr.mxu0 0.0
    %2185 = vmatpush1.msra.mxu0 0.0
    %2186 = vmatprep.subr.mxu0 0.0
    %2187 = vmatpush1.msra.mxu0 0.0
    %2188 = vmatprep.subr.mxu0 0.0
    %2189 = vmatpush1.msra.mxu0 0.0
    %2190 = vmatprep.subr.mxu0 0.0
    %2191 = vmatpush1.msra.mxu0 0.0
    %2192 = vmatprep.subr.mxu0 0.0
    %2193 = vmatpush1.msra.mxu0 0.0
    %2194 = vmatprep.subr.mxu0 0.0
    %2195 = vmatpush1.msra.mxu0 0.0
    %2196 = vmatprep.subr.mxu0 0.0
    %2197 = vmatpush1.msra.mxu0 0.0
    %2198 = vmatprep.subr.mxu0 0.0
    %2199 = vmatpush1.msra.mxu0 0.0
    %2200 = vmatprep.mubr.f32.mxu0 0.0
    %2201 = vmatmul.mubr.f32.gmra.mrb[0].mxu0 %v2134
    %v2202 = vpop.f32.mrb[0].mxu0
    %v2203 = vadd.f32 0.0, %v2202
    %v2204 = vpop.f32.mrb[0].mxu0
    %2205 = vdwg.mxu0
    %v2207 = vrot.slane %v2203, 6
    %v2209 = vadd.f32 %v1695, %v2207
    %v2210 = vxor.u32 %v2209, 2147483648
    %v2211 = vmul.f32 %v2210, 1.442695
    %v2212 = vpow.pop %v2211
    %v2213 = vadd.f32 %v2212, 1.0
    %v2214 = vrcp.pop %v2213
    %v2215 = vmul.f32 1.0, %v2214
    %v2217 = vrot.slane %v2007, 6
    %v2219 = vmul.f32 %v2215, %v2217
    %v2220 = vtanh.pop %v2209
    %2222 = vrot.lane.b32.xlu0 %v2220, 64
    %v2223 = vpop.permute.xlu0 %2222
    %v2225 = vmul.f32 %v2215, %v2223
    %2227 = vrot.lane.b32.xlu0 %v2225, 32
    %v2228 = vpop.permute.xlu0 %2227
    %v2230 = vadd.f32 %v2219, %v2228
    %v2231 = vtanh.pop %v2230
    %2233 = vrot.lane.b32.xlu0 %v2231, 64
    %v2234 = vpop.permute.xlu0 %2233
    %v2236 = vmul.f32 %v2215, %v2234
    %v2237 = vlaneseq
    %v2238 = vshrl.u32 %v2237, 7
    %v2239 = vsub.s32 1, %v2238
    %v2240 = vrot.slane %v1916, %v2239
    %v2241 = vlaneseq
    %v2242 = vshrl.u32 %v2241, 7
    %v2243 = vsub.s32 1, %v2242
    %v2244 = vrot.slane %v1918, %v2243
    %2247 = vset.pattern.permute.xlu0 0
    %2248 = vperm.xlu0 %2247, %v2240
    %v2249 = vpop.permute.xlu0 %2248
    %2250 = vset.pattern.permute.xlu0 0
    %2251 = vperm.xlu0 %2250, %v2244
    %v2252 = vpop.permute.xlu0 %2251
    %vm2253 = vcmask 1043459
    %v2254 = vsel %vm2253, %v2252, %v2249
    %v2256 = vmul.f32 %v2236, %v2254
    %v2258 = vrot.slane %v2256, 2
    %v2260 = vadd.f32 %v2033, %v2258
    %2262 = vrot.lane.b32.xlu0 %v2128, 32
    %v2263 = vpop.permute.xlu0 %2262
    %v2264 = vsel %vm122, %v2263, 0
    %2266 = vmatprep.subr.mxu0 0.0
    %2267 = vmatpush1.msra.mxu0 %v1786
    %2268 = vmatprep.subr.mxu0 0.0
    %2269 = vmatpush1.msra.mxu0 %v1787
    %2270 = vmatprep.subr.mxu0 0.0
    %2271 = vmatpush1.msra.mxu0 %v1788
    %2272 = vmatprep.subr.mxu0 0.0
    %2273 = vmatpush1.msra.mxu0 %v1789
    %2274 = vmatprep.subr.mxu0 0.0
    %2275 = vmatpush1.msra.mxu0 0.0
    %2276 = vmatprep.subr.mxu0 0.0
    %2277 = vmatpush1.msra.mxu0 0.0
    %2278 = vmatprep.subr.mxu0 0.0
    %2279 = vmatpush1.msra.mxu0 0.0
    %2280 = vmatprep.subr.mxu0 0.0
    %2281 = vmatpush1.msra.mxu0 0.0
    %2282 = vmatprep.subr.mxu0 0.0
    %2283 = vmatpush1.msra.mxu0 0.0
    %2284 = vmatprep.subr.mxu0 0.0
    %2285 = vmatpush1.msra.mxu0 0.0
    %2286 = vmatprep.subr.mxu0 0.0
    %2287 = vmatpush1.msra.mxu0 0.0
    %2288 = vmatprep.subr.mxu0 0.0
    %2289 = vmatpush1.msra.mxu0 0.0
    %2290 = vmatprep.subr.mxu0 0.0
    %2291 = vmatpush1.msra.mxu0 0.0
    %2292 = vmatprep.subr.mxu0 0.0
    %2293 = vmatpush1.msra.mxu0 0.0
    %2294 = vmatprep.subr.mxu0 0.0
    %2295 = vmatpush1.msra.mxu0 0.0
    %2296 = vmatprep.subr.mxu0 0.0
    %2297 = vmatpush1.msra.mxu0 0.0
    %2298 = vmatprep.subr.mxu0 0.0
    %2299 = vmatpush1.msra.mxu0 0.0
    %2300 = vmatprep.subr.mxu0 0.0
    %2301 = vmatpush1.msra.mxu0 0.0
    %2302 = vmatprep.subr.mxu0 0.0
    %2303 = vmatpush1.msra.mxu0 0.0
    %2304 = vmatprep.subr.mxu0 0.0
    %2305 = vmatpush1.msra.mxu0 0.0
    %2306 = vmatprep.subr.mxu0 0.0
    %2307 = vmatpush1.msra.mxu0 0.0
    %2308 = vmatprep.subr.mxu0 0.0
    %2309 = vmatpush1.msra.mxu0 0.0
    %2310 = vmatprep.subr.mxu0 0.0
    %2311 = vmatpush1.msra.mxu0 0.0
    %2312 = vmatprep.subr.mxu0 0.0
    %2313 = vmatpush1.msra.mxu0 0.0
    %2314 = vmatprep.subr.mxu0 0.0
    %2315 = vmatpush1.msra.mxu0 0.0
    %2316 = vmatprep.subr.mxu0 0.0
    %2317 = vmatpush1.msra.mxu0 0.0
    %2318 = vmatprep.subr.mxu0 0.0
    %2319 = vmatpush1.msra.mxu0 0.0
    %2320 = vmatprep.subr.mxu0 0.0
    %2321 = vmatpush1.msra.mxu0 0.0
    %2322 = vmatprep.subr.mxu0 0.0
    %2323 = vmatpush1.msra.mxu0 0.0
    %2324 = vmatprep.subr.mxu0 0.0
    %2325 = vmatpush1.msra.mxu0 0.0
    %2326 = vmatprep.subr.mxu0 0.0
    %2327 = vmatpush1.msra.mxu0 0.0
    %2328 = vmatprep.subr.mxu0 0.0
    %2329 = vmatpush1.msra.mxu0 0.0
    %2330 = vmatprep.mubr.f32.mxu0 0.0
    %2331 = vmatmul.mubr.f32.gmra.mrb[0].mxu0 %v2264
    %v2332 = vpop.f32.mrb[0].mxu0
    %v2333 = vadd.f32 0.0, %v2332
    %v2334 = vpop.f32.mrb[0].mxu0
    %2335 = vdwg.mxu0
    %v2337 = vrot.slane %v2333, 6
    %v2339 = vadd.f32 %v1779, %v2337
    %v2340 = vxor.u32 %v2339, 2147483648
    %v2341 = vmul.f32 %v2340, 1.442695
    %v2342 = vpow.pop %v2341
    %v2343 = vadd.f32 %v2342, 1.0
    %v2344 = vrcp.pop %v2343
    %v2345 = vmul.f32 1.0, %v2344
    %v2347 = vrot.slane %v2122, 6
    %v2349 = vmul.f32 %v2345, %v2347
    %v2350 = vtanh.pop %v2339
    %2352 = vrot.lane.b32.xlu0 %v2350, 64
    %v2353 = vpop.permute.xlu0 %2352
    %v2355 = vmul.f32 %v2345, %v2353
    %2357 = vrot.lane.b32.xlu0 %v2355, 32
    %v2358 = vpop.permute.xlu0 %2357
    %v2360 = vadd.f32 %v2349, %v2358
    %v2361 = vtanh.pop %v2360
    %2363 = vrot.lane.b32.xlu0 %v2361, 64
    %v2364 = vpop.permute.xlu0 %2363
    %v2366 = vmul.f32 %v2345, %v2364
    %v2367 = vmul.f32 %v2366, %v2254
    %v2369 = vrot.slane %v2367, 2
    %v2371 = vadd.f32 %v2130, %v2369
    %2373 = vrot.lane.b32.xlu0 %v2260, 32
    %v2374 = vpop.permute.xlu0 %2373
    %2376 = vst.msk [vmem:[#allocation11] sm:$0x3] %vm1802, %v2374
    %2378 = vrot.lane.b32.xlu0 %v2371, 32
    %v2379 = vpop.permute.xlu0 %2378
    %2381 = vst.msk [vmem:[#allocation13] sm:$0x3] %vm1802, %v2379
    // Predicated region
    $region70: #{tpu_custom_call.1} parent=1 // pred_check
      _
    $region71: #{tpu_custom_call.1} parent=1 // pred_check_branch
      %2383 = sbr.rel (0) target = $region73
    $region72: #{tpu_custom_call.1} parent=1 // pred_region
      %s2385 = ssub.s32 256, 256
      %2386 = vsyncadd [#allocation4], %s2385
      %s2388 = sshll.u32 [#allocation10], 4
      %s2389 = int_to_ptr.vmem [resolvable:$true] %s2388
      %2391 = dma.vmem_to_hbm [thread:$0]  %s2389, 256, %s13, [#allocation4]
    $region73: #{tpu_custom_call.1} parent=1 // pred_fallthru
      _
    // Predicated region
    $region74: #{tpu_custom_call.1} parent=1 // pred_check
      _
    $region75: #{tpu_custom_call.1} parent=1 // pred_check_branch
      %2393 = sbr.rel (0) target = $region77
    $region76: #{tpu_custom_call.1} parent=1 // pred_region
      %s2395 = ssub.s32 32, 32
      %2396 = vsyncadd [#allocation12], %s2395
      %s2398 = sshll.u32 [#allocation11], 4
      %s2399 = int_to_ptr.vmem [resolvable:$true] %s2398
      %2401 = dma.vmem_to_hbm [thread:$0]  %s2399, 32, %s14, [#allocation12]
    $region77: #{tpu_custom_call.1} parent=1 // pred_fallthru
      _
    // Predicated region
    $region78: #{tpu_custom_call.1} parent=1 // pred_check
      _
    $region79: #{tpu_custom_call.1} parent=1 // pred_check_branch
      %2403 = sbr.rel (0) target = $region81
    $region80: #{tpu_custom_call.1} parent=1 // pred_region
      %s2405 = ssub.s32 32, 32
      %2406 = vsyncadd [#allocation12], %s2405
      %s2408 = sshll.u32 [#allocation13], 4
      %s2409 = int_to_ptr.vmem [resolvable:$true] %s2408
      %2411 = dma.vmem_to_hbm [thread:$0]  %s2409, 32, %s15, [#allocation12]
    $region81: #{tpu_custom_call.1} parent=1 // pred_fallthru
      _
    // Predicated region
    $region82: #{tpu_custom_call.1} parent=1 // pred_check
      _
    $region83: #{tpu_custom_call.1} parent=1 // pred_check_branch
      %2413 = sbr.rel (0) target = $region85
    $region84: #{tpu_custom_call.1} parent=1 // pred_region
      %2414 = dma.done [#allocation4], 256
    $region85: #{tpu_custom_call.1} parent=1 // pred_fallthru
      _
    // Predicated region
    $region86: #{tpu_custom_call.1} parent=1 // pred_check
      _
    $region87: #{tpu_custom_call.1} parent=1 // pred_check_branch
      %2416 = sbr.rel (0) target = $region89
    $region88: #{tpu_custom_call.1} parent=1 // pred_region
      %2417 = dma.done [#allocation12], 32
    $region89: #{tpu_custom_call.1} parent=1 // pred_fallthru
      _
    // Predicated region
    $region90: #{tpu_custom_call.1} parent=1 // pred_check
      _
    $region91: #{tpu_custom_call.1} parent=1 // pred_check_branch
      %2419 = sbr.rel (0) target = $region93
    $region92: #{tpu_custom_call.1} parent=1 // pred_region
      %2420 = dma.done [#allocation12], 32
    $region93: #{tpu_custom_call.1} parent=1 // pred_fallthru
      _
    %2421 = vsyncpa [#allocation3], 1
    %2422 = vsyncpa [#allocation6], 1
    %2423 = vsyncpa [#allocation9], 1
    %2424 = vsyncpa [#allocation4], 1
    %2425 = vsyncpa [#allocation12], 1

</llo_original>
